<compile_context>
chip_gen: v7x
topology: tpu7x:2x2x1
jax: 0.10.0
libtpu: 0.0.40
codegen_flags: <defaults>
</compile_context>

<pallas_src>
import functools

import jax
import jax.numpy as jnp
from jax.experimental import pallas as pl
from jax.experimental.pallas import tpu as pltpu


def _round_up(x, m):
    return (x + m - 1) // m * m


# ----------------------------------------------------------------------------- kernel
def _make_fused_kernel(Wp, THWp, HW, K):
    """Fused conv3x3(+folded norm) + ReLU + GAP + head + sigmoid + BCE kernel body."""
    inv_hw = 1.0 / float(HW)

    def kernel(x_ref, mask_ref, w1_ref, b1_ref, w2_ref, b2_ref, y_ref, pw_ref,
               probs_ref, loss_ref, acc_ref):
        t = pl.program_id(1)

        # zero the GAP accumulator at the start of each image's spatial reduction
        @pl.when(t == 0)
        def _init():
            acc_ref[...] = jnp.zeros_like(acc_ref)

        # 3x3 conv as 9 shift-matmuls over the flattened, halo'd row tile.
        # x_ref block: (1, 1, C, Lp) bf16; flat spatial index = row * Wp + col.
        h = None
        for dy in range(3):
            for dx in range(3):
                k = dy * 3 + dx
                base = dy * Wp + dx
                slab = x_ref[0, 0, :, base:base + THWp]            # (C, THWp) bf16
                part = jnp.dot(w1_ref[k], slab,                     # (HIDP, C)@(C, THWp)
                               preferred_element_type=jnp.float32)
                h = part if h is None else h + part
        h = jnp.maximum(h + b1_ref[...], 0.0)                       # folded bias + ReLU
        # mask horizontal-pad columns, accumulate global-average-pool partial sums
        acc_ref[...] += jnp.sum(h * mask_ref[...], axis=1, keepdims=True)   # (HIDP, 1)

        # last spatial tile of this image: classifier head + sigmoid + weighted BCE
        @pl.when(t == pl.num_programs(1) - 1)
        def _finalize():
            pooled = (acc_ref[...] * inv_hw).astype(jnp.bfloat16)   # (HIDP, 1)
            logits = jnp.dot(w2_ref[...], pooled,
                             preferred_element_type=jnp.float32) + b2_ref[...]   # (KP, 1)
            probs_ref[0] = jax.nn.sigmoid(logits)                   # eval branch
            y = y_ref[0]                                            # (KP, 1)
            pw = pw_ref[...]                                        # (KP, 1)
            # BCEWithLogits(pos_weight): pw*y*softplus(-x) + (1-y)*softplus(x)
            loss_el = (pw * y * jnp.logaddexp(0.0, -logits)
                       + (1.0 - y) * jnp.logaddexp(0.0, logits))
            kmask = jax.lax.broadcasted_iota(jnp.int32, logits.shape, 0) < K
            loss_ref[0] = jnp.where(kmask, loss_el, 0.0)            # zero padded classes

    return kernel


# ----------------------------------------------------------------------------- glue
def _build_image_tiles(x, pixel_mean, TH, Lp):
    """Mean-pad the raw image (so the folded conv reproduces zero-pad-after-normalize),
    cut overlapping (TH+2)-row tiles (1-row halo), flatten rows, lane-pad, cast bf16."""
    N, C, H, W = x.shape
    T = H // TH
    Wp = W + 2
    mean_img = jnp.broadcast_to(
        pixel_mean.reshape(1, C, 1, 1).astype(jnp.float32), (N, C, H + 2, Wp))
    xp = jax.lax.dynamic_update_slice(mean_img, x.astype(jnp.float32), (0, 0, 1, 1))
    tiles = jnp.stack([xp[:, :, t * TH: t * TH + TH + 2, :] for t in range(T)],
                      axis=1)                                       # (N, T, C, TH+2, Wp)
    flat = tiles.reshape(N, T, C, (TH + 2) * Wp)
    flat = jnp.pad(flat, ((0, 0), (0, 0), (0, 0), (0, Lp - (TH + 2) * Wp)))
    return flat.astype(jnp.bfloat16)                                # (N, T, C, Lp)


def _fold_and_pad_params(params, HIDP, KP):
    """Fold (x-mean)/std into conv weights/bias; pad to 128-lane shapes; bf16 weights."""
    mean = params["pixel_mean"].astype(jnp.float32)
    std = params["pixel_std"].astype(jnp.float32)
    w1 = params["w1"].astype(jnp.float32)          # (C*9, HID), index c*9 + (dy*3+dx)
    b1 = params["b1"].astype(jnp.float32)          # (1, HID)
    w2 = params["w2"].astype(jnp.float32)          # (HID, K)
    b2 = params["b2"].astype(jnp.float32)          # (1, K)
    pw = params["pos_weight"].astype(jnp.float32)  # (1, K)
    C = mean.shape[0]
    HID = w1.shape[1]
    K = w2.shape[1]

    w1_ctm = w1.reshape(C, 9, HID) / std.reshape(C, 1, 1)            # fold 1/std [c,tap,m]
    b1_f = b1.reshape(HID) - jnp.sum(w1_ctm * mean.reshape(C, 1, 1), axis=(0, 1))
    w1_tmc = jnp.transpose(w1_ctm, (1, 2, 0))                        # [tap, m, c]
    w1k = jnp.pad(w1_tmc, ((0, 0), (0, HIDP - HID), (0, 0))).astype(jnp.bfloat16)  # (9,HIDP,C)

    b1c = jnp.pad(b1_f, (0, HIDP - HID)).reshape(HIDP, 1).astype(jnp.float32)
    w2t = jnp.pad(w2.T, ((0, KP - K), (0, HIDP - HID))).astype(jnp.bfloat16)        # (KP,HIDP)
    b2c = jnp.pad(b2.reshape(K), (0, KP - K)).reshape(KP, 1).astype(jnp.float32)
    pwc = jnp.pad(pw.reshape(K), (0, KP - K)).reshape(KP, 1).astype(jnp.float32)
    return w1k, b1c, w2t, b2c, pwc


# ----------------------------------------------------------------------------- ClsNet
def init_params(key, in_channels, hidden, num_classes):
    k1, k2 = jax.random.split(key, 2)
    return {
        "pixel_mean": jnp.array([120.0, 115.0, 110.0, 100.0][:in_channels], jnp.float32),
        "pixel_std": jnp.array([58.0, 57.0, 56.0, 55.0][:in_channels], jnp.float32),
        # conv1: 3x3, in_channels -> hidden   (stored as (C*9, hidden), index c*9+tap)
        "w1": 0.05 * jax.random.normal(k1, (in_channels * 9, hidden), jnp.float32),
        "b1": jnp.zeros((1, hidden), jnp.float32),
        # classifier head: hidden -> num_classes
        "w2": 0.05 * jax.random.normal(k2, (hidden, num_classes), jnp.float32),
        "b2": jnp.zeros((1, num_classes), jnp.float32),
        # cfg.MODEL.POS_WEIGHT for BCEWithLogitsLoss
        "pos_weight": jnp.full((1, num_classes), 2.0, jnp.float32),
    }


@functools.partial(jax.jit, static_argnames=("training",))
def clsnet_forward(params, x, gt_labels=None, training=False):
    """Mirrors ClsNet.forward: eval -> per-image sigmoid preds; training -> loss dict."""
    N, C, H, W = x.shape
    HID = params["w1"].shape[1]
    K = params["w2"].shape[1]
    HIDP = _round_up(HID, 128)
    KP = _round_up(K, 128)

    TH = 8 if H % 8 == 0 else H          # row-tile height of the spatial reduction axis
    # TODO(synk): for H not divisible by TH a trailing-row mask would be needed.
    T = H // TH
    Wp = W + 2                            # width incl. 1-pixel halo on each side
    THWp = TH * Wp                        # flattened spatial extent of one output row-tile
    Lp = _round_up((TH + 2) * Wp + 2, 128)

    # glue: mean-padded, halo'd, flattened row tiles of the raw image (bf16)
    x_tiles = _build_image_tiles(x, params["pixel_mean"], TH, Lp)
    # valid-column mask: horizontal-pad output columns contribute 0 to the GAP
    mask = ((jnp.arange(THWp) % Wp) < W).astype(jnp.float32).reshape(1, THWp)
    # glue: fold normalization into conv weights/bias, pad to lane-dense shapes
    w1k, b1c, w2t, b2c, pwc = _fold_and_pad_params(params, HIDP, KP)

    if gt_labels is None:
        gt_labels = jnp.zeros((N, K), jnp.float32)
    yc = jnp.pad(gt_labels.astype(jnp.float32), ((0, 0), (0, KP - K))).reshape(N, KP, 1)

    kernel = _make_fused_kernel(Wp, THWp, H * W, K)

    probs_col, loss_col = pl.pallas_call(
        kernel,
        out_shape=(
            jax.ShapeDtypeStruct((N, KP, 1), jnp.float32),   # sigmoid probabilities
            jax.ShapeDtypeStruct((N, KP, 1), jnp.float32),   # elementwise weighted BCE
        ),
        grid=(N, T),
        in_specs=[
            pl.BlockSpec((1, 1, C, Lp), lambda n, t: (n, t, 0, 0)),     # image row tiles
            pl.BlockSpec((1, THWp), lambda n, t: (0, 0)),               # valid-column mask
            pl.BlockSpec((9, HIDP, C), lambda n, t: (0, 0, 0)),         # folded conv weights
            pl.BlockSpec((HIDP, 1), lambda n, t: (0, 0)),               # folded conv bias
            pl.BlockSpec((KP, HIDP), lambda n, t: (0, 0)),              # head weights (T)
            pl.BlockSpec((KP, 1), lambda n, t: (0, 0)),                 # head bias
            pl.BlockSpec((1, KP, 1), lambda n, t: (n, 0, 0)),           # labels
            pl.BlockSpec((KP, 1), lambda n, t: (0, 0)),                 # pos_weight
        ],
        out_specs=(
            pl.BlockSpec((1, KP, 1), lambda n, t: (n, 0, 0)),
            pl.BlockSpec((1, KP, 1), lambda n, t: (n, 0, 0)),
        ),
        scratch_shapes=[pltpu.VMEM((HIDP, 1), jnp.float32)],            # GAP accumulator
        compiler_params=pltpu.CompilerParams(
            dimension_semantics=("parallel", "arbitrary"),
            vmem_limit_bytes=32 * 1024 * 1024,
        ),
    )(x_tiles, mask, w1k, b1c, w2t, b2c, yc, pwc)

    probs = probs_col[:, :K, 0]
    if training:
        return {"loss_cls": jnp.sum(loss_col) / (N * K)}
    return probs


# ----------------------------------------------------------------------------- reference
def _reference_forward(params, x, gt_labels):
    """Pure-JAX f32 reference of the same synthetic ClsNet forward."""
    N, C, H, W = x.shape
    mean = params["pixel_mean"].reshape(1, C, 1, 1)
    std = params["pixel_std"].reshape(1, C, 1, 1)
    xn = (x - mean) / std
    xp = jnp.pad(xn, ((0, 0), (0, 0), (1, 1), (1, 1)))
    pat = jnp.stack([xp[:, :, dy:dy + H, dx:dx + W]
                     for dy in range(3) for dx in range(3)], axis=2)   # (N, C, 9, H, W)
    pat = pat.reshape(N, C * 9, H, W).transpose(0, 2, 3, 1).reshape(N * H * W, C * 9)
    h = jnp.maximum(pat @ params["w1"] + params["b1"], 0.0)
    pooled = h.reshape(N, H * W, -1).mean(axis=1)
    logits = pooled @ params["w2"] + params["b2"]
    probs = jax.nn.sigmoid(logits)
    pw = params["pos_weight"]
    y = gt_labels
    loss = jnp.mean(pw * y * jnp.logaddexp(0.0, -logits)
                    + (1.0 - y) * jnp.logaddexp(0.0, logits))
    return probs, loss


# ----------------------------------------------------------------------------- main
if __name__ == "__main__":
    N, C, H, W = 2, 4, 16, 16
    HIDDEN, NUM_CLASSES = 32, 8

    key = jax.random.PRNGKey(0)
    kx, kl, kp = jax.random.split(key, 3)

    x = 127.5 + 30.0 * jax.random.normal(kx, (N, C, H, W), jnp.float32)   # NCHW "image"
    gt_labels = (jax.random.uniform(kl, (N, NUM_CLASSES)) > 0.5).astype(jnp.float32)
    params = init_params(kp, C, HIDDEN, NUM_CLASSES)

    # eval branch: per-image sigmoid predictions
    probs = jax.block_until_ready(clsnet_forward(params, x, training=False))
    processed_results = [{"pred": p} for p in probs]    # list-of-dicts, like ClsNet eval

    # training branch: BCE-with-logits loss dict
    losses = clsnet_forward(params, x, gt_labels=gt_labels, training=True)
    losses = jax.block_until_ready(losses)

    # pure-JAX f32 reference (kernel uses bf16 weights/pixels -> loose tolerance)
    ref_probs, ref_loss = _reference_forward(params, x, gt_labels)

    assert probs.shape == (N, NUM_CLASSES)
    assert float(jnp.min(probs)) >= 0.0 and float(jnp.max(probs)) <= 1.0
    assert losses["loss_cls"].shape == ()
    assert float(jnp.max(jnp.abs(probs - ref_probs))) < 5e-2, "probs mismatch vs reference"
    assert abs(float(losses["loss_cls"]) - float(ref_loss)) < 5e-2, "loss mismatch vs reference"
    print("KERNEL_OK")
</pallas_src>

<mosaic_0001>
module attributes {stable_mosaic.version = 11 : i64} {
  func.func @kernel(%arg0: i32, %arg1: i32, %arg2: memref<1x1x4x256xbf16, #tpu.memory_space<vmem>>, %arg3: memref<1x144xf32, #tpu.memory_space<vmem>>, %arg4: memref<9x128x4xbf16, #tpu.memory_space<vmem>>, %arg5: memref<128x1xf32, #tpu.memory_space<vmem>>, %arg6: memref<128x128xbf16, #tpu.memory_space<vmem>>, %arg7: memref<128x1xf32, #tpu.memory_space<vmem>>, %arg8: memref<1x128x1xf32, #tpu.memory_space<vmem>>, %arg9: memref<128x1xf32, #tpu.memory_space<vmem>>, %arg10: memref<1x128x1xf32, #tpu.memory_space<vmem>>, %arg11: memref<1x128x1xf32, #tpu.memory_space<vmem>>, %arg12: memref<128x1xf32, #tpu.memory_space<vmem>>) attributes {dimension_semantics = [#tpu.dimension_semantics<parallel>, #tpu.dimension_semantics<arbitrary>], iteration_bounds = array<i64: 2, 2>, scalar_prefetch = 0 : i64, scratch_operands = 1 : i64, tpu.core_type = #tpu.core_type<tc>, window_params = [{transform_indices = @transform_0, window_bounds = array<i64: 1, 1, 4, 256>}, {pipeline_mode = #tpu.pipeline_mode<synchronous>, transform_indices = @transform_1, window_bounds = array<i64: 1, 144>}, {pipeline_mode = #tpu.pipeline_mode<synchronous>, transform_indices = @transform_2, window_bounds = array<i64: 9, 128, 4>}, {pipeline_mode = #tpu.pipeline_mode<synchronous>, transform_indices = @transform_3, window_bounds = array<i64: 128, 1>}, {pipeline_mode = #tpu.pipeline_mode<synchronous>, transform_indices = @transform_4, window_bounds = array<i64: 128, 128>}, {pipeline_mode = #tpu.pipeline_mode<synchronous>, transform_indices = @transform_5, window_bounds = array<i64: 128, 1>}, {transform_indices = @transform_6, window_bounds = array<i64: 1, 128, 1>}, {pipeline_mode = #tpu.pipeline_mode<synchronous>, transform_indices = @transform_7, window_bounds = array<i64: 128, 1>}, {transform_indices = @transform_8, window_bounds = array<i64: 1, 128, 1>}, {transform_indices = @transform_9, window_bounds = array<i64: 1, 128, 1>}]} {
    %c0_i32 = arith.constant 0 : i32
    %0 = arith.cmpi eq, %arg1, %c0_i32 : i32
    %1 = arith.extui %0 : i1 to i32
    %c0_i32_0 = arith.constant 0 : i32
    %2 = arith.cmpi ne, %1, %c0_i32_0 : i32
    scf.if %2 {
      %cst_68 = arith.constant 0.000000e+00 : f32
      %72 = vector.broadcast %cst_68 : f32 to vector<128x1xf32>
      %c0_69 = arith.constant 0 : index
      %c0_70 = arith.constant 0 : index
      %73 = vector.load %arg12[%c0_69, %c0_70] : memref<128x1xf32, #tpu.memory_space<vmem>>, vector<128x1xf32>
      tpu.vector_store %arg12[%c0_69, %c0_70], %72 {strides = array<i32>} : memref<128x1xf32, #tpu.memory_space<vmem>>, vector<128x1xf32>,
    } else {
    }
    %c0 = arith.constant 0 : index
    %c0_1 = arith.constant 0 : index
    %c0_2 = arith.constant 0 : index
    %c0_3 = arith.constant 0 : index
    %3 = vector.load %arg2[%c0, %c0_1, %c0_2, %c0_3] : memref<1x1x4x256xbf16, #tpu.memory_space<vmem>>, vector<1x1x4x144xbf16>
    %4 = vector.shape_cast %3 : vector<1x1x4x144xbf16> to vector<4x144xbf16>
    %c0_4 = arith.constant 0 : index
    %c0_5 = arith.constant 0 : index
    %c0_6 = arith.constant 0 : index
    %5 = vector.load %arg4[%c0_4, %c0_5, %c0_6] : memref<9x128x4xbf16, #tpu.memory_space<vmem>>, vector<1x128x4xbf16>
    %6 = vector.shape_cast %5 : vector<1x128x4xbf16> to vector<128x4xbf16>
    %cst = arith.constant dense<0.000000e+00> : vector<128x144xf32>
    %7 = tpu.matmul %6, %4, %cst {dimension_numbers = #tpu.dot_dimension_numbers<[1], [0], [0], [1], [0, 0, 1, 1], [], []>} : vector<128x4xbf16>, vector<4x144xbf16>, vector<128x144xf32> -> vector<128x144xf32>
    %c0_7 = arith.constant 0 : index
    %c0_8 = arith.constant 0 : index
    %c0_9 = arith.constant 0 : index
    %c1 = arith.constant 1 : index
    %8 = vector.load %arg2[%c0_7, %c0_8, %c0_9, %c1] : memref<1x1x4x256xbf16, #tpu.memory_space<vmem>>, vector<1x1x4x144xbf16>
    %9 = vector.shape_cast %8 : vector<1x1x4x144xbf16> to vector<4x144xbf16>
    %c1_10 = arith.constant 1 : index
    %c0_11 = arith.constant 0 : index
    %c0_12 = arith.constant 0 : index
    %10 = vector.load %arg4[%c1_10, %c0_11, %c0_12] : memref<9x128x4xbf16, #tpu.memory_space<vmem>>, vector<1x128x4xbf16>
    %11 = vector.shape_cast %10 : vector<1x128x4xbf16> to vector<128x4xbf16>
    %cst_13 = arith.constant dense<0.000000e+00> : vector<128x144xf32>
    %12 = tpu.matmul %11, %9, %cst_13 {dimension_numbers = #tpu.dot_dimension_numbers<[1], [0], [0], [1], [0, 0, 1, 1], [], []>} : vector<128x4xbf16>, vector<4x144xbf16>, vector<128x144xf32> -> vector<128x144xf32>
    %13 = arith.addf %7, %12 : vector<128x144xf32>
    %c0_14 = arith.constant 0 : index
    %c0_15 = arith.constant 0 : index
    %c0_16 = arith.constant 0 : index
    %c2 = arith.constant 2 : index
    %14 = vector.load %arg2[%c0_14, %c0_15, %c0_16, %c2] : memref<1x1x4x256xbf16, #tpu.memory_space<vmem>>, vector<1x1x4x144xbf16>
    %15 = vector.shape_cast %14 : vector<1x1x4x144xbf16> to vector<4x144xbf16>
    %c2_17 = arith.constant 2 : index
    %c0_18 = arith.constant 0 : index
    %c0_19 = arith.constant 0 : index
    %16 = vector.load %arg4[%c2_17, %c0_18, %c0_19] : memref<9x128x4xbf16, #tpu.memory_space<vmem>>, vector<1x128x4xbf16>
    %17 = vector.shape_cast %16 : vector<1x128x4xbf16> to vector<128x4xbf16>
    %cst_20 = arith.constant dense<0.000000e+00> : vector<128x144xf32>
    %18 = tpu.matmul %17, %15, %cst_20 {dimension_numbers = #tpu.dot_dimension_numbers<[1], [0], [0], [1], [0, 0, 1, 1], [], []>} : vector<128x4xbf16>, vector<4x144xbf16>, vector<128x144xf32> -> vector<128x144xf32>
    %19 = arith.addf %13, %18 : vector<128x144xf32>
    %c0_21 = arith.constant 0 : index
    %c0_22 = arith.constant 0 : index
    %c0_23 = arith.constant 0 : index
    %c18 = arith.constant 18 : index
    %20 = vector.load %arg2[%c0_21, %c0_22, %c0_23, %c18] : memref<1x1x4x256xbf16, #tpu.memory_space<vmem>>, vector<1x1x4x144xbf16>
    %21 = vector.shape_cast %20 : vector<1x1x4x144xbf16> to vector<4x144xbf16>
    %c3 = arith.constant 3 : index
    %c0_24 = arith.constant 0 : index
    %c0_25 = arith.constant 0 : index
    %22 = vector.load %arg4[%c3, %c0_24, %c0_25] : memref<9x128x4xbf16, #tpu.memory_space<vmem>>, vector<1x128x4xbf16>
    %23 = vector.shape_cast %22 : vector<1x128x4xbf16> to vector<128x4xbf16>
    %cst_26 = arith.constant dense<0.000000e+00> : vector<128x144xf32>
    %24 = tpu.matmul %23, %21, %cst_26 {dimension_numbers = #tpu.dot_dimension_numbers<[1], [0], [0], [1], [0, 0, 1, 1], [], []>} : vector<128x4xbf16>, vector<4x144xbf16>, vector<128x144xf32> -> vector<128x144xf32>
    %25 = arith.addf %19, %24 : vector<128x144xf32>
    %c0_27 = arith.constant 0 : index
    %c0_28 = arith.constant 0 : index
    %c0_29 = arith.constant 0 : index
    %c19 = arith.constant 19 : index
    %26 = vector.load %arg2[%c0_27, %c0_28, %c0_29, %c19] : memref<1x1x4x256xbf16, #tpu.memory_space<vmem>>, vector<1x1x4x144xbf16>
    %27 = vector.shape_cast %26 : vector<1x1x4x144xbf16> to vector<4x144xbf16>
    %c4 = arith.constant 4 : index
    %c0_30 = arith.constant 0 : index
    %c0_31 = arith.constant 0 : index
    %28 = vector.load %arg4[%c4, %c0_30, %c0_31] : memref<9x128x4xbf16, #tpu.memory_space<vmem>>, vector<1x128x4xbf16>
    %29 = vector.shape_cast %28 : vector<1x128x4xbf16> to vector<128x4xbf16>
    %cst_32 = arith.constant dense<0.000000e+00> : vector<128x144xf32>
    %30 = tpu.matmul %29, %27, %cst_32 {dimension_numbers = #tpu.dot_dimension_numbers<[1], [0], [0], [1], [0, 0, 1, 1], [], []>} : vector<128x4xbf16>, vector<4x144xbf16>, vector<128x144xf32> -> vector<128x144xf32>
    %31 = arith.addf %25, %30 : vector<128x144xf32>
    %c0_33 = arith.constant 0 : index
    %c0_34 = arith.constant 0 : index
    %c0_35 = arith.constant 0 : index
    %c20 = arith.constant 20 : index
    %32 = vector.load %arg2[%c0_33, %c0_34, %c0_35, %c20] : memref<1x1x4x256xbf16, #tpu.memory_space<vmem>>, vector<1x1x4x144xbf16>
    %33 = vector.shape_cast %32 : vector<1x1x4x144xbf16> to vector<4x144xbf16>
    %c5 = arith.constant 5 : index
    %c0_36 = arith.constant 0 : index
    %c0_37 = arith.constant 0 : index
    %34 = vector.load %arg4[%c5, %c0_36, %c0_37] : memref<9x128x4xbf16, #tpu.memory_space<vmem>>, vector<1x128x4xbf16>
    %35 = vector.shape_cast %34 : vector<1x128x4xbf16> to vector<128x4xbf16>
    %cst_38 = arith.constant dense<0.000000e+00> : vector<128x144xf32>
    %36 = tpu.matmul %35, %33, %cst_38 {dimension_numbers = #tpu.dot_dimension_numbers<[1], [0], [0], [1], [0, 0, 1, 1], [], []>} : vector<128x4xbf16>, vector<4x144xbf16>, vector<128x144xf32> -> vector<128x144xf32>
    %37 = arith.addf %31, %36 : vector<128x144xf32>
    %c0_39 = arith.constant 0 : index
    %c0_40 = arith.constant 0 : index
    %c0_41 = arith.constant 0 : index
    %c36 = arith.constant 36 : index
    %38 = vector.load %arg2[%c0_39, %c0_40, %c0_41, %c36] : memref<1x1x4x256xbf16, #tpu.memory_space<vmem>>, vector<1x1x4x144xbf16>
    %39 = vector.shape_cast %38 : vector<1x1x4x144xbf16> to vector<4x144xbf16>
    %c6 = arith.constant 6 : index
    %c0_42 = arith.constant 0 : index
    %c0_43 = arith.constant 0 : index
    %40 = vector.load %arg4[%c6, %c0_42, %c0_43] : memref<9x128x4xbf16, #tpu.memory_space<vmem>>, vector<1x128x4xbf16>
    %41 = vector.shape_cast %40 : vector<1x128x4xbf16> to vector<128x4xbf16>
    %cst_44 = arith.constant dense<0.000000e+00> : vector<128x144xf32>
    %42 = tpu.matmul %41, %39, %cst_44 {dimension_numbers = #tpu.dot_dimension_numbers<[1], [0], [0], [1], [0, 0, 1, 1], [], []>} : vector<128x4xbf16>, vector<4x144xbf16>, vector<128x144xf32> -> vector<128x144xf32>
    %43 = arith.addf %37, %42 : vector<128x144xf32>
    %c0_45 = arith.constant 0 : index
    %c0_46 = arith.constant 0 : index
    %c0_47 = arith.constant 0 : index
    %c37 = arith.constant 37 : index
    %44 = vector.load %arg2[%c0_45, %c0_46, %c0_47, %c37] : memref<1x1x4x256xbf16, #tpu.memory_space<vmem>>, vector<1x1x4x144xbf16>
    %45 = vector.shape_cast %44 : vector<1x1x4x144xbf16> to vector<4x144xbf16>
    %c7 = arith.constant 7 : index
    %c0_48 = arith.constant 0 : index
    %c0_49 = arith.constant 0 : index
    %46 = vector.load %arg4[%c7, %c0_48, %c0_49] : memref<9x128x4xbf16, #tpu.memory_space<vmem>>, vector<1x128x4xbf16>
    %47 = vector.shape_cast %46 : vector<1x128x4xbf16> to vector<128x4xbf16>
    %cst_50 = arith.constant dense<0.000000e+00> : vector<128x144xf32>
    %48 = tpu.matmul %47, %45, %cst_50 {dimension_numbers = #tpu.dot_dimension_numbers<[1], [0], [0], [1], [0, 0, 1, 1], [], []>} : vector<128x4xbf16>, vector<4x144xbf16>, vector<128x144xf32> -> vector<128x144xf32>
    %49 = arith.addf %43, %48 : vector<128x144xf32>
    %c0_51 = arith.constant 0 : index
    %c0_52 = arith.constant 0 : index
    %c0_53 = arith.constant 0 : index
    %c38 = arith.constant 38 : index
    %50 = vector.load %arg2[%c0_51, %c0_52, %c0_53, %c38] : memref<1x1x4x256xbf16, #tpu.memory_space<vmem>>, vector<1x1x4x144xbf16>
    %51 = vector.shape_cast %50 : vector<1x1x4x144xbf16> to vector<4x144xbf16>
    %c8 = arith.constant 8 : index
    %c0_54 = arith.constant 0 : index
    %c0_55 = arith.constant 0 : index
    %52 = vector.load %arg4[%c8, %c0_54, %c0_55] : memref<9x128x4xbf16, #tpu.memory_space<vmem>>, vector<1x128x4xbf16>
    %53 = vector.shape_cast %52 : vector<1x128x4xbf16> to vector<128x4xbf16>
    %cst_56 = arith.constant dense<0.000000e+00> : vector<128x144xf32>
    %54 = tpu.matmul %53, %51, %cst_56 {dimension_numbers = #tpu.dot_dimension_numbers<[1], [0], [0], [1], [0, 0, 1, 1], [], []>} : vector<128x4xbf16>, vector<4x144xbf16>, vector<128x144xf32> -> vector<128x144xf32>
    %55 = arith.addf %49, %54 : vector<128x144xf32>
    %c0_57 = arith.constant 0 : index
    %c0_58 = arith.constant 0 : index
    %56 = vector.load %arg5[%c0_57, %c0_58] : memref<128x1xf32, #tpu.memory_space<vmem>>, vector<128x1xf32>
    %57 = vector.broadcast %56 : vector<128x1xf32> to vector<128x144xf32>
    %58 = arith.addf %55, %57 : vector<128x144xf32>
    %cst_59 = arith.constant 0.000000e+00 : f32
    %59 = vector.broadcast %cst_59 : f32 to vector<128x144xf32>
    %60 = arith.maximumf %58, %59 : vector<128x144xf32>
    %c0_60 = arith.constant 0 : index
    %c0_61 = arith.constant 0 : index
    %61 = vector.load %arg12[%c0_60, %c0_61] : memref<128x1xf32, #tpu.memory_space<vmem>>, vector<128x1xf32>
    %c0_62 = arith.constant 0 : index
    %c0_63 = arith.constant 0 : index
    %62 = vector.load %arg3[%c0_62, %c0_63] : memref<1x144xf32, #tpu.memory_space<vmem>>, vector<1x144xf32>
    %63 = vector.broadcast %62 : vector<1x144xf32> to vector<128x144xf32>
    %64 = arith.mulf %60, %63 : vector<128x144xf32>
    %cst_64 = arith.constant dense<0.000000e+00> : vector<128xf32>
    %65 = vector.multi_reduction <add>, %64, %cst_64 [1] : vector<128x144xf32> to vector<128xf32>
    %66 = vector.shape_cast %65 : vector<128xf32> to vector<128x1xf32>
    %67 = arith.addf %61, %66 : vector<128x1xf32>
    %c0_65 = arith.constant 0 : index
    %c0_66 = arith.constant 0 : index
    %68 = vector.load %arg12[%c0_65, %c0_66] : memref<128x1xf32, #tpu.memory_space<vmem>>, vector<128x1xf32>
    tpu.vector_store %arg12[%c0_65, %c0_66], %67 {strides = array<i32>} : memref<128x1xf32, #tpu.memory_space<vmem>>, vector<128x1xf32>,
    %c1_i32 = arith.constant 1 : i32
    %69 = arith.cmpi eq, %arg1, %c1_i32 : i32
    %70 = arith.extui %69 : i1 to i32
    %c0_i32_67 = arith.constant 0 : i32
    %71 = arith.cmpi ne, %70, %c0_i32_67 : i32
    scf.if %71 {
      %c0_68 = arith.constant 0 : index
      %c0_69 = arith.constant 0 : index
      %72 = vector.load %arg12[%c0_68, %c0_69] : memref<128x1xf32, #tpu.memory_space<vmem>>, vector<128x1xf32>
      %cst_70 = arith.constant 3.906250e-03 : f32
      %73 = vector.broadcast %cst_70 : f32 to vector<128x1xf32>
      %74 = arith.mulf %72, %73 : vector<128x1xf32>
      %75 = arith.truncf %74 : vector<128x1xf32> to vector<128x1xbf16>
      %c0_71 = arith.constant 0 : index
      %c0_72 = arith.constant 0 : index
      %76 = vector.load %arg6[%c0_71, %c0_72] : memref<128x128xbf16, #tpu.memory_space<vmem>>, vector<128x128xbf16>
      %cst_73 = arith.constant dense<0.000000e+00> : vector<128x1xf32>
      %77 = tpu.matmul %76, %75, %cst_73 {dimension_numbers = #tpu.dot_dimension_numbers<[1], [0], [0], [1], [0, 0, 1, 1], [], []>} : vector<128x128xbf16>, vector<128x1xbf16>, vector<128x1xf32> -> vector<128x1xf32>
      %c0_74 = arith.constant 0 : index
      %c0_75 = arith.constant 0 : index
      %78 = vector.load %arg7[%c0_74, %c0_75] : memref<128x1xf32, #tpu.memory_space<vmem>>, vector<128x1xf32>
      %79 = arith.addf %77, %78 : vector<128x1xf32>
      %80 = arith.negf %79 : vector<128x1xf32>
      %81 = math.exp %80 : vector<128x1xf32>
      %cst_76 = arith.constant 1.000000e+00 : f32
      %82 = vector.broadcast %cst_76 : f32 to vector<128x1xf32>
      %83 = arith.addf %82, %81 : vector<128x1xf32>
      %84 = arith.divf %82, %83 : vector<128x1xf32>
      %c0_77 = arith.constant 0 : index
      %c0_78 = arith.constant 0 : index
      %c0_79 = arith.constant 0 : index
      %85 = vector.load %arg10[%c0_77, %c0_78, %c0_79] : memref<1x128x1xf32, #tpu.memory_space<vmem>>, vector<1x128x1xf32>
      %86 = vector.shape_cast %85 : vector<1x128x1xf32> to vector<128x1xf32>
      %87 = vector.shape_cast %84 : vector<128x1xf32> to vector<1x128x1xf32>
      tpu.vector_store %arg10[%c0_77, %c0_78, %c0_79], %87 {strides = array<i32>} : memref<1x128x1xf32, #tpu.memory_space<vmem>>, vector<1x128x1xf32>,
      %c0_80 = arith.constant 0 : index
      %c0_81 = arith.constant 0 : index
      %c0_82 = arith.constant 0 : index
      %88 = vector.load %arg8[%c0_80, %c0_81, %c0_82] : memref<1x128x1xf32, #tpu.memory_space<vmem>>, vector<1x128x1xf32>
      %89 = vector.shape_cast %88 : vector<1x128x1xf32> to vector<128x1xf32>
      %c0_83 = arith.constant 0 : index
      %c0_84 = arith.constant 0 : index
      %90 = vector.load %arg9[%c0_83, %c0_84] : memref<128x1xf32, #tpu.memory_space<vmem>>, vector<128x1xf32>
      %91 = arith.mulf %90, %89 : vector<128x1xf32>
      %cst_85 = arith.constant 0.000000e+00 : f32
      %92 = vector.broadcast %cst_85 : f32 to vector<128x1xf32>
      %93 = arith.subf %92, %79 : vector<128x1xf32>
      %cst_86 = arith.constant 0.000000e+00 : f32
      %94 = vector.broadcast %cst_86 : f32 to vector<128x1xf32>
      %95 = arith.maximumf %94, %93 : vector<128x1xf32>
      %96 = vector.broadcast %cst_86 : f32 to vector<128x1xf32>
      %97 = arith.subf %96, %93 : vector<128x1xf32>
      %98 = arith.cmpf one, %97, %97 : vector<128x1xf32>
      %99 = vector.broadcast %cst_86 : f32 to vector<128x1xf32>
      %100 = arith.addf %99, %93 : vector<128x1xf32>
      %101 = math.absf %97 : vector<128x1xf32>
      %cst_87 = arith.constant 0.000000e+00 : f32
      %102 = vector.broadcast %cst_87 : f32 to vector<128x1xf32>
      %103 = arith.subf %102, %101 : vector<128x1xf32>
      %104 = math.exp %103 : vector<128x1xf32>
      %105 = math.log1p %104 : vector<128x1xf32>
      %106 = arith.addf %95, %105 : vector<128x1xf32>
      %107 = arith.select %98, %100, %106 : vector<128x1xi1>, vector<128x1xf32>
      %108 = arith.mulf %91, %107 : vector<128x1xf32>
      %cst_88 = arith.constant 1.000000e+00 : f32
      %109 = vector.broadcast %cst_88 : f32 to vector<128x1xf32>
      %110 = arith.subf %109, %89 : vector<128x1xf32>
      %cst_89 = arith.constant 0.000000e+00 : f32
      %111 = vector.broadcast %cst_89 : f32 to vector<128x1xf32>
      %112 = arith.maximumf %111, %79 : vector<128x1xf32>
      %113 = vector.broadcast %cst_89 : f32 to vector<128x1xf32>
      %114 = arith.subf %113, %79 : vector<128x1xf32>
      %115 = arith.cmpf one, %114, %114 : vector<128x1xf32>
      %116 = vector.broadcast %cst_89 : f32 to vector<128x1xf32>
      %117 = arith.addf %116, %79 : vector<128x1xf32>
      %118 = math.absf %114 : vector<128x1xf32>
      %cst_90 = arith.constant 0.000000e+00 : f32
      %119 = vector.broadcast %cst_90 : f32 to vector<128x1xf32>
      %120 = arith.subf %119, %118 : vector<128x1xf32>
      %121 = math.exp %120 : vector<128x1xf32>
      %122 = math.log1p %121 : vector<128x1xf32>
      %123 = arith.addf %112, %122 : vector<128x1xf32>
      %124 = arith.select %115, %117, %123 : vector<128x1xi1>, vector<128x1xf32>
      %125 = arith.mulf %110, %124 : vector<128x1xf32>
      %126 = arith.addf %108, %125 : vector<128x1xf32>
      %127 = tpu.iota {dimensions = array<i32: 0>} : vector<128x1xi32>
      %c8_i32 = arith.constant 8 : i32
      %128 = vector.broadcast %c8_i32 : i32 to vector<128x1xi32>
      %129 = arith.cmpi slt, %127, %128 : vector<128x1xi32>
      %cst_91 = arith.constant 0.000000e+00 : f32
      %130 = vector.broadcast %cst_91 : f32 to vector<128x1xf32>
      %131 = arith.select %129, %126, %130 : vector<128x1xi1>, vector<128x1xf32>
      %c0_92 = arith.constant 0 : index
      %c0_93 = arith.constant 0 : index
      %c0_94 = arith.constant 0 : index
      %132 = vector.load %arg11[%c0_92, %c0_93, %c0_94] : memref<1x128x1xf32, #tpu.memory_space<vmem>>, vector<1x128x1xf32>
      %133 = vector.shape_cast %132 : vector<1x128x1xf32> to vector<128x1xf32>
      %134 = vector.shape_cast %131 : vector<128x1xf32> to vector<1x128x1xf32>
      tpu.vector_store %arg11[%c0_92, %c0_93, %c0_94], %134 {strides = array<i32>} : memref<1x128x1xf32, #tpu.memory_space<vmem>>, vector<1x128x1xf32>,
    } else {
    }
    return
  }
  func.func @transform_0(%arg0: i32, %arg1: i32) -> (i32, i32, i32, i32) {
    %c0_i32 = arith.constant 0 : i32
    %c0_i32_0 = arith.constant 0 : i32
    %c0_i32_1 = arith.constant 0 : i32
    return %arg0, %arg1, %c0_i32, %c0_i32_0 : i32, i32, i32, i32
  }
  func.func @transform_1(%arg0: i32, %arg1: i32) -> (i32, i32) {
    %c0_i32 = arith.constant 0 : i32
    %c0_i32_0 = arith.constant 0 : i32
    %c0_i32_1 = arith.constant 0 : i32
    return %c0_i32, %c0_i32_0 : i32, i32
  }
  func.func @transform_2(%arg0: i32, %arg1: i32) -> (i32, i32, i32) {
    %c0_i32 = arith.constant 0 : i32
    %c0_i32_0 = arith.constant 0 : i32
    %c0_i32_1 = arith.constant 0 : i32
    %c0_i32_2 = arith.constant 0 : i32
    return %c0_i32, %c0_i32_0, %c0_i32_1 : i32, i32, i32
  }
  func.func @transform_3(%arg0: i32, %arg1: i32) -> (i32, i32) {
    %c0_i32 = arith.constant 0 : i32
    %c0_i32_0 = arith.constant 0 : i32
    %c0_i32_1 = arith.constant 0 : i32
    return %c0_i32, %c0_i32_0 : i32, i32
  }
  func.func @transform_4(%arg0: i32, %arg1: i32) -> (i32, i32) {
    %c0_i32 = arith.constant 0 : i32
    %c0_i32_0 = arith.constant 0 : i32
    %c0_i32_1 = arith.constant 0 : i32
    return %c0_i32, %c0_i32_0 : i32, i32
  }
  func.func @transform_5(%arg0: i32, %arg1: i32) -> (i32, i32) {
    %c0_i32 = arith.constant 0 : i32
    %c0_i32_0 = arith.constant 0 : i32
    %c0_i32_1 = arith.constant 0 : i32
    return %c0_i32, %c0_i32_0 : i32, i32
  }
  func.func @transform_6(%arg0: i32, %arg1: i32) -> (i32, i32, i32) {
    %c0_i32 = arith.constant 0 : i32
    %c0_i32_0 = arith.constant 0 : i32
    %c0_i32_1 = arith.constant 0 : i32
    return %arg0, %c0_i32, %c0_i32_0 : i32, i32, i32
  }
  func.func @transform_7(%arg0: i32, %arg1: i32) -> (i32, i32) {
    %c0_i32 = arith.constant 0 : i32
    %c0_i32_0 = arith.constant 0 : i32
    %c0_i32_1 = arith.constant 0 : i32
    return %c0_i32, %c0_i32_0 : i32, i32
  }
  func.func @transform_8(%arg0: i32, %arg1: i32) -> (i32, i32, i32) {
    %c0_i32 = arith.constant 0 : i32
    %c0_i32_0 = arith.constant 0 : i32
    %c0_i32_1 = arith.constant 0 : i32
    return %arg0, %c0_i32, %c0_i32_0 : i32, i32, i32
  }
  func.func @transform_9(%arg0: i32, %arg1: i32) -> (i32, i32, i32) {
    %c0_i32 = arith.constant 0 : i32
    %c0_i32_0 = arith.constant 0 : i32
    %c0_i32_1 = arith.constant 0 : i32
    return %arg0, %c0_i32, %c0_i32_0 : i32, i32, i32
  }
}

</mosaic_0001>

<llo_original>
// kernel: clsnet_forward.1
$region0: #{clsnet_forward.1}
  #allocation0 [shape = 'u32[]', space=smem, size = 0x4, offset = 0x4, fixed_abs, tag = 'smem constant byte address 0x4 - core index']
  #allocation1 [shape = 'u32[144,128]{1,0:T(1,128)}', space=vmem, size = 0x12000, scoped, tag = 'internal scratch']
  #allocation2 [shape = 'f32[128,1]{1,0:T(8,128)}', space=vmem, size = 0x10000, scoped, tag = 'scratch operand']
  %s0 = inlined_call_operand.vmem [shape: bf16[2,2,4,256], index: 0, kind: input, shape index: {}]
  %s1 = inlined_call_operand.vmem [shape: f32[1,144], index: 1, kind: input, shape index: {}]
  %s2 = inlined_call_operand.vmem [shape: bf16[9,128,4], index: 2, kind: input, shape index: {}]
  %s3 = inlined_call_operand.vmem [shape: f32[128,1], index: 3, kind: input, shape index: {}]
  %s4 = inlined_call_operand.vmem [shape: bf16[128,128], index: 4, kind: input, shape index: {}]
  %s5 = inlined_call_operand.vmem [shape: f32[128,1], index: 5, kind: input, shape index: {}]
  %s6 = inlined_call_operand.vmem [shape: f32[2,128,1], index: 6, kind: input, shape index: {}]
  %s7 = inlined_call_operand.vmem [shape: f32[128,1], index: 7, kind: input, shape index: {}]
  %s8 = inlined_call_operand.vmem [shape: f32[2,128,1], index: 8, kind: output, shape index: {0}]
  %s9 = inlined_call_operand.hbm [shape: f32[2,128,1], index: 9, kind: output, shape index: {1}]
  %10 = xla_tuple %s8, %s9
  %s11 = sld [smem:[#allocation0]]
  $region81: #{clsnet_forward.1} parent=0
    _
  %s13 = ssub.s32 1, %s11
  %s14 = scalar_select 0, %s13, %s11
  $region1: #{clsnet_forward.1} parent=0
    #allocation3 [shape = 'u8[131072]{0}', space=vmem, size = 0x20000, scoped, tag = 'output window, operand 1']
    #allocation4 [shape = 's32[2]{0}', space=sflag, size = 0x8, scoped, tag = 'scoped memory for clsnet_forward.1']
    %15 = vsyncpa [#allocation4], 0
    %s16 = scalar_lea.sflag [#allocation4], 1
    %17 = vsyncpa %s16, 0
    loop: start=0, step=1, limit=6
    $region2: #{clsnet_forward.1} parent=1 // loop_pre_header
      _
    $region3: #{clsnet_forward.1} parent=1 // loop_header
      %s19 = sphi 0, %s23
      %p20 = scmp.ge.s32.totalorder %s19, 6
      %s26 = sphi 0, %s38
      %s27 = sphi 0, %s34
      %s28 = sphi 0, %s26
      %s29 = sphi 0, %s27
      %s30 = sphi 0, %s28
      %s31 = sphi 0, %s29
      %s43 = sphi 0, %s45
      %s46 = sphi 0, %s43
      %s47 = sphi 0, %s46
      %s63 = sphi 0, %s47
      %s67 = sphi 0, %s67
      %s69 = sphi 0, %s67
      %s70 = sphi 0, %s69
      %s84 = sphi 0, %s70
      %s88 = sphi 0, %s88
      %s90 = sphi 0, %s88
      %s91 = sphi 0, %s90
      %s105 = sphi 0, %s91
      %s109 = sphi 0, %s109
      %s111 = sphi 0, %s109
      %s112 = sphi 0, %s111
      %s126 = sphi 0, %s112
      %s130 = sphi 0, %s130
      %s132 = sphi 0, %s130
      %s133 = sphi 0, %s132
      %s147 = sphi 0, %s133
      %s151 = sphi 0, %s151
      %s153 = sphi 0, %s151
      %s154 = sphi 0, %s153
      %s168 = sphi 0, %s154
      %s174 = sphi 0, %s176
      %s177 = sphi 0, %s174
      %s178 = sphi 0, %s177
      %s194 = sphi 0, %s178
      %s198 = sphi 0, %s198
      %s200 = sphi 0, %s198
      %s201 = sphi 0, %s200
      %s215 = sphi 0, %s201
      %s221 = sphi 0, %s223
      %s224 = sphi 0, %s221
      %s225 = sphi 0, %s224
      %s241 = sphi 0, %s225
      %s247 = sphi 0, %s249
      %s250 = sphi 0, %s247
      %s251 = sphi 0, %s250
      %s267 = sphi 0, %s251
    $region4: #{clsnet_forward.1} parent=1 // loop_header_branch
      %22 = sbr.rel (%p20) target = $region8
    $region5: #{clsnet_forward.1} parent=1 // loop_body
      %s24 = ssub.s32 %s19, 1
      %s25 = ssub.s32 %s19, 2
      %s32 = sadd.s32 1, %s27
      %p33 = scmp.ge.s32.totalorder %s32, 2
      %s34 = scalar_select %p33, 0, %s32
      %s35 = sadd.s32 1, %s26
      %s36 = scalar_select %p33, %s35, %s26
      %p37 = scmp.ge.s32.totalorder %s36, 2
      %s38 = scalar_select %p37, 0, %s36
      %s39 = ssub.s32 %s26, %s38
      %s40 = ssub.s32 %s27, %s34
      %s41 = sor.u32 %s39, %s40
      %p42 = scmp.eq.s32.totalorder %s41, 0
      %s44 = sadd.s32 %s43, 1
      %s45 = scalar_select %p42, %s43, %s44
      %p48 = pneg %p42
      %p49 = scmp.eq.s32.totalorder %s19, 3
      %p50 = por %p48, %p49
      %p51 = scmp.ne.s32.totalorder %s43, %s46
      %p52 = scmp.eq.s32.totalorder %s19, 0
      %p53 = por %p51, %p52
      %p54 = scmp.ne.s32.totalorder %s43, %s46
      %p55 = scmp.eq.s32.totalorder %s24, 3
      %p56 = por %p54, %p55
      %p57 = scmp.ne.s32.totalorder %s46, %s47
      %p58 = scmp.eq.s32.totalorder %s24, 0
      %p59 = por %p57, %p58
      %p60 = scmp.ne.s32.totalorder %s46, %s47
      %p61 = scmp.eq.s32.totalorder %s25, 3
      %p62 = por %p60, %p61
      %p64 = scmp.ne.s32.totalorder %s47, %s63
      %p65 = scmp.eq.s32.totalorder %s25, 0
      %p66 = por %p64, %p65
      %s68 = sadd.s32 %s67, 1
      %p71 = scmp.eq.s32.totalorder %s19, 3
      %p72 = scmp.ne.s32.totalorder %s67, %s69
      %p73 = scmp.eq.s32.totalorder %s19, 0
      %p74 = por %p72, %p73
      %p75 = scmp.ne.s32.totalorder %s67, %s69
      %p76 = scmp.eq.s32.totalorder %s24, 3
      %p77 = por %p75, %p76
      %p78 = scmp.ne.s32.totalorder %s69, %s70
      %p79 = scmp.eq.s32.totalorder %s24, 0
      %p80 = por %p78, %p79
      %p81 = scmp.ne.s32.totalorder %s69, %s70
      %p82 = scmp.eq.s32.totalorder %s25, 3
      %p83 = por %p81, %p82
      %p85 = scmp.ne.s32.totalorder %s70, %s84
      %p86 = scmp.eq.s32.totalorder %s25, 0
      %p87 = por %p85, %p86
      %s89 = sadd.s32 %s88, 1
      %p92 = scmp.eq.s32.totalorder %s19, 3
      %p93 = scmp.ne.s32.totalorder %s88, %s90
      %p94 = scmp.eq.s32.totalorder %s19, 0
      %p95 = por %p93, %p94
      %p96 = scmp.ne.s32.totalorder %s88, %s90
      %p97 = scmp.eq.s32.totalorder %s24, 3
      %p98 = por %p96, %p97
      %p99 = scmp.ne.s32.totalorder %s90, %s91
      %p100 = scmp.eq.s32.totalorder %s24, 0
      %p101 = por %p99, %p100
      %p102 = scmp.ne.s32.totalorder %s90, %s91
      %p103 = scmp.eq.s32.totalorder %s25, 3
      %p104 = por %p102, %p103
      %p106 = scmp.ne.s32.totalorder %s91, %s105
      %p107 = scmp.eq.s32.totalorder %s25, 0
      %p108 = por %p106, %p107
      %s110 = sadd.s32 %s109, 1
      %p113 = scmp.eq.s32.totalorder %s19, 3
      %p114 = scmp.ne.s32.totalorder %s109, %s111
      %p115 = scmp.eq.s32.totalorder %s19, 0
      %p116 = por %p114, %p115
      %p117 = scmp.ne.s32.totalorder %s109, %s111
      %p118 = scmp.eq.s32.totalorder %s24, 3
      %p119 = por %p117, %p118
      %p120 = scmp.ne.s32.totalorder %s111, %s112
      %p121 = scmp.eq.s32.totalorder %s24, 0
      %p122 = por %p120, %p121
      %p123 = scmp.ne.s32.totalorder %s111, %s112
      %p124 = scmp.eq.s32.totalorder %s25, 3
      %p125 = por %p123, %p124
      %p127 = scmp.ne.s32.totalorder %s112, %s126
      %p128 = scmp.eq.s32.totalorder %s25, 0
      %p129 = por %p127, %p128
      %s131 = sadd.s32 %s130, 1
      %p134 = scmp.eq.s32.totalorder %s19, 3
      %p135 = scmp.ne.s32.totalorder %s130, %s132
      %p136 = scmp.eq.s32.totalorder %s19, 0
      %p137 = por %p135, %p136
      %p138 = scmp.ne.s32.totalorder %s130, %s132
      %p139 = scmp.eq.s32.totalorder %s24, 3
      %p140 = por %p138, %p139
      %p141 = scmp.ne.s32.totalorder %s132, %s133
      %p142 = scmp.eq.s32.totalorder %s24, 0
      %p143 = por %p141, %p142
      %p144 = scmp.ne.s32.totalorder %s132, %s133
      %p145 = scmp.eq.s32.totalorder %s25, 3
      %p146 = por %p144, %p145
      %p148 = scmp.ne.s32.totalorder %s133, %s147
      %p149 = scmp.eq.s32.totalorder %s25, 0
      %p150 = por %p148, %p149
      %s152 = sadd.s32 %s151, 1
      %p155 = scmp.eq.s32.totalorder %s19, 3
      %p156 = scmp.ne.s32.totalorder %s151, %s153
      %p157 = scmp.eq.s32.totalorder %s19, 0
      %p158 = por %p156, %p157
      %p159 = scmp.ne.s32.totalorder %s151, %s153
      %p160 = scmp.eq.s32.totalorder %s24, 3
      %p161 = por %p159, %p160
      %p162 = scmp.ne.s32.totalorder %s153, %s154
      %p163 = scmp.eq.s32.totalorder %s24, 0
      %p164 = por %p162, %p163
      %p165 = scmp.ne.s32.totalorder %s153, %s154
      %p166 = scmp.eq.s32.totalorder %s25, 3
      %p167 = por %p165, %p166
      %p169 = scmp.ne.s32.totalorder %s154, %s168
      %p170 = scmp.eq.s32.totalorder %s25, 0
      %p171 = por %p169, %p170
      %s172 = ssub.s32 %s26, %s38
      %p173 = scmp.eq.s32.totalorder %s172, 0
      %s175 = sadd.s32 %s174, 1
      %s176 = scalar_select %p173, %s174, %s175
      %p179 = pneg %p173
      %p180 = scmp.eq.s32.totalorder %s19, 3
      %p181 = por %p179, %p180
      %p182 = scmp.ne.s32.totalorder %s174, %s177
      %p183 = scmp.eq.s32.totalorder %s19, 0
      %p184 = por %p182, %p183
      %p185 = scmp.ne.s32.totalorder %s174, %s177
      %p186 = scmp.eq.s32.totalorder %s24, 3
      %p187 = por %p185, %p186
      %p188 = scmp.ne.s32.totalorder %s177, %s178
      %p189 = scmp.eq.s32.totalorder %s24, 0
      %p190 = por %p188, %p189
      %p191 = scmp.ne.s32.totalorder %s177, %s178
      %p192 = scmp.eq.s32.totalorder %s25, 3
      %p193 = por %p191, %p192
      %p195 = scmp.ne.s32.totalorder %s178, %s194
      %p196 = scmp.eq.s32.totalorder %s25, 0
      %p197 = por %p195, %p196
      %s199 = sadd.s32 %s198, 1
      %p202 = scmp.eq.s32.totalorder %s19, 3
      %p203 = scmp.ne.s32.totalorder %s198, %s200
      %p204 = scmp.eq.s32.totalorder %s19, 0
      %p205 = por %p203, %p204
      %p206 = scmp.ne.s32.totalorder %s198, %s200
      %p207 = scmp.eq.s32.totalorder %s24, 3
      %p208 = por %p206, %p207
      %p209 = scmp.ne.s32.totalorder %s200, %s201
      %p210 = scmp.eq.s32.totalorder %s24, 0
      %p211 = por %p209, %p210
      %p212 = scmp.ne.s32.totalorder %s200, %s201
      %p213 = scmp.eq.s32.totalorder %s25, 3
      %p214 = por %p212, %p213
      %p216 = scmp.ne.s32.totalorder %s201, %s215
      %p217 = scmp.eq.s32.totalorder %s25, 0
      %p218 = por %p216, %p217
      %s219 = ssub.s32 %s26, %s38
      %p220 = scmp.eq.s32.totalorder %s219, 0
      %s222 = sadd.s32 %s221, 1
      %s223 = scalar_select %p220, %s221, %s222
      %p226 = pneg %p220
      %p227 = scmp.eq.s32.totalorder %s19, 3
      %p228 = por %p226, %p227
      %p229 = scmp.ne.s32.totalorder %s221, %s224
      %p230 = scmp.eq.s32.totalorder %s19, 0
      %p231 = por %p229, %p230
      %p232 = scmp.ne.s32.totalorder %s221, %s224
      %p233 = scmp.eq.s32.totalorder %s24, 3
      %p234 = por %p232, %p233
      %p235 = scmp.ne.s32.totalorder %s224, %s225
      %p236 = scmp.eq.s32.totalorder %s24, 0
      %p237 = por %p235, %p236
      %p238 = scmp.ne.s32.totalorder %s224, %s225
      %p239 = scmp.eq.s32.totalorder %s25, 3
      %p240 = por %p238, %p239
      %p242 = scmp.ne.s32.totalorder %s225, %s241
      %p243 = scmp.eq.s32.totalorder %s25, 0
      %p244 = por %p242, %p243
      %s245 = ssub.s32 %s26, %s38
      %p246 = scmp.eq.s32.totalorder %s245, 0
      %s248 = sadd.s32 %s247, 1
      %s249 = scalar_select %p246, %s247, %s248
      %p252 = pneg %p246
      %p253 = scmp.eq.s32.totalorder %s19, 3
      %p254 = por %p252, %p253
      %p255 = scmp.ne.s32.totalorder %s247, %s250
      %p256 = scmp.eq.s32.totalorder %s19, 0
      %p257 = por %p255, %p256
      %p258 = scmp.ne.s32.totalorder %s247, %s250
      %p259 = scmp.eq.s32.totalorder %s24, 3
      %p260 = por %p258, %p259
      %p261 = scmp.ne.s32.totalorder %s250, %s251
      %p262 = scmp.eq.s32.totalorder %s24, 0
      %p263 = por %p261, %p262
      %p264 = scmp.ne.s32.totalorder %s250, %s251
      %p265 = scmp.eq.s32.totalorder %s25, 3
      %p266 = por %p264, %p265
      %p268 = scmp.ne.s32.totalorder %s251, %s267
      %p269 = scmp.eq.s32.totalorder %s25, 0
      %p270 = por %p268, %p269
      %p271 = scmp.le.s32.totalorder 1, %s19
      %p272 = scmp.lt.s32.totalorder %s19, 5
      %p273 = pnand %p271, %p272
      %p274 = pneg %p273
      // Predicated region
      $region9: #{clsnet_forward.1} parent=5 // pred_check
        _
      $region10: #{clsnet_forward.1} parent=5 // pred_check_branch
        %276 = sbr.rel (%p273) target = $region12
      $region11: #{clsnet_forward.1} parent=5 // pred_region
        %s277 = ssub.s32 %s19, 1
        // Predicated region
        $region13: #{clsnet_forward.1} parent=11 // pred_check
          %p278 = pneg %p80
        $region14: #{clsnet_forward.1} parent=11 // pred_check_branch
          %280 = sbr.rel (%p278) target = $region16
        $region15: #{clsnet_forward.1} parent=11 // pred_region
          _
        $region16: #{clsnet_forward.1} parent=11 // pred_fallthru
          _
        // Predicated region
        $region17: #{clsnet_forward.1} parent=11 // pred_check
          %p281 = pneg %p101
        $region18: #{clsnet_forward.1} parent=11 // pred_check_branch
          %283 = sbr.rel (%p281) target = $region20
        $region19: #{clsnet_forward.1} parent=11 // pred_region
          _
        $region20: #{clsnet_forward.1} parent=11 // pred_fallthru
          _
        // Predicated region
        $region21: #{clsnet_forward.1} parent=11 // pred_check
          %p284 = pneg %p122
        $region22: #{clsnet_forward.1} parent=11 // pred_check_branch
          %286 = sbr.rel (%p284) target = $region24
        $region23: #{clsnet_forward.1} parent=11 // pred_region
          _
        $region24: #{clsnet_forward.1} parent=11 // pred_fallthru
          _
        // Predicated region
        $region25: #{clsnet_forward.1} parent=11 // pred_check
          %p287 = pneg %p143
        $region26: #{clsnet_forward.1} parent=11 // pred_check_branch
          %289 = sbr.rel (%p287) target = $region28
        $region27: #{clsnet_forward.1} parent=11 // pred_region
          _
        $region28: #{clsnet_forward.1} parent=11 // pred_fallthru
          _
        // Predicated region
        $region29: #{clsnet_forward.1} parent=11 // pred_check
          %p290 = pneg %p164
        $region30: #{clsnet_forward.1} parent=11 // pred_check_branch
          %292 = sbr.rel (%p290) target = $region32
        $region31: #{clsnet_forward.1} parent=11 // pred_region
          _
        $region32: #{clsnet_forward.1} parent=11 // pred_fallthru
          _
        // Predicated region
        $region33: #{clsnet_forward.1} parent=11 // pred_check
          %p293 = pneg %p211
        $region34: #{clsnet_forward.1} parent=11 // pred_check_branch
          %295 = sbr.rel (%p293) target = $region36
        $region35: #{clsnet_forward.1} parent=11 // pred_region
          _
        $region36: #{clsnet_forward.1} parent=11 // pred_fallthru
          _
      $region12: #{clsnet_forward.1} parent=5 // pred_fallthru
        _
      %p296 = scmp.lt.s32.totalorder %s19, 4
      // Predicated region
      $region37: #{clsnet_forward.1} parent=5 // pred_check
        %p297 = pneg %p296
      $region38: #{clsnet_forward.1} parent=5 // pred_check_branch
        %299 = sbr.rel (%p297) target = $region40
      $region39: #{clsnet_forward.1} parent=5 // pred_region
        // Predicated region
        $region41: #{clsnet_forward.1} parent=39 // pred_check
          %p300 = pneg %p53
        $region42: #{clsnet_forward.1} parent=39 // pred_check_branch
          %302 = sbr.rel (%p300) target = $region44
        $region43: #{clsnet_forward.1} parent=39 // pred_region
          %p303 = scmp.lt.s32.totalorder %s26, 1
          %s304 = scalar_select %p303, %s26, 1
          %p305 = scmp.lt.s32.totalorder %s27, 1
          %s306 = scalar_select %p305, %s27, 1
          %s307 = smul.addr %s306, 2
          %s308 = smul.addr %s304, 4
          %s309 = sadd.s32 %s307, %s308
          %s310 = smul.addr %s309, 2
          %s311 = scalar_lea.vmem %s0, %s310
        $region44: #{clsnet_forward.1} parent=39 // pred_fallthru
          _
        // Predicated region
        $region45: #{clsnet_forward.1} parent=39 // pred_check
          %p312 = pneg %p184
        $region46: #{clsnet_forward.1} parent=39 // pred_check_branch
          %314 = sbr.rel (%p312) target = $region48
        $region47: #{clsnet_forward.1} parent=39 // pred_region
          %p315 = scmp.lt.s32.totalorder %s26, 1
          %s316 = scalar_select %p315, %s26, 1
          %s317 = smul.addr %s316, 16
          %s318 = smul.addr %s317, 8
          %s319 = scalar_lea.vmem %s6, %s318
        $region48: #{clsnet_forward.1} parent=39 // pred_fallthru
          _
      $region40: #{clsnet_forward.1} parent=5 // pred_fallthru
        _
      %p320 = scmp.le.s32.totalorder 1, %s19
      %p321 = scmp.lt.s32.totalorder %s19, 5
      %p322 = pnand %p320, %p321
      %p323 = pneg %p322
      // Predicated region
      $region49: #{clsnet_forward.1} parent=5 // pred_check
        _
      $region50: #{clsnet_forward.1} parent=5 // pred_check_branch
        %325 = sbr.rel (%p322) target = $region52
      $region51: #{clsnet_forward.1} parent=5 // pred_region
        %s326 = ssub.s32 %s19, 1
        %p327 = scmp.lt.s32.totalorder %s28, 1
        %s328 = scalar_select %p327, %s28, 1
        %p329 = scmp.lt.s32.totalorder %s29, 1
        %s330 = scalar_select %p329, %s29, 1
        %s331 = smul.addr %s330, 2
        %s332 = smul.addr %s328, 4
        %s333 = sadd.s32 %s331, %s332
        %s334 = smul.addr %s333, 2
        %s335 = scalar_lea.vmem %s0, %s334
        %p336 = pneg %p59
        %p337 = pneg %p56
        %p338 = pneg %p80
        %p339 = pneg %p77
        %p340 = pneg %p101
        %p341 = pneg %p98
        %p342 = pneg %p122
        %p343 = pneg %p119
        %p344 = pneg %p143
        %p345 = pneg %p140
        %p346 = pneg %p164
        %p347 = pneg %p161
        %p348 = scmp.lt.s32.totalorder %s28, 1
        %s349 = scalar_select %p348, %s28, 1
        %s350 = smul.addr %s349, 16
        %s351 = smul.addr %s350, 8
        %s352 = scalar_lea.vmem %s6, %s351
        %p353 = pneg %p190
        %p354 = pneg %p187
        %p355 = pneg %p211
        %p356 = pneg %p208
        %p357 = pneg %p237
        %p358 = pneg %p234
        %p359 = scmp.lt.s32.totalorder %s28, 1
        %s360 = scalar_select %p359, %s28, 1
        %s361 = smul.addr %s360, 16
        %s362 = smul.addr %s361, 8
        %s363 = scalar_lea.vmem %s8, %s362
        %p364 = pneg %p263
        %p365 = pneg %p260
        %s366 = sand.u32 %s250, 1
        %s367 = scalar_lea.sflag [#allocation4], %s366
        %s368 = sand.u32 %s250, 1
        %s369 = smul.addr %s368, 128
        %s370 = scalar_lea.vmem [#allocation3], %s369
        %p371 = scmp.lt.s32.totalorder %s28, 1
        %s372 = scalar_select %p371, %s28, 1
        %p373 = scmp.lt.s32.totalorder %s29, 1
        %s374 = scalar_select %p373, %s29, 1
        %s375 = smul.addr %s374, 2
        %s376 = smul.addr %s372, 4
        %s377 = sadd.s32 %s375, %s376
        %s378 = smul.addr %s377, 2
        %s379 = scalar_lea.vmem %s0, %s378
        %p380 = scmp.lt.s32.totalorder %s28, 1
        %s381 = scalar_select %p380, %s28, 1
        %s382 = smul.addr %s381, 16
        %s383 = smul.addr %s382, 8
        %s384 = scalar_lea.vmem %s6, %s383
        %p385 = scmp.lt.s32.totalorder %s28, 1
        %s386 = scalar_select %p385, %s28, 1
        %s387 = smul.addr %s386, 16
        %s388 = smul.addr %s387, 8
        %s389 = scalar_lea.vmem %s8, %s388
        %p391 = scmp.eq.s32.totalorder %s29, 0
        // Predicated region
        $region53: #{clsnet_forward.1} parent=51 // pred_check
          %p392 = pneg %p391
        $region54: #{clsnet_forward.1} parent=51 // pred_check_branch
          %394 = sbr.rel (%p392) target = $region56
        $region55: #{clsnet_forward.1} parent=51 // pred_region
          %vm395 = vcmask 7168
          %396 = vst.msk [vmem:[#allocation2] sm:$0xff] %vm395, 0.0
          %397 = vst.msk [vmem:[#allocation2 + $0x8] sm:$0xff] %vm395, 0.0
          %398 = vst.msk [vmem:[#allocation2 + $0x10] sm:$0xff] %vm395, 0.0
          %399 = vst.msk [vmem:[#allocation2 + $0x18] sm:$0xff] %vm395, 0.0
          %400 = vst.msk [vmem:[#allocation2 + $0x20] sm:$0xff] %vm395, 0.0
          %401 = vst.msk [vmem:[#allocation2 + $0x28] sm:$0xff] %vm395, 0.0
          %402 = vst.msk [vmem:[#allocation2 + $0x30] sm:$0xff] %vm395, 0.0
          %403 = vst.msk [vmem:[#allocation2 + $0x38] sm:$0xff] %vm395, 0.0
          %404 = vst.msk [vmem:[#allocation2 + $0x40] sm:$0xff] %vm395, 0.0
          %405 = vst.msk [vmem:[#allocation2 + $0x48] sm:$0xff] %vm395, 0.0
          %406 = vst.msk [vmem:[#allocation2 + $0x50] sm:$0xff] %vm395, 0.0
          %407 = vst.msk [vmem:[#allocation2 + $0x58] sm:$0xff] %vm395, 0.0
          %408 = vst.msk [vmem:[#allocation2 + $0x60] sm:$0xff] %vm395, 0.0
          %409 = vst.msk [vmem:[#allocation2 + $0x68] sm:$0xff] %vm395, 0.0
          %410 = vst.msk [vmem:[#allocation2 + $0x70] sm:$0xff] %vm395, 0.0
          %411 = vst.msk [vmem:[#allocation2 + $0x78] sm:$0xff] %vm395, 0.0
        $region56: #{clsnet_forward.1} parent=51 // pred_fallthru
          _
        %v412 = vld [vmem:[%s379] sm:$0xf]
        %v413 = vld [vmem:[%s2] sm:$0xf]
        %v414 = vld [vmem:[%s2 + $0x4] sm:$0xf]
        %v415 = vld [vmem:[%s2 + $0x8] sm:$0xf]
        %v416 = vld [vmem:[%s2 + $0xc] sm:$0xf]
        %v417 = vld [vmem:[%s2 + $0x10] sm:$0xf]
        %v418 = vld [vmem:[%s2 + $0x14] sm:$0xf]
        %v419 = vld [vmem:[%s2 + $0x18] sm:$0xf]
        %v420 = vld [vmem:[%s2 + $0x1c] sm:$0xf]
        %v421 = vld [vmem:[%s2 + $0x20] sm:$0xf]
        %v422 = vld [vmem:[%s2 + $0x24] sm:$0xf]
        %v423 = vld [vmem:[%s2 + $0x28] sm:$0xf]
        %v424 = vld [vmem:[%s2 + $0x2c] sm:$0xf]
        %v425 = vld [vmem:[%s2 + $0x30] sm:$0xf]
        %v426 = vld [vmem:[%s2 + $0x34] sm:$0xf]
        %v427 = vld [vmem:[%s2 + $0x38] sm:$0xf]
        %v428 = vld [vmem:[%s2 + $0x3c] sm:$0xf]
        %s429 = scalar_lea.vmem %s2, 64
        %v430 = vld [vmem:[%s429] sm:$0xf]
        %v431 = vld [vmem:[%s429 + $0x4] sm:$0xf]
        %v432 = vld [vmem:[%s429 + $0x8] sm:$0xf]
        %v433 = vld [vmem:[%s429 + $0xc] sm:$0xf]
        %v434 = vld [vmem:[%s429 + $0x10] sm:$0xf]
        %v435 = vld [vmem:[%s429 + $0x14] sm:$0xf]
        %v436 = vld [vmem:[%s429 + $0x18] sm:$0xf]
        %v437 = vld [vmem:[%s429 + $0x1c] sm:$0xf]
        %v438 = vld [vmem:[%s429 + $0x20] sm:$0xf]
        %v439 = vld [vmem:[%s429 + $0x24] sm:$0xf]
        %v440 = vld [vmem:[%s429 + $0x28] sm:$0xf]
        %v441 = vld [vmem:[%s429 + $0x2c] sm:$0xf]
        %v442 = vld [vmem:[%s429 + $0x30] sm:$0xf]
        %v443 = vld [vmem:[%s429 + $0x34] sm:$0xf]
        %v444 = vld [vmem:[%s429 + $0x38] sm:$0xf]
        %v445 = vld [vmem:[%s429 + $0x3c] sm:$0xf]
        %v462 = vunpack.c.l.b16 %v430
        %v463 = vunpack.c.l.b16 %v431
        %v464 = vunpack.c.l.b16 %v432
        %v465 = vunpack.c.l.b16 %v433
        %v466 = vunpack.c.l.b16 %v434
        %v467 = vunpack.c.l.b16 %v435
        %v468 = vunpack.c.l.b16 %v436
        %v469 = vunpack.c.l.b16 %v437
        %v470 = vunpack.c.l.b16 %v438
        %v471 = vunpack.c.l.b16 %v439
        %v472 = vunpack.c.l.b16 %v440
        %v473 = vunpack.c.l.b16 %v441
        %v474 = vunpack.c.l.b16 %v442
        %v475 = vunpack.c.l.b16 %v443
        %v476 = vunpack.c.l.b16 %v444
        %v477 = vunpack.c.l.b16 %v445
        %v478 = vpack.c.b16 %v463, %v462
        %v479 = vpack.c.b16 %v465, %v464
        %v480 = vpack.c.b16 %v467, %v466
        %v481 = vpack.c.b16 %v469, %v468
        %v482 = vpack.c.b16 %v471, %v470
        %v483 = vpack.c.b16 %v473, %v472
        %v484 = vpack.c.b16 %v475, %v474
        %v485 = vpack.c.b16 %v477, %v476
        %v488 = vunpack.c.l.s4 1983009808
        %v489 = vunpack.c.0.s8 %v488
        %v490 = vlaneseq
        %v491 = vshrl.u32 %v490, 7
        %v492 = vsub.s32 %v489, %v491
        %v493 = vrot.slane %v412, %v492
        %v494 = vcombine.high %v493, %v493
        %495 = vrot.lane.b32.xlu0 %v493, 127
        %v496 = vpop.permute.xlu0 %495
        %497 = vrot.lane.b32.xlu0 %v494, 127
        %v498 = vpop.permute.xlu0 %497
        %vm499 = vcmask 1039360
        %v500 = vsel %vm499, %v496, %v498
        %vm501 = vcmask 31744
        %v503 = vsel %vm501, %v478, 0
        %v506 = vsel %vm501, %v479, 0
        %v509 = vsel %vm501, %v480, 0
        %v512 = vsel %vm501, %v481, 0
        %v515 = vsel %vm501, %v482, 0
        %v518 = vsel %vm501, %v483, 0
        %v521 = vsel %vm501, %v484, 0
        %v524 = vsel %vm501, %v485, 0
        %vm526 = vcmask 1041408
        %v528 = vsel %vm526, %v500, 0
        %v531 = vsel %vm526, %v498, 0
        %533 = vmatprep.subr.bf16.mxu0 %v531
        %534 = vmatpush1.bf16.msra.mxu0 %v528
        %535 = vmatprep.subr.bf16.mxu0 0
        %536 = vmatpush1.bf16.msra.mxu0 0
        %537 = vmatprep.subr.bf16.mxu0 0
        %538 = vmatpush1.bf16.msra.mxu0 0
        %539 = vmatprep.subr.bf16.mxu0 0
        %540 = vmatpush1.bf16.msra.mxu0 0
        %541 = vmatprep.subr.bf16.mxu0 0
        %542 = vmatpush1.bf16.msra.mxu0 0
        %543 = vmatprep.subr.bf16.mxu0 0
        %544 = vmatpush1.bf16.msra.mxu0 0
        %545 = vmatprep.subr.bf16.mxu0 0
        %546 = vmatpush1.bf16.msra.mxu0 0
        %547 = vmatprep.subr.bf16.mxu0 0
        %548 = vmatpush1.bf16.msra.mxu0 0
        %549 = vmatprep.subr.bf16.mxu0 0
        %550 = vmatpush1.bf16.msra.mxu0 0
        %551 = vmatprep.subr.bf16.mxu0 0
        %552 = vmatpush1.bf16.msra.mxu0 0
        %553 = vmatprep.subr.bf16.mxu0 0
        %554 = vmatpush1.bf16.msra.mxu0 0
        %555 = vmatprep.subr.bf16.mxu0 0
        %556 = vmatpush1.bf16.msra.mxu0 0
        %557 = vmatprep.subr.bf16.mxu0 0
        %558 = vmatpush1.bf16.msra.mxu0 0
        %559 = vmatprep.subr.bf16.mxu0 0
        %560 = vmatpush1.bf16.msra.mxu0 0
        %561 = vmatprep.subr.bf16.mxu0 0
        %562 = vmatpush1.bf16.msra.mxu0 0
        %563 = vmatprep.subr.bf16.mxu0 0
        %564 = vmatpush1.bf16.msra.mxu0 0
        %565 = vmatprep.mubr.bf16.mxu0 0
        %566 = vmatmul.mubr.bf16.gmra.mrb[0].mxu0 %v503
        %v567 = vpop.f32.mrb[0].mxu0
        %v568 = vadd.f32 0.0, %v567
        %v569 = vpop.f32.mrb[0].mxu0
        %v570 = vadd.f32 0.0, %v569
        %v571 = vpop.f32.mrb[0].mxu0
        %v572 = vadd.f32 0.0, %v571
        %v573 = vpop.f32.mrb[0].mxu0
        %v574 = vadd.f32 0.0, %v573
        %575 = vmatprep.mubr.bf16.mxu0 0
        %576 = vmatmul.mubr.bf16.gmra.mrb[0].mxu0 %v506
        %v577 = vpop.f32.mrb[0].mxu0
        %v578 = vadd.f32 0.0, %v577
        %v579 = vpop.f32.mrb[0].mxu0
        %v580 = vadd.f32 0.0, %v579
        %v581 = vpop.f32.mrb[0].mxu0
        %v582 = vadd.f32 0.0, %v581
        %v583 = vpop.f32.mrb[0].mxu0
        %v584 = vadd.f32 0.0, %v583
        %585 = vmatprep.mubr.bf16.mxu0 0
        %586 = vmatmul.mubr.bf16.gmra.mrb[0].mxu0 %v509
        %v587 = vpop.f32.mrb[0].mxu0
        %v588 = vadd.f32 0.0, %v587
        %v589 = vpop.f32.mrb[0].mxu0
        %v590 = vadd.f32 0.0, %v589
        %v591 = vpop.f32.mrb[0].mxu0
        %v592 = vadd.f32 0.0, %v591
        %v593 = vpop.f32.mrb[0].mxu0
        %v594 = vadd.f32 0.0, %v593
        %595 = vmatprep.mubr.bf16.mxu0 0
        %596 = vmatmul.mubr.bf16.gmra.mrb[0].mxu0 %v512
        %v597 = vpop.f32.mrb[0].mxu0
        %v598 = vadd.f32 0.0, %v597
        %v599 = vpop.f32.mrb[0].mxu0
        %v600 = vadd.f32 0.0, %v599
        %v601 = vpop.f32.mrb[0].mxu0
        %v602 = vadd.f32 0.0, %v601
        %v603 = vpop.f32.mrb[0].mxu0
        %v604 = vadd.f32 0.0, %v603
        %605 = vmatprep.mubr.bf16.mxu0 0
        %606 = vmatmul.mubr.bf16.gmra.mrb[0].mxu0 %v515
        %v607 = vpop.f32.mrb[0].mxu0
        %v608 = vadd.f32 0.0, %v607
        %v609 = vpop.f32.mrb[0].mxu0
        %v610 = vadd.f32 0.0, %v609
        %v611 = vpop.f32.mrb[0].mxu0
        %v612 = vadd.f32 0.0, %v611
        %v613 = vpop.f32.mrb[0].mxu0
        %v614 = vadd.f32 0.0, %v613
        %615 = vmatprep.mubr.bf16.mxu0 0
        %616 = vmatmul.mubr.bf16.gmra.mrb[0].mxu0 %v518
        %v617 = vpop.f32.mrb[0].mxu0
        %v618 = vadd.f32 0.0, %v617
        %v619 = vpop.f32.mrb[0].mxu0
        %v620 = vadd.f32 0.0, %v619
        %v621 = vpop.f32.mrb[0].mxu0
        %v622 = vadd.f32 0.0, %v621
        %v623 = vpop.f32.mrb[0].mxu0
        %v624 = vadd.f32 0.0, %v623
        %625 = vmatprep.mubr.bf16.mxu0 0
        %626 = vmatmul.mubr.bf16.gmra.mrb[0].mxu0 %v521
        %v627 = vpop.f32.mrb[0].mxu0
        %v628 = vadd.f32 0.0, %v627
        %v629 = vpop.f32.mrb[0].mxu0
        %v630 = vadd.f32 0.0, %v629
        %v631 = vpop.f32.mrb[0].mxu0
        %v632 = vadd.f32 0.0, %v631
        %v633 = vpop.f32.mrb[0].mxu0
        %v634 = vadd.f32 0.0, %v633
        %635 = vmatprep.mubr.bf16.mxu0 0
        %636 = vmatmul.mubr.bf16.gmra.mrb[0].mxu0 %v524
        %v637 = vpop.f32.mrb[0].mxu0
        %v638 = vadd.f32 0.0, %v637
        %v639 = vpop.f32.mrb[0].mxu0
        %v640 = vadd.f32 0.0, %v639
        %v641 = vpop.f32.mrb[0].mxu0
        %v642 = vadd.f32 0.0, %v641
        %v643 = vpop.f32.mrb[0].mxu0
        %v644 = vadd.f32 0.0, %v643
        %645 = vdwg.mxu0
        %v662 = vunpack.c.l.b16 %v413
        %v663 = vunpack.c.l.b16 %v414
        %v664 = vunpack.c.l.b16 %v415
        %v665 = vunpack.c.l.b16 %v416
        %v666 = vunpack.c.l.b16 %v417
        %v667 = vunpack.c.l.b16 %v418
        %v668 = vunpack.c.l.b16 %v419
        %v669 = vunpack.c.l.b16 %v420
        %v670 = vunpack.c.l.b16 %v421
        %v671 = vunpack.c.l.b16 %v422
        %v672 = vunpack.c.l.b16 %v423
        %v673 = vunpack.c.l.b16 %v424
        %v674 = vunpack.c.l.b16 %v425
        %v675 = vunpack.c.l.b16 %v426
        %v676 = vunpack.c.l.b16 %v427
        %v677 = vunpack.c.l.b16 %v428
        %v678 = vpack.c.b16 %v663, %v662
        %v679 = vpack.c.b16 %v665, %v664
        %v680 = vpack.c.b16 %v667, %v666
        %v681 = vpack.c.b16 %v669, %v668
        %v682 = vpack.c.b16 %v671, %v670
        %v683 = vpack.c.b16 %v673, %v672
        %v684 = vpack.c.b16 %v675, %v674
        %v685 = vpack.c.b16 %v677, %v676
        %v687 = vsel %vm501, %v678, 0
        %v690 = vsel %vm501, %v679, 0
        %v693 = vsel %vm501, %v680, 0
        %v696 = vsel %vm501, %v681, 0
        %v699 = vsel %vm501, %v682, 0
        %v702 = vsel %vm501, %v683, 0
        %v705 = vsel %vm501, %v684, 0
        %v708 = vsel %vm501, %v685, 0
        %v711 = vsel %vm526, %v493, 0
        %v714 = vsel %vm526, %v494, 0
        %716 = vmatprep.subr.bf16.mxu0 %v714
        %717 = vmatpush1.bf16.msra.mxu0 %v711
        %718 = vmatprep.subr.bf16.mxu0 0
        %719 = vmatpush1.bf16.msra.mxu0 0
        %720 = vmatprep.subr.bf16.mxu0 0
        %721 = vmatpush1.bf16.msra.mxu0 0
        %722 = vmatprep.subr.bf16.mxu0 0
        %723 = vmatpush1.bf16.msra.mxu0 0
        %724 = vmatprep.subr.bf16.mxu0 0
        %725 = vmatpush1.bf16.msra.mxu0 0
        %726 = vmatprep.subr.bf16.mxu0 0
        %727 = vmatpush1.bf16.msra.mxu0 0
        %728 = vmatprep.subr.bf16.mxu0 0
        %729 = vmatpush1.bf16.msra.mxu0 0
        %730 = vmatprep.subr.bf16.mxu0 0
        %731 = vmatpush1.bf16.msra.mxu0 0
        %732 = vmatprep.subr.bf16.mxu0 0
        %733 = vmatpush1.bf16.msra.mxu0 0
        %734 = vmatprep.subr.bf16.mxu0 0
        %735 = vmatpush1.bf16.msra.mxu0 0
        %736 = vmatprep.subr.bf16.mxu0 0
        %737 = vmatpush1.bf16.msra.mxu0 0
        %738 = vmatprep.subr.bf16.mxu0 0
        %739 = vmatpush1.bf16.msra.mxu0 0
        %740 = vmatprep.subr.bf16.mxu0 0
        %741 = vmatpush1.bf16.msra.mxu0 0
        %742 = vmatprep.subr.bf16.mxu0 0
        %743 = vmatpush1.bf16.msra.mxu0 0
        %744 = vmatprep.subr.bf16.mxu0 0
        %745 = vmatpush1.bf16.msra.mxu0 0
        %746 = vmatprep.subr.bf16.mxu0 0
        %747 = vmatpush1.bf16.msra.mxu0 0
        %748 = vmatprep.mubr.bf16.mxu0 0
        %749 = vmatmul.mubr.bf16.gmra.mrb[0].mxu0 %v687
        %v750 = vpop.f32.mrb[0].mxu0
        %v751 = vadd.f32 %v568, %v750
        %v752 = vpop.f32.mrb[0].mxu0
        %v753 = vadd.f32 %v570, %v752
        %v754 = vpop.f32.mrb[0].mxu0
        %v755 = vadd.f32 %v572, %v754
        %v756 = vpop.f32.mrb[0].mxu0
        %v757 = vadd.f32 %v574, %v756
        %758 = vmatprep.mubr.bf16.mxu0 0
        %759 = vmatmul.mubr.bf16.gmra.mrb[0].mxu0 %v690
        %v760 = vpop.f32.mrb[0].mxu0
        %v761 = vadd.f32 %v578, %v760
        %v762 = vpop.f32.mrb[0].mxu0
        %v763 = vadd.f32 %v580, %v762
        %v764 = vpop.f32.mrb[0].mxu0
        %v765 = vadd.f32 %v582, %v764
        %v766 = vpop.f32.mrb[0].mxu0
        %v767 = vadd.f32 %v584, %v766
        %768 = vmatprep.mubr.bf16.mxu0 0
        %769 = vmatmul.mubr.bf16.gmra.mrb[0].mxu0 %v693
        %v770 = vpop.f32.mrb[0].mxu0
        %v771 = vadd.f32 %v588, %v770
        %v772 = vpop.f32.mrb[0].mxu0
        %v773 = vadd.f32 %v590, %v772
        %v774 = vpop.f32.mrb[0].mxu0
        %v775 = vadd.f32 %v592, %v774
        %v776 = vpop.f32.mrb[0].mxu0
        %v777 = vadd.f32 %v594, %v776
        %778 = vmatprep.mubr.bf16.mxu0 0
        %779 = vmatmul.mubr.bf16.gmra.mrb[0].mxu0 %v696
        %v780 = vpop.f32.mrb[0].mxu0
        %v781 = vadd.f32 %v598, %v780
        %v782 = vpop.f32.mrb[0].mxu0
        %v783 = vadd.f32 %v600, %v782
        %v784 = vpop.f32.mrb[0].mxu0
        %v785 = vadd.f32 %v602, %v784
        %v786 = vpop.f32.mrb[0].mxu0
        %v787 = vadd.f32 %v604, %v786
        %788 = vmatprep.mubr.bf16.mxu0 0
        %789 = vmatmul.mubr.bf16.gmra.mrb[0].mxu0 %v699
        %v790 = vpop.f32.mrb[0].mxu0
        %v791 = vadd.f32 %v608, %v790
        %v792 = vpop.f32.mrb[0].mxu0
        %v793 = vadd.f32 %v610, %v792
        %v794 = vpop.f32.mrb[0].mxu0
        %v795 = vadd.f32 %v612, %v794
        %v796 = vpop.f32.mrb[0].mxu0
        %v797 = vadd.f32 %v614, %v796
        %798 = vmatprep.mubr.bf16.mxu0 0
        %799 = vmatmul.mubr.bf16.gmra.mrb[0].mxu0 %v702
        %v800 = vpop.f32.mrb[0].mxu0
        %v801 = vadd.f32 %v618, %v800
        %v802 = vpop.f32.mrb[0].mxu0
        %v803 = vadd.f32 %v620, %v802
        %v804 = vpop.f32.mrb[0].mxu0
        %v805 = vadd.f32 %v622, %v804
        %v806 = vpop.f32.mrb[0].mxu0
        %v807 = vadd.f32 %v624, %v806
        %808 = vmatprep.mubr.bf16.mxu0 0
        %809 = vmatmul.mubr.bf16.gmra.mrb[0].mxu0 %v705
        %v810 = vpop.f32.mrb[0].mxu0
        %v811 = vadd.f32 %v628, %v810
        %v812 = vpop.f32.mrb[0].mxu0
        %v813 = vadd.f32 %v630, %v812
        %v814 = vpop.f32.mrb[0].mxu0
        %v815 = vadd.f32 %v632, %v814
        %v816 = vpop.f32.mrb[0].mxu0
        %v817 = vadd.f32 %v634, %v816
        %818 = vmatprep.mubr.bf16.mxu0 0
        %819 = vmatmul.mubr.bf16.gmra.mrb[0].mxu0 %v708
        %v820 = vpop.f32.mrb[0].mxu0
        %v821 = vadd.f32 %v638, %v820
        %v822 = vpop.f32.mrb[0].mxu0
        %v823 = vadd.f32 %v640, %v822
        %v824 = vpop.f32.mrb[0].mxu0
        %v825 = vadd.f32 %v642, %v824
        %v826 = vpop.f32.mrb[0].mxu0
        %v827 = vadd.f32 %v644, %v826
        %828 = vdwg.mxu0
        %v829 = vld [vmem:[%s379] sm:$0xf]
        %s830 = scalar_lea.vmem %s2, 128
        %v831 = vld [vmem:[%s830] sm:$0xf]
        %v832 = vld [vmem:[%s830 + $0x4] sm:$0xf]
        %v833 = vld [vmem:[%s830 + $0x8] sm:$0xf]
        %v834 = vld [vmem:[%s830 + $0xc] sm:$0xf]
        %v835 = vld [vmem:[%s830 + $0x10] sm:$0xf]
        %v836 = vld [vmem:[%s830 + $0x14] sm:$0xf]
        %v837 = vld [vmem:[%s830 + $0x18] sm:$0xf]
        %v838 = vld [vmem:[%s830 + $0x1c] sm:$0xf]
        %v839 = vld [vmem:[%s830 + $0x20] sm:$0xf]
        %v840 = vld [vmem:[%s830 + $0x24] sm:$0xf]
        %v841 = vld [vmem:[%s830 + $0x28] sm:$0xf]
        %v842 = vld [vmem:[%s830 + $0x2c] sm:$0xf]
        %v843 = vld [vmem:[%s830 + $0x30] sm:$0xf]
        %v844 = vld [vmem:[%s830 + $0x34] sm:$0xf]
        %v845 = vld [vmem:[%s830 + $0x38] sm:$0xf]
        %v846 = vld [vmem:[%s830 + $0x3c] sm:$0xf]
        %v863 = vunpack.c.l.b16 %v831
        %v864 = vunpack.c.l.b16 %v832
        %v865 = vunpack.c.l.b16 %v833
        %v866 = vunpack.c.l.b16 %v834
        %v867 = vunpack.c.l.b16 %v835
        %v868 = vunpack.c.l.b16 %v836
        %v869 = vunpack.c.l.b16 %v837
        %v870 = vunpack.c.l.b16 %v838
        %v871 = vunpack.c.l.b16 %v839
        %v872 = vunpack.c.l.b16 %v840
        %v873 = vunpack.c.l.b16 %v841
        %v874 = vunpack.c.l.b16 %v842
        %v875 = vunpack.c.l.b16 %v843
        %v876 = vunpack.c.l.b16 %v844
        %v877 = vunpack.c.l.b16 %v845
        %v878 = vunpack.c.l.b16 %v846
        %v879 = vpack.c.b16 %v864, %v863
        %v880 = vpack.c.b16 %v866, %v865
        %v881 = vpack.c.b16 %v868, %v867
        %v882 = vpack.c.b16 %v870, %v869
        %v883 = vpack.c.b16 %v872, %v871
        %v884 = vpack.c.b16 %v874, %v873
        %v885 = vpack.c.b16 %v876, %v875
        %v886 = vpack.c.b16 %v878, %v877
        %v889 = vunpack.c.l.s4 1983009808
        %v890 = vunpack.c.0.s8 %v889
        %v891 = vlaneseq
        %v892 = vshrl.u32 %v891, 7
        %v893 = vsub.s32 %v890, %v892
        %v894 = vrot.slane %v829, %v893
        %v895 = vcombine.high %v894, %v894
        %896 = vrot.lane.b32.xlu0 %v894, 126
        %v897 = vpop.permute.xlu0 %896
        %898 = vrot.lane.b32.xlu0 %v895, 126
        %v899 = vpop.permute.xlu0 %898
        %vm900 = vcmask 1031168
        %v901 = vsel %vm900, %v897, %v899
        %v903 = vsel %vm501, %v879, 0
        %v906 = vsel %vm501, %v880, 0
        %v909 = vsel %vm501, %v881, 0
        %v912 = vsel %vm501, %v882, 0
        %v915 = vsel %vm501, %v883, 0
        %v918 = vsel %vm501, %v884, 0
        %v921 = vsel %vm501, %v885, 0
        %v924 = vsel %vm501, %v886, 0
        %v927 = vsel %vm526, %v901, 0
        %v930 = vsel %vm526, %v899, 0
        %932 = vmatprep.subr.bf16.mxu0 %v930
        %933 = vmatpush1.bf16.msra.mxu0 %v927
        %934 = vmatprep.subr.bf16.mxu0 0
        %935 = vmatpush1.bf16.msra.mxu0 0
        %936 = vmatprep.subr.bf16.mxu0 0
        %937 = vmatpush1.bf16.msra.mxu0 0
        %938 = vmatprep.subr.bf16.mxu0 0
        %939 = vmatpush1.bf16.msra.mxu0 0
        %940 = vmatprep.subr.bf16.mxu0 0
        %941 = vmatpush1.bf16.msra.mxu0 0
        %942 = vmatprep.subr.bf16.mxu0 0
        %943 = vmatpush1.bf16.msra.mxu0 0
        %944 = vmatprep.subr.bf16.mxu0 0
        %945 = vmatpush1.bf16.msra.mxu0 0
        %946 = vmatprep.subr.bf16.mxu0 0
        %947 = vmatpush1.bf16.msra.mxu0 0
        %948 = vmatprep.subr.bf16.mxu0 0
        %949 = vmatpush1.bf16.msra.mxu0 0
        %950 = vmatprep.subr.bf16.mxu0 0
        %951 = vmatpush1.bf16.msra.mxu0 0
        %952 = vmatprep.subr.bf16.mxu0 0
        %953 = vmatpush1.bf16.msra.mxu0 0
        %954 = vmatprep.subr.bf16.mxu0 0
        %955 = vmatpush1.bf16.msra.mxu0 0
        %956 = vmatprep.subr.bf16.mxu0 0
        %957 = vmatpush1.bf16.msra.mxu0 0
        %958 = vmatprep.subr.bf16.mxu0 0
        %959 = vmatpush1.bf16.msra.mxu0 0
        %960 = vmatprep.subr.bf16.mxu0 0
        %961 = vmatpush1.bf16.msra.mxu0 0
        %962 = vmatprep.subr.bf16.mxu0 0
        %963 = vmatpush1.bf16.msra.mxu0 0
        %964 = vmatprep.mubr.bf16.mxu0 0
        %965 = vmatmul.mubr.bf16.gmra.mrb[0].mxu0 %v903
        %v966 = vpop.f32.mrb[0].mxu0
        %v967 = vadd.f32 0.0, %v966
        %v968 = vpop.f32.mrb[0].mxu0
        %v969 = vadd.f32 0.0, %v968
        %v970 = vpop.f32.mrb[0].mxu0
        %v971 = vadd.f32 0.0, %v970
        %v972 = vpop.f32.mrb[0].mxu0
        %v973 = vadd.f32 0.0, %v972
        %974 = vmatprep.mubr.bf16.mxu0 0
        %975 = vmatmul.mubr.bf16.gmra.mrb[0].mxu0 %v906
        %v976 = vpop.f32.mrb[0].mxu0
        %v977 = vadd.f32 0.0, %v976
        %v978 = vpop.f32.mrb[0].mxu0
        %v979 = vadd.f32 0.0, %v978
        %v980 = vpop.f32.mrb[0].mxu0
        %v981 = vadd.f32 0.0, %v980
        %v982 = vpop.f32.mrb[0].mxu0
        %v983 = vadd.f32 0.0, %v982
        %984 = vmatprep.mubr.bf16.mxu0 0
        %985 = vmatmul.mubr.bf16.gmra.mrb[0].mxu0 %v909
        %v986 = vpop.f32.mrb[0].mxu0
        %v987 = vadd.f32 0.0, %v986
        %v988 = vpop.f32.mrb[0].mxu0
        %v989 = vadd.f32 0.0, %v988
        %v990 = vpop.f32.mrb[0].mxu0
        %v991 = vadd.f32 0.0, %v990
        %v992 = vpop.f32.mrb[0].mxu0
        %v993 = vadd.f32 0.0, %v992
        %994 = vmatprep.mubr.bf16.mxu0 0
        %995 = vmatmul.mubr.bf16.gmra.mrb[0].mxu0 %v912
        %v996 = vpop.f32.mrb[0].mxu0
        %v997 = vadd.f32 0.0, %v996
        %v998 = vpop.f32.mrb[0].mxu0
        %v999 = vadd.f32 0.0, %v998
        %v1000 = vpop.f32.mrb[0].mxu0
        %v1001 = vadd.f32 0.0, %v1000
        %v1002 = vpop.f32.mrb[0].mxu0
        %v1003 = vadd.f32 0.0, %v1002
        %1004 = vmatprep.mubr.bf16.mxu0 0
        %1005 = vmatmul.mubr.bf16.gmra.mrb[0].mxu0 %v915
        %v1006 = vpop.f32.mrb[0].mxu0
        %v1007 = vadd.f32 0.0, %v1006
        %v1008 = vpop.f32.mrb[0].mxu0
        %v1009 = vadd.f32 0.0, %v1008
        %v1010 = vpop.f32.mrb[0].mxu0
        %v1011 = vadd.f32 0.0, %v1010
        %v1012 = vpop.f32.mrb[0].mxu0
        %v1013 = vadd.f32 0.0, %v1012
        %1014 = vmatprep.mubr.bf16.mxu0 0
        %1015 = vmatmul.mubr.bf16.gmra.mrb[0].mxu0 %v918
        %v1016 = vpop.f32.mrb[0].mxu0
        %v1017 = vadd.f32 0.0, %v1016
        %v1018 = vpop.f32.mrb[0].mxu0
        %v1019 = vadd.f32 0.0, %v1018
        %v1020 = vpop.f32.mrb[0].mxu0
        %v1021 = vadd.f32 0.0, %v1020
        %v1022 = vpop.f32.mrb[0].mxu0
        %v1023 = vadd.f32 0.0, %v1022
        %1024 = vmatprep.mubr.bf16.mxu0 0
        %1025 = vmatmul.mubr.bf16.gmra.mrb[0].mxu0 %v921
        %v1026 = vpop.f32.mrb[0].mxu0
        %v1027 = vadd.f32 0.0, %v1026
        %v1028 = vpop.f32.mrb[0].mxu0
        %v1029 = vadd.f32 0.0, %v1028
        %v1030 = vpop.f32.mrb[0].mxu0
        %v1031 = vadd.f32 0.0, %v1030
        %v1032 = vpop.f32.mrb[0].mxu0
        %v1033 = vadd.f32 0.0, %v1032
        %1034 = vmatprep.mubr.bf16.mxu0 0
        %1035 = vmatmul.mubr.bf16.gmra.mrb[0].mxu0 %v924
        %v1036 = vpop.f32.mrb[0].mxu0
        %v1037 = vadd.f32 0.0, %v1036
        %v1038 = vpop.f32.mrb[0].mxu0
        %v1039 = vadd.f32 0.0, %v1038
        %v1040 = vpop.f32.mrb[0].mxu0
        %v1041 = vadd.f32 0.0, %v1040
        %v1042 = vpop.f32.mrb[0].mxu0
        %v1043 = vadd.f32 0.0, %v1042
        %1044 = vdwg.mxu0
        %v1045 = vadd.f32 %v751, %v967
        %v1046 = vadd.f32 %v753, %v969
        %v1047 = vadd.f32 %v755, %v971
        %v1048 = vadd.f32 %v757, %v973
        %v1049 = vadd.f32 %v761, %v977
        %v1050 = vadd.f32 %v763, %v979
        %v1051 = vadd.f32 %v765, %v981
        %v1052 = vadd.f32 %v767, %v983
        %v1053 = vadd.f32 %v771, %v987
        %v1054 = vadd.f32 %v773, %v989
        %v1055 = vadd.f32 %v775, %v991
        %v1056 = vadd.f32 %v777, %v993
        %v1057 = vadd.f32 %v781, %v997
        %v1058 = vadd.f32 %v783, %v999
        %v1059 = vadd.f32 %v785, %v1001
        %v1060 = vadd.f32 %v787, %v1003
        %v1061 = vadd.f32 %v791, %v1007
        %v1062 = vadd.f32 %v793, %v1009
        %v1063 = vadd.f32 %v795, %v1011
        %v1064 = vadd.f32 %v797, %v1013
        %v1065 = vadd.f32 %v801, %v1017
        %v1066 = vadd.f32 %v803, %v1019
        %v1067 = vadd.f32 %v805, %v1021
        %v1068 = vadd.f32 %v807, %v1023
        %v1069 = vadd.f32 %v811, %v1027
        %v1070 = vadd.f32 %v813, %v1029
        %v1071 = vadd.f32 %v815, %v1031
        %v1072 = vadd.f32 %v817, %v1033
        %v1073 = vadd.f32 %v821, %v1037
        %v1074 = vadd.f32 %v823, %v1039
        %v1075 = vadd.f32 %v825, %v1041
        %v1076 = vadd.f32 %v827, %v1043
        %v1077 = vld [vmem:[%s379] sm:$0xf]
        %s1078 = scalar_lea.vmem %s2, 192
        %v1079 = vld [vmem:[%s1078] sm:$0xf]
        %v1080 = vld [vmem:[%s1078 + $0x4] sm:$0xf]
        %v1081 = vld [vmem:[%s1078 + $0x8] sm:$0xf]
        %v1082 = vld [vmem:[%s1078 + $0xc] sm:$0xf]
        %v1083 = vld [vmem:[%s1078 + $0x10] sm:$0xf]
        %v1084 = vld [vmem:[%s1078 + $0x14] sm:$0xf]
        %v1085 = vld [vmem:[%s1078 + $0x18] sm:$0xf]
        %v1086 = vld [vmem:[%s1078 + $0x1c] sm:$0xf]
        %v1087 = vld [vmem:[%s1078 + $0x20] sm:$0xf]
        %v1088 = vld [vmem:[%s1078 + $0x24] sm:$0xf]
        %v1089 = vld [vmem:[%s1078 + $0x28] sm:$0xf]
        %v1090 = vld [vmem:[%s1078 + $0x2c] sm:$0xf]
        %v1091 = vld [vmem:[%s1078 + $0x30] sm:$0xf]
        %v1092 = vld [vmem:[%s1078 + $0x34] sm:$0xf]
        %v1093 = vld [vmem:[%s1078 + $0x38] sm:$0xf]
        %v1094 = vld [vmem:[%s1078 + $0x3c] sm:$0xf]
        %v1111 = vunpack.c.l.b16 %v1079
        %v1112 = vunpack.c.l.b16 %v1080
        %v1113 = vunpack.c.l.b16 %v1081
        %v1114 = vunpack.c.l.b16 %v1082
        %v1115 = vunpack.c.l.b16 %v1083
        %v1116 = vunpack.c.l.b16 %v1084
        %v1117 = vunpack.c.l.b16 %v1085
        %v1118 = vunpack.c.l.b16 %v1086
        %v1119 = vunpack.c.l.b16 %v1087
        %v1120 = vunpack.c.l.b16 %v1088
        %v1121 = vunpack.c.l.b16 %v1089
        %v1122 = vunpack.c.l.b16 %v1090
        %v1123 = vunpack.c.l.b16 %v1091
        %v1124 = vunpack.c.l.b16 %v1092
        %v1125 = vunpack.c.l.b16 %v1093
        %v1126 = vunpack.c.l.b16 %v1094
        %v1127 = vpack.c.b16 %v1112, %v1111
        %v1128 = vpack.c.b16 %v1114, %v1113
        %v1129 = vpack.c.b16 %v1116, %v1115
        %v1130 = vpack.c.b16 %v1118, %v1117
        %v1131 = vpack.c.b16 %v1120, %v1119
        %v1132 = vpack.c.b16 %v1122, %v1121
        %v1133 = vpack.c.b16 %v1124, %v1123
        %v1134 = vpack.c.b16 %v1126, %v1125
        %v1137 = vunpack.c.l.s4 1983009808
        %v1138 = vunpack.c.0.s8 %v1137
        %v1139 = vlaneseq
        %v1140 = vshrl.u32 %v1139, 7
        %v1141 = vsub.s32 %v1138, %v1140
        %v1142 = vrot.slane %v1077, %v1141
        %v1143 = vcombine.high %v1142, %v1142
        %1144 = vrot.lane.b32.xlu0 %v1142, 110
        %v1145 = vpop.permute.xlu0 %1144
        %1146 = vrot.lane.b32.xlu0 %v1143, 110
        %v1147 = vpop.permute.xlu0 %1146
        %vm1148 = vcmask 900096
        %v1149 = vsel %vm1148, %v1145, %v1147
        %v1151 = vsel %vm501, %v1127, 0
        %v1154 = vsel %vm501, %v1128, 0
        %v1157 = vsel %vm501, %v1129, 0
        %v1160 = vsel %vm501, %v1130, 0
        %v1163 = vsel %vm501, %v1131, 0
        %v1166 = vsel %vm501, %v1132, 0
        %v1169 = vsel %vm501, %v1133, 0
        %v1172 = vsel %vm501, %v1134, 0
        %v1175 = vsel %vm526, %v1149, 0
        %v1178 = vsel %vm526, %v1147, 0
        %1180 = vmatprep.subr.bf16.mxu0 %v1178
        %1181 = vmatpush1.bf16.msra.mxu0 %v1175
        %1182 = vmatprep.subr.bf16.mxu0 0
        %1183 = vmatpush1.bf16.msra.mxu0 0
        %1184 = vmatprep.subr.bf16.mxu0 0
        %1185 = vmatpush1.bf16.msra.mxu0 0
        %1186 = vmatprep.subr.bf16.mxu0 0
        %1187 = vmatpush1.bf16.msra.mxu0 0
        %1188 = vmatprep.subr.bf16.mxu0 0
        %1189 = vmatpush1.bf16.msra.mxu0 0
        %1190 = vmatprep.subr.bf16.mxu0 0
        %1191 = vmatpush1.bf16.msra.mxu0 0
        %1192 = vmatprep.subr.bf16.mxu0 0
        %1193 = vmatpush1.bf16.msra.mxu0 0
        %1194 = vmatprep.subr.bf16.mxu0 0
        %1195 = vmatpush1.bf16.msra.mxu0 0
        %1196 = vmatprep.subr.bf16.mxu0 0
        %1197 = vmatpush1.bf16.msra.mxu0 0
        %1198 = vmatprep.subr.bf16.mxu0 0
        %1199 = vmatpush1.bf16.msra.mxu0 0
        %1200 = vmatprep.subr.bf16.mxu0 0
        %1201 = vmatpush1.bf16.msra.mxu0 0
        %1202 = vmatprep.subr.bf16.mxu0 0
        %1203 = vmatpush1.bf16.msra.mxu0 0
        %1204 = vmatprep.subr.bf16.mxu0 0
        %1205 = vmatpush1.bf16.msra.mxu0 0
        %1206 = vmatprep.subr.bf16.mxu0 0
        %1207 = vmatpush1.bf16.msra.mxu0 0
        %1208 = vmatprep.subr.bf16.mxu0 0
        %1209 = vmatpush1.bf16.msra.mxu0 0
        %1210 = vmatprep.subr.bf16.mxu0 0
        %1211 = vmatpush1.bf16.msra.mxu0 0
        %1212 = vmatprep.mubr.bf16.mxu0 0
        %1213 = vmatmul.mubr.bf16.gmra.mrb[0].mxu0 %v1151
        %v1214 = vpop.f32.mrb[0].mxu0
        %v1215 = vadd.f32 0.0, %v1214
        %v1216 = vpop.f32.mrb[0].mxu0
        %v1217 = vadd.f32 0.0, %v1216
        %v1218 = vpop.f32.mrb[0].mxu0
        %v1219 = vadd.f32 0.0, %v1218
        %v1220 = vpop.f32.mrb[0].mxu0
        %v1221 = vadd.f32 0.0, %v1220
        %1222 = vmatprep.mubr.bf16.mxu0 0
        %1223 = vmatmul.mubr.bf16.gmra.mrb[0].mxu0 %v1154
        %v1224 = vpop.f32.mrb[0].mxu0
        %v1225 = vadd.f32 0.0, %v1224
        %v1226 = vpop.f32.mrb[0].mxu0
        %v1227 = vadd.f32 0.0, %v1226
        %v1228 = vpop.f32.mrb[0].mxu0
        %v1229 = vadd.f32 0.0, %v1228
        %v1230 = vpop.f32.mrb[0].mxu0
        %v1231 = vadd.f32 0.0, %v1230
        %1232 = vmatprep.mubr.bf16.mxu0 0
        %1233 = vmatmul.mubr.bf16.gmra.mrb[0].mxu0 %v1157
        %v1234 = vpop.f32.mrb[0].mxu0
        %v1235 = vadd.f32 0.0, %v1234
        %v1236 = vpop.f32.mrb[0].mxu0
        %v1237 = vadd.f32 0.0, %v1236
        %v1238 = vpop.f32.mrb[0].mxu0
        %v1239 = vadd.f32 0.0, %v1238
        %v1240 = vpop.f32.mrb[0].mxu0
        %v1241 = vadd.f32 0.0, %v1240
        %1242 = vmatprep.mubr.bf16.mxu0 0
        %1243 = vmatmul.mubr.bf16.gmra.mrb[0].mxu0 %v1160
        %v1244 = vpop.f32.mrb[0].mxu0
        %v1245 = vadd.f32 0.0, %v1244
        %v1246 = vpop.f32.mrb[0].mxu0
        %v1247 = vadd.f32 0.0, %v1246
        %v1248 = vpop.f32.mrb[0].mxu0
        %v1249 = vadd.f32 0.0, %v1248
        %v1250 = vpop.f32.mrb[0].mxu0
        %v1251 = vadd.f32 0.0, %v1250
        %1252 = vmatprep.mubr.bf16.mxu0 0
        %1253 = vmatmul.mubr.bf16.gmra.mrb[0].mxu0 %v1163
        %v1254 = vpop.f32.mrb[0].mxu0
        %v1255 = vadd.f32 0.0, %v1254
        %v1256 = vpop.f32.mrb[0].mxu0
        %v1257 = vadd.f32 0.0, %v1256
        %v1258 = vpop.f32.mrb[0].mxu0
        %v1259 = vadd.f32 0.0, %v1258
        %v1260 = vpop.f32.mrb[0].mxu0
        %v1261 = vadd.f32 0.0, %v1260
        %1262 = vmatprep.mubr.bf16.mxu0 0
        %1263 = vmatmul.mubr.bf16.gmra.mrb[0].mxu0 %v1166
        %v1264 = vpop.f32.mrb[0].mxu0
        %v1265 = vadd.f32 0.0, %v1264
        %v1266 = vpop.f32.mrb[0].mxu0
        %v1267 = vadd.f32 0.0, %v1266
        %v1268 = vpop.f32.mrb[0].mxu0
        %v1269 = vadd.f32 0.0, %v1268
        %v1270 = vpop.f32.mrb[0].mxu0
        %v1271 = vadd.f32 0.0, %v1270
        %1272 = vmatprep.mubr.bf16.mxu0 0
        %1273 = vmatmul.mubr.bf16.gmra.mrb[0].mxu0 %v1169
        %v1274 = vpop.f32.mrb[0].mxu0
        %v1275 = vadd.f32 0.0, %v1274
        %v1276 = vpop.f32.mrb[0].mxu0
        %v1277 = vadd.f32 0.0, %v1276
        %v1278 = vpop.f32.mrb[0].mxu0
        %v1279 = vadd.f32 0.0, %v1278
        %v1280 = vpop.f32.mrb[0].mxu0
        %v1281 = vadd.f32 0.0, %v1280
        %1282 = vmatprep.mubr.bf16.mxu0 0
        %1283 = vmatmul.mubr.bf16.gmra.mrb[0].mxu0 %v1172
        %v1284 = vpop.f32.mrb[0].mxu0
        %v1285 = vadd.f32 0.0, %v1284
        %v1286 = vpop.f32.mrb[0].mxu0
        %v1287 = vadd.f32 0.0, %v1286
        %v1288 = vpop.f32.mrb[0].mxu0
        %v1289 = vadd.f32 0.0, %v1288
        %v1290 = vpop.f32.mrb[0].mxu0
        %v1291 = vadd.f32 0.0, %v1290
        %1292 = vdwg.mxu0
        %v1293 = vadd.f32 %v1045, %v1215
        %v1294 = vadd.f32 %v1046, %v1217
        %v1295 = vadd.f32 %v1047, %v1219
        %v1296 = vadd.f32 %v1048, %v1221
        %v1297 = vadd.f32 %v1049, %v1225
        %v1298 = vadd.f32 %v1050, %v1227
        %v1299 = vadd.f32 %v1051, %v1229
        %v1300 = vadd.f32 %v1052, %v1231
        %v1301 = vadd.f32 %v1053, %v1235
        %v1302 = vadd.f32 %v1054, %v1237
        %v1303 = vadd.f32 %v1055, %v1239
        %v1304 = vadd.f32 %v1056, %v1241
        %v1305 = vadd.f32 %v1057, %v1245
        %v1306 = vadd.f32 %v1058, %v1247
        %v1307 = vadd.f32 %v1059, %v1249
        %v1308 = vadd.f32 %v1060, %v1251
        %v1309 = vadd.f32 %v1061, %v1255
        %v1310 = vadd.f32 %v1062, %v1257
        %v1311 = vadd.f32 %v1063, %v1259
        %v1312 = vadd.f32 %v1064, %v1261
        %v1313 = vadd.f32 %v1065, %v1265
        %v1314 = vadd.f32 %v1066, %v1267
        %v1315 = vadd.f32 %v1067, %v1269
        %v1316 = vadd.f32 %v1068, %v1271
        %v1317 = vadd.f32 %v1069, %v1275
        %v1318 = vadd.f32 %v1070, %v1277
        %v1319 = vadd.f32 %v1071, %v1279
        %v1320 = vadd.f32 %v1072, %v1281
        %v1321 = vadd.f32 %v1073, %v1285
        %v1322 = vadd.f32 %v1074, %v1287
        %v1323 = vadd.f32 %v1075, %v1289
        %v1324 = vadd.f32 %v1076, %v1291
        %v1325 = vld [vmem:[%s379] sm:$0xf]
        %s1326 = scalar_lea.vmem %s2, 256
        %v1327 = vld [vmem:[%s1326] sm:$0xf]
        %v1328 = vld [vmem:[%s1326 + $0x4] sm:$0xf]
        %v1329 = vld [vmem:[%s1326 + $0x8] sm:$0xf]
        %v1330 = vld [vmem:[%s1326 + $0xc] sm:$0xf]
        %v1331 = vld [vmem:[%s1326 + $0x10] sm:$0xf]
        %v1332 = vld [vmem:[%s1326 + $0x14] sm:$0xf]
        %v1333 = vld [vmem:[%s1326 + $0x18] sm:$0xf]
        %v1334 = vld [vmem:[%s1326 + $0x1c] sm:$0xf]
        %v1335 = vld [vmem:[%s1326 + $0x20] sm:$0xf]
        %v1336 = vld [vmem:[%s1326 + $0x24] sm:$0xf]
        %v1337 = vld [vmem:[%s1326 + $0x28] sm:$0xf]
        %v1338 = vld [vmem:[%s1326 + $0x2c] sm:$0xf]
        %v1339 = vld [vmem:[%s1326 + $0x30] sm:$0xf]
        %v1340 = vld [vmem:[%s1326 + $0x34] sm:$0xf]
        %v1341 = vld [vmem:[%s1326 + $0x38] sm:$0xf]
        %v1342 = vld [vmem:[%s1326 + $0x3c] sm:$0xf]
        %v1359 = vunpack.c.l.b16 %v1327
        %v1360 = vunpack.c.l.b16 %v1328
        %v1361 = vunpack.c.l.b16 %v1329
        %v1362 = vunpack.c.l.b16 %v1330
        %v1363 = vunpack.c.l.b16 %v1331
        %v1364 = vunpack.c.l.b16 %v1332
        %v1365 = vunpack.c.l.b16 %v1333
        %v1366 = vunpack.c.l.b16 %v1334
        %v1367 = vunpack.c.l.b16 %v1335
        %v1368 = vunpack.c.l.b16 %v1336
        %v1369 = vunpack.c.l.b16 %v1337
        %v1370 = vunpack.c.l.b16 %v1338
        %v1371 = vunpack.c.l.b16 %v1339
        %v1372 = vunpack.c.l.b16 %v1340
        %v1373 = vunpack.c.l.b16 %v1341
        %v1374 = vunpack.c.l.b16 %v1342
        %v1375 = vpack.c.b16 %v1360, %v1359
        %v1376 = vpack.c.b16 %v1362, %v1361
        %v1377 = vpack.c.b16 %v1364, %v1363
        %v1378 = vpack.c.b16 %v1366, %v1365
        %v1379 = vpack.c.b16 %v1368, %v1367
        %v1380 = vpack.c.b16 %v1370, %v1369
        %v1381 = vpack.c.b16 %v1372, %v1371
        %v1382 = vpack.c.b16 %v1374, %v1373
        %v1385 = vunpack.c.l.s4 1983009808
        %v1386 = vunpack.c.0.s8 %v1385
        %v1387 = vlaneseq
        %v1388 = vshrl.u32 %v1387, 7
        %v1389 = vsub.s32 %v1386, %v1388
        %v1390 = vrot.slane %v1325, %v1389
        %v1391 = vcombine.high %v1390, %v1390
        %1392 = vrot.lane.b32.xlu0 %v1390, 109
        %v1393 = vpop.permute.xlu0 %1392
        %1394 = vrot.lane.b32.xlu0 %v1391, 109
        %v1395 = vpop.permute.xlu0 %1394
        %vm1396 = vcmask 891904
        %v1397 = vsel %vm1396, %v1393, %v1395
        %v1399 = vsel %vm501, %v1375, 0
        %v1402 = vsel %vm501, %v1376, 0
        %v1405 = vsel %vm501, %v1377, 0
        %v1408 = vsel %vm501, %v1378, 0
        %v1411 = vsel %vm501, %v1379, 0
        %v1414 = vsel %vm501, %v1380, 0
        %v1417 = vsel %vm501, %v1381, 0
        %v1420 = vsel %vm501, %v1382, 0
        %v1423 = vsel %vm526, %v1397, 0
        %v1426 = vsel %vm526, %v1395, 0
        %1428 = vmatprep.subr.bf16.mxu0 %v1426
        %1429 = vmatpush1.bf16.msra.mxu0 %v1423
        %1430 = vmatprep.subr.bf16.mxu0 0
        %1431 = vmatpush1.bf16.msra.mxu0 0
        %1432 = vmatprep.subr.bf16.mxu0 0
        %1433 = vmatpush1.bf16.msra.mxu0 0
        %1434 = vmatprep.subr.bf16.mxu0 0
        %1435 = vmatpush1.bf16.msra.mxu0 0
        %1436 = vmatprep.subr.bf16.mxu0 0
        %1437 = vmatpush1.bf16.msra.mxu0 0
        %1438 = vmatprep.subr.bf16.mxu0 0
        %1439 = vmatpush1.bf16.msra.mxu0 0
        %1440 = vmatprep.subr.bf16.mxu0 0
        %1441 = vmatpush1.bf16.msra.mxu0 0
        %1442 = vmatprep.subr.bf16.mxu0 0
        %1443 = vmatpush1.bf16.msra.mxu0 0
        %1444 = vmatprep.subr.bf16.mxu0 0
        %1445 = vmatpush1.bf16.msra.mxu0 0
        %1446 = vmatprep.subr.bf16.mxu0 0
        %1447 = vmatpush1.bf16.msra.mxu0 0
        %1448 = vmatprep.subr.bf16.mxu0 0
        %1449 = vmatpush1.bf16.msra.mxu0 0
        %1450 = vmatprep.subr.bf16.mxu0 0
        %1451 = vmatpush1.bf16.msra.mxu0 0
        %1452 = vmatprep.subr.bf16.mxu0 0
        %1453 = vmatpush1.bf16.msra.mxu0 0
        %1454 = vmatprep.subr.bf16.mxu0 0
        %1455 = vmatpush1.bf16.msra.mxu0 0
        %1456 = vmatprep.subr.bf16.mxu0 0
        %1457 = vmatpush1.bf16.msra.mxu0 0
        %1458 = vmatprep.subr.bf16.mxu0 0
        %1459 = vmatpush1.bf16.msra.mxu0 0
        %1460 = vmatprep.mubr.bf16.mxu0 0
        %1461 = vmatmul.mubr.bf16.gmra.mrb[0].mxu0 %v1399
        %v1462 = vpop.f32.mrb[0].mxu0
        %v1463 = vadd.f32 0.0, %v1462
        %v1464 = vpop.f32.mrb[0].mxu0
        %v1465 = vadd.f32 0.0, %v1464
        %v1466 = vpop.f32.mrb[0].mxu0
        %v1467 = vadd.f32 0.0, %v1466
        %v1468 = vpop.f32.mrb[0].mxu0
        %v1469 = vadd.f32 0.0, %v1468
        %1470 = vmatprep.mubr.bf16.mxu0 0
        %1471 = vmatmul.mubr.bf16.gmra.mrb[0].mxu0 %v1402
        %v1472 = vpop.f32.mrb[0].mxu0
        %v1473 = vadd.f32 0.0, %v1472
        %v1474 = vpop.f32.mrb[0].mxu0
        %v1475 = vadd.f32 0.0, %v1474
        %v1476 = vpop.f32.mrb[0].mxu0
        %v1477 = vadd.f32 0.0, %v1476
        %v1478 = vpop.f32.mrb[0].mxu0
        %v1479 = vadd.f32 0.0, %v1478
        %1480 = vmatprep.mubr.bf16.mxu0 0
        %1481 = vmatmul.mubr.bf16.gmra.mrb[0].mxu0 %v1405
        %v1482 = vpop.f32.mrb[0].mxu0
        %v1483 = vadd.f32 0.0, %v1482
        %v1484 = vpop.f32.mrb[0].mxu0
        %v1485 = vadd.f32 0.0, %v1484
        %v1486 = vpop.f32.mrb[0].mxu0
        %v1487 = vadd.f32 0.0, %v1486
        %v1488 = vpop.f32.mrb[0].mxu0
        %v1489 = vadd.f32 0.0, %v1488
        %1490 = vmatprep.mubr.bf16.mxu0 0
        %1491 = vmatmul.mubr.bf16.gmra.mrb[0].mxu0 %v1408
        %v1492 = vpop.f32.mrb[0].mxu0
        %v1493 = vadd.f32 0.0, %v1492
        %v1494 = vpop.f32.mrb[0].mxu0
        %v1495 = vadd.f32 0.0, %v1494
        %v1496 = vpop.f32.mrb[0].mxu0
        %v1497 = vadd.f32 0.0, %v1496
        %v1498 = vpop.f32.mrb[0].mxu0
        %v1499 = vadd.f32 0.0, %v1498
        %1500 = vmatprep.mubr.bf16.mxu0 0
        %1501 = vmatmul.mubr.bf16.gmra.mrb[0].mxu0 %v1411
        %v1502 = vpop.f32.mrb[0].mxu0
        %v1503 = vadd.f32 0.0, %v1502
        %v1504 = vpop.f32.mrb[0].mxu0
        %v1505 = vadd.f32 0.0, %v1504
        %v1506 = vpop.f32.mrb[0].mxu0
        %v1507 = vadd.f32 0.0, %v1506
        %v1508 = vpop.f32.mrb[0].mxu0
        %v1509 = vadd.f32 0.0, %v1508
        %1510 = vmatprep.mubr.bf16.mxu0 0
        %1511 = vmatmul.mubr.bf16.gmra.mrb[0].mxu0 %v1414
        %v1512 = vpop.f32.mrb[0].mxu0
        %v1513 = vadd.f32 0.0, %v1512
        %v1514 = vpop.f32.mrb[0].mxu0
        %v1515 = vadd.f32 0.0, %v1514
        %v1516 = vpop.f32.mrb[0].mxu0
        %v1517 = vadd.f32 0.0, %v1516
        %v1518 = vpop.f32.mrb[0].mxu0
        %v1519 = vadd.f32 0.0, %v1518
        %1520 = vmatprep.mubr.bf16.mxu0 0
        %1521 = vmatmul.mubr.bf16.gmra.mrb[0].mxu0 %v1417
        %v1522 = vpop.f32.mrb[0].mxu0
        %v1523 = vadd.f32 0.0, %v1522
        %v1524 = vpop.f32.mrb[0].mxu0
        %v1525 = vadd.f32 0.0, %v1524
        %v1526 = vpop.f32.mrb[0].mxu0
        %v1527 = vadd.f32 0.0, %v1526
        %v1528 = vpop.f32.mrb[0].mxu0
        %v1529 = vadd.f32 0.0, %v1528
        %1530 = vmatprep.mubr.bf16.mxu0 0
        %1531 = vmatmul.mubr.bf16.gmra.mrb[0].mxu0 %v1420
        %v1532 = vpop.f32.mrb[0].mxu0
        %v1533 = vadd.f32 0.0, %v1532
        %v1534 = vpop.f32.mrb[0].mxu0
        %v1535 = vadd.f32 0.0, %v1534
        %v1536 = vpop.f32.mrb[0].mxu0
        %v1537 = vadd.f32 0.0, %v1536
        %v1538 = vpop.f32.mrb[0].mxu0
        %v1539 = vadd.f32 0.0, %v1538
        %1540 = vdwg.mxu0
        %v1541 = vadd.f32 %v1293, %v1463
        %v1542 = vadd.f32 %v1294, %v1465
        %v1543 = vadd.f32 %v1295, %v1467
        %v1544 = vadd.f32 %v1296, %v1469
        %v1545 = vadd.f32 %v1297, %v1473
        %v1546 = vadd.f32 %v1298, %v1475
        %v1547 = vadd.f32 %v1299, %v1477
        %v1548 = vadd.f32 %v1300, %v1479
        %v1549 = vadd.f32 %v1301, %v1483
        %v1550 = vadd.f32 %v1302, %v1485
        %v1551 = vadd.f32 %v1303, %v1487
        %v1552 = vadd.f32 %v1304, %v1489
        %v1553 = vadd.f32 %v1305, %v1493
        %v1554 = vadd.f32 %v1306, %v1495
        %v1555 = vadd.f32 %v1307, %v1497
        %v1556 = vadd.f32 %v1308, %v1499
        %v1557 = vadd.f32 %v1309, %v1503
        %v1558 = vadd.f32 %v1310, %v1505
        %v1559 = vadd.f32 %v1311, %v1507
        %v1560 = vadd.f32 %v1312, %v1509
        %v1561 = vadd.f32 %v1313, %v1513
        %v1562 = vadd.f32 %v1314, %v1515
        %v1563 = vadd.f32 %v1315, %v1517
        %v1564 = vadd.f32 %v1316, %v1519
        %v1565 = vadd.f32 %v1317, %v1523
        %v1566 = vadd.f32 %v1318, %v1525
        %v1567 = vadd.f32 %v1319, %v1527
        %v1568 = vadd.f32 %v1320, %v1529
        %v1569 = vadd.f32 %v1321, %v1533
        %v1570 = vadd.f32 %v1322, %v1535
        %v1571 = vadd.f32 %v1323, %v1537
        %v1572 = vadd.f32 %v1324, %v1539
        %v1573 = vld [vmem:[%s379] sm:$0xf]
        %s1574 = scalar_lea.vmem %s2, 320
        %v1575 = vld [vmem:[%s1574] sm:$0xf]
        %v1576 = vld [vmem:[%s1574 + $0x4] sm:$0xf]
        %v1577 = vld [vmem:[%s1574 + $0x8] sm:$0xf]
        %v1578 = vld [vmem:[%s1574 + $0xc] sm:$0xf]
        %v1579 = vld [vmem:[%s1574 + $0x10] sm:$0xf]
        %v1580 = vld [vmem:[%s1574 + $0x14] sm:$0xf]
        %v1581 = vld [vmem:[%s1574 + $0x18] sm:$0xf]
        %v1582 = vld [vmem:[%s1574 + $0x1c] sm:$0xf]
        %v1583 = vld [vmem:[%s1574 + $0x20] sm:$0xf]
        %v1584 = vld [vmem:[%s1574 + $0x24] sm:$0xf]
        %v1585 = vld [vmem:[%s1574 + $0x28] sm:$0xf]
        %v1586 = vld [vmem:[%s1574 + $0x2c] sm:$0xf]
        %v1587 = vld [vmem:[%s1574 + $0x30] sm:$0xf]
        %v1588 = vld [vmem:[%s1574 + $0x34] sm:$0xf]
        %v1589 = vld [vmem:[%s1574 + $0x38] sm:$0xf]
        %v1590 = vld [vmem:[%s1574 + $0x3c] sm:$0xf]
        %v1607 = vunpack.c.l.b16 %v1575
        %v1608 = vunpack.c.l.b16 %v1576
        %v1609 = vunpack.c.l.b16 %v1577
        %v1610 = vunpack.c.l.b16 %v1578
        %v1611 = vunpack.c.l.b16 %v1579
        %v1612 = vunpack.c.l.b16 %v1580
        %v1613 = vunpack.c.l.b16 %v1581
        %v1614 = vunpack.c.l.b16 %v1582
        %v1615 = vunpack.c.l.b16 %v1583
        %v1616 = vunpack.c.l.b16 %v1584
        %v1617 = vunpack.c.l.b16 %v1585
        %v1618 = vunpack.c.l.b16 %v1586
        %v1619 = vunpack.c.l.b16 %v1587
        %v1620 = vunpack.c.l.b16 %v1588
        %v1621 = vunpack.c.l.b16 %v1589
        %v1622 = vunpack.c.l.b16 %v1590
        %v1623 = vpack.c.b16 %v1608, %v1607
        %v1624 = vpack.c.b16 %v1610, %v1609
        %v1625 = vpack.c.b16 %v1612, %v1611
        %v1626 = vpack.c.b16 %v1614, %v1613
        %v1627 = vpack.c.b16 %v1616, %v1615
        %v1628 = vpack.c.b16 %v1618, %v1617
        %v1629 = vpack.c.b16 %v1620, %v1619
        %v1630 = vpack.c.b16 %v1622, %v1621
        %v1633 = vunpack.c.l.s4 1983009808
        %v1634 = vunpack.c.0.s8 %v1633
        %v1635 = vlaneseq
        %v1636 = vshrl.u32 %v1635, 7
        %v1637 = vsub.s32 %v1634, %v1636
        %v1638 = vrot.slane %v1573, %v1637
        %v1639 = vcombine.high %v1638, %v1638
        %1640 = vrot.lane.b32.xlu0 %v1638, 108
        %v1641 = vpop.permute.xlu0 %1640
        %1642 = vrot.lane.b32.xlu0 %v1639, 108
        %v1643 = vpop.permute.xlu0 %1642
        %vm1644 = vcmask 883712
        %v1645 = vsel %vm1644, %v1641, %v1643
        %v1647 = vsel %vm501, %v1623, 0
        %v1650 = vsel %vm501, %v1624, 0
        %v1653 = vsel %vm501, %v1625, 0
        %v1656 = vsel %vm501, %v1626, 0
        %v1659 = vsel %vm501, %v1627, 0
        %v1662 = vsel %vm501, %v1628, 0
        %v1665 = vsel %vm501, %v1629, 0
        %v1668 = vsel %vm501, %v1630, 0
        %v1671 = vsel %vm526, %v1645, 0
        %v1674 = vsel %vm526, %v1643, 0
        %1676 = vmatprep.subr.bf16.mxu0 %v1674
        %1677 = vmatpush1.bf16.msra.mxu0 %v1671
        %1678 = vmatprep.subr.bf16.mxu0 0
        %1679 = vmatpush1.bf16.msra.mxu0 0
        %1680 = vmatprep.subr.bf16.mxu0 0
        %1681 = vmatpush1.bf16.msra.mxu0 0
        %1682 = vmatprep.subr.bf16.mxu0 0
        %1683 = vmatpush1.bf16.msra.mxu0 0
        %1684 = vmatprep.subr.bf16.mxu0 0
        %1685 = vmatpush1.bf16.msra.mxu0 0
        %1686 = vmatprep.subr.bf16.mxu0 0
        %1687 = vmatpush1.bf16.msra.mxu0 0
        %1688 = vmatprep.subr.bf16.mxu0 0
        %1689 = vmatpush1.bf16.msra.mxu0 0
        %1690 = vmatprep.subr.bf16.mxu0 0
        %1691 = vmatpush1.bf16.msra.mxu0 0
        %1692 = vmatprep.subr.bf16.mxu0 0
        %1693 = vmatpush1.bf16.msra.mxu0 0
        %1694 = vmatprep.subr.bf16.mxu0 0
        %1695 = vmatpush1.bf16.msra.mxu0 0
        %1696 = vmatprep.subr.bf16.mxu0 0
        %1697 = vmatpush1.bf16.msra.mxu0 0
        %1698 = vmatprep.subr.bf16.mxu0 0
        %1699 = vmatpush1.bf16.msra.mxu0 0
        %1700 = vmatprep.subr.bf16.mxu0 0
        %1701 = vmatpush1.bf16.msra.mxu0 0
        %1702 = vmatprep.subr.bf16.mxu0 0
        %1703 = vmatpush1.bf16.msra.mxu0 0
        %1704 = vmatprep.subr.bf16.mxu0 0
        %1705 = vmatpush1.bf16.msra.mxu0 0
        %1706 = vmatprep.subr.bf16.mxu0 0
        %1707 = vmatpush1.bf16.msra.mxu0 0
        %1708 = vmatprep.mubr.bf16.mxu0 0
        %1709 = vmatmul.mubr.bf16.gmra.mrb[0].mxu0 %v1647
        %v1710 = vpop.f32.mrb[0].mxu0
        %v1711 = vadd.f32 0.0, %v1710
        %v1712 = vpop.f32.mrb[0].mxu0
        %v1713 = vadd.f32 0.0, %v1712
        %v1714 = vpop.f32.mrb[0].mxu0
        %v1715 = vadd.f32 0.0, %v1714
        %v1716 = vpop.f32.mrb[0].mxu0
        %v1717 = vadd.f32 0.0, %v1716
        %1718 = vmatprep.mubr.bf16.mxu0 0
        %1719 = vmatmul.mubr.bf16.gmra.mrb[0].mxu0 %v1650
        %v1720 = vpop.f32.mrb[0].mxu0
        %v1721 = vadd.f32 0.0, %v1720
        %v1722 = vpop.f32.mrb[0].mxu0
        %v1723 = vadd.f32 0.0, %v1722
        %v1724 = vpop.f32.mrb[0].mxu0
        %v1725 = vadd.f32 0.0, %v1724
        %v1726 = vpop.f32.mrb[0].mxu0
        %v1727 = vadd.f32 0.0, %v1726
        %1728 = vmatprep.mubr.bf16.mxu0 0
        %1729 = vmatmul.mubr.bf16.gmra.mrb[0].mxu0 %v1653
        %v1730 = vpop.f32.mrb[0].mxu0
        %v1731 = vadd.f32 0.0, %v1730
        %v1732 = vpop.f32.mrb[0].mxu0
        %v1733 = vadd.f32 0.0, %v1732
        %v1734 = vpop.f32.mrb[0].mxu0
        %v1735 = vadd.f32 0.0, %v1734
        %v1736 = vpop.f32.mrb[0].mxu0
        %v1737 = vadd.f32 0.0, %v1736
        %1738 = vmatprep.mubr.bf16.mxu0 0
        %1739 = vmatmul.mubr.bf16.gmra.mrb[0].mxu0 %v1656
        %v1740 = vpop.f32.mrb[0].mxu0
        %v1741 = vadd.f32 0.0, %v1740
        %v1742 = vpop.f32.mrb[0].mxu0
        %v1743 = vadd.f32 0.0, %v1742
        %v1744 = vpop.f32.mrb[0].mxu0
        %v1745 = vadd.f32 0.0, %v1744
        %v1746 = vpop.f32.mrb[0].mxu0
        %v1747 = vadd.f32 0.0, %v1746
        %1748 = vmatprep.mubr.bf16.mxu0 0
        %1749 = vmatmul.mubr.bf16.gmra.mrb[0].mxu0 %v1659
        %v1750 = vpop.f32.mrb[0].mxu0
        %v1751 = vadd.f32 0.0, %v1750
        %v1752 = vpop.f32.mrb[0].mxu0
        %v1753 = vadd.f32 0.0, %v1752
        %v1754 = vpop.f32.mrb[0].mxu0
        %v1755 = vadd.f32 0.0, %v1754
        %v1756 = vpop.f32.mrb[0].mxu0
        %v1757 = vadd.f32 0.0, %v1756
        %1758 = vmatprep.mubr.bf16.mxu0 0
        %1759 = vmatmul.mubr.bf16.gmra.mrb[0].mxu0 %v1662
        %v1760 = vpop.f32.mrb[0].mxu0
        %v1761 = vadd.f32 0.0, %v1760
        %v1762 = vpop.f32.mrb[0].mxu0
        %v1763 = vadd.f32 0.0, %v1762
        %v1764 = vpop.f32.mrb[0].mxu0
        %v1765 = vadd.f32 0.0, %v1764
        %v1766 = vpop.f32.mrb[0].mxu0
        %v1767 = vadd.f32 0.0, %v1766
        %1768 = vmatprep.mubr.bf16.mxu0 0
        %1769 = vmatmul.mubr.bf16.gmra.mrb[0].mxu0 %v1665
        %v1770 = vpop.f32.mrb[0].mxu0
        %v1771 = vadd.f32 0.0, %v1770
        %v1772 = vpop.f32.mrb[0].mxu0
        %v1773 = vadd.f32 0.0, %v1772
        %v1774 = vpop.f32.mrb[0].mxu0
        %v1775 = vadd.f32 0.0, %v1774
        %v1776 = vpop.f32.mrb[0].mxu0
        %v1777 = vadd.f32 0.0, %v1776
        %1778 = vmatprep.mubr.bf16.mxu0 0
        %1779 = vmatmul.mubr.bf16.gmra.mrb[0].mxu0 %v1668
        %v1780 = vpop.f32.mrb[0].mxu0
        %v1781 = vadd.f32 0.0, %v1780
        %v1782 = vpop.f32.mrb[0].mxu0
        %v1783 = vadd.f32 0.0, %v1782
        %v1784 = vpop.f32.mrb[0].mxu0
        %v1785 = vadd.f32 0.0, %v1784
        %v1786 = vpop.f32.mrb[0].mxu0
        %v1787 = vadd.f32 0.0, %v1786
        %1788 = vdwg.mxu0
        %v1789 = vadd.f32 %v1541, %v1711
        %v1790 = vadd.f32 %v1542, %v1713
        %v1791 = vadd.f32 %v1543, %v1715
        %v1792 = vadd.f32 %v1544, %v1717
        %v1793 = vadd.f32 %v1545, %v1721
        %v1794 = vadd.f32 %v1546, %v1723
        %v1795 = vadd.f32 %v1547, %v1725
        %v1796 = vadd.f32 %v1548, %v1727
        %v1797 = vadd.f32 %v1549, %v1731
        %v1798 = vadd.f32 %v1550, %v1733
        %v1799 = vadd.f32 %v1551, %v1735
        %v1800 = vadd.f32 %v1552, %v1737
        %v1801 = vadd.f32 %v1553, %v1741
        %v1802 = vadd.f32 %v1554, %v1743
        %v1803 = vadd.f32 %v1555, %v1745
        %v1804 = vadd.f32 %v1556, %v1747
        %v1805 = vadd.f32 %v1557, %v1751
        %v1806 = vadd.f32 %v1558, %v1753
        %v1807 = vadd.f32 %v1559, %v1755
        %v1808 = vadd.f32 %v1560, %v1757
        %v1809 = vadd.f32 %v1561, %v1761
        %v1810 = vadd.f32 %v1562, %v1763
        %v1811 = vadd.f32 %v1563, %v1765
        %v1812 = vadd.f32 %v1564, %v1767
        %v1813 = vadd.f32 %v1565, %v1771
        %v1814 = vadd.f32 %v1566, %v1773
        %v1815 = vadd.f32 %v1567, %v1775
        %v1816 = vadd.f32 %v1568, %v1777
        %v1817 = vadd.f32 %v1569, %v1781
        %v1818 = vadd.f32 %v1570, %v1783
        %v1819 = vadd.f32 %v1571, %v1785
        %v1820 = vadd.f32 %v1572, %v1787
        %v1821 = vld [vmem:[%s379] sm:$0xf]
        %s1822 = scalar_lea.vmem %s2, 384
        %v1823 = vld [vmem:[%s1822] sm:$0xf]
        %v1824 = vld [vmem:[%s1822 + $0x4] sm:$0xf]
        %v1825 = vld [vmem:[%s1822 + $0x8] sm:$0xf]
        %v1826 = vld [vmem:[%s1822 + $0xc] sm:$0xf]
        %v1827 = vld [vmem:[%s1822 + $0x10] sm:$0xf]
        %v1828 = vld [vmem:[%s1822 + $0x14] sm:$0xf]
        %v1829 = vld [vmem:[%s1822 + $0x18] sm:$0xf]
        %v1830 = vld [vmem:[%s1822 + $0x1c] sm:$0xf]
        %v1831 = vld [vmem:[%s1822 + $0x20] sm:$0xf]
        %v1832 = vld [vmem:[%s1822 + $0x24] sm:$0xf]
        %v1833 = vld [vmem:[%s1822 + $0x28] sm:$0xf]
        %v1834 = vld [vmem:[%s1822 + $0x2c] sm:$0xf]
        %v1835 = vld [vmem:[%s1822 + $0x30] sm:$0xf]
        %v1836 = vld [vmem:[%s1822 + $0x34] sm:$0xf]
        %v1837 = vld [vmem:[%s1822 + $0x38] sm:$0xf]
        %v1838 = vld [vmem:[%s1822 + $0x3c] sm:$0xf]
        %v1855 = vunpack.c.l.b16 %v1823
        %v1856 = vunpack.c.l.b16 %v1824
        %v1857 = vunpack.c.l.b16 %v1825
        %v1858 = vunpack.c.l.b16 %v1826
        %v1859 = vunpack.c.l.b16 %v1827
        %v1860 = vunpack.c.l.b16 %v1828
        %v1861 = vunpack.c.l.b16 %v1829
        %v1862 = vunpack.c.l.b16 %v1830
        %v1863 = vunpack.c.l.b16 %v1831
        %v1864 = vunpack.c.l.b16 %v1832
        %v1865 = vunpack.c.l.b16 %v1833
        %v1866 = vunpack.c.l.b16 %v1834
        %v1867 = vunpack.c.l.b16 %v1835
        %v1868 = vunpack.c.l.b16 %v1836
        %v1869 = vunpack.c.l.b16 %v1837
        %v1870 = vunpack.c.l.b16 %v1838
        %v1871 = vpack.c.b16 %v1856, %v1855
        %v1872 = vpack.c.b16 %v1858, %v1857
        %v1873 = vpack.c.b16 %v1860, %v1859
        %v1874 = vpack.c.b16 %v1862, %v1861
        %v1875 = vpack.c.b16 %v1864, %v1863
        %v1876 = vpack.c.b16 %v1866, %v1865
        %v1877 = vpack.c.b16 %v1868, %v1867
        %v1878 = vpack.c.b16 %v1870, %v1869
        %v1881 = vunpack.c.l.s4 1983009808
        %v1882 = vunpack.c.0.s8 %v1881
        %v1883 = vlaneseq
        %v1884 = vshrl.u32 %v1883, 7
        %v1885 = vsub.s32 %v1882, %v1884
        %v1886 = vrot.slane %v1821, %v1885
        %v1887 = vcombine.high %v1886, %v1886
        %1888 = vrot.lane.b32.xlu0 %v1886, 92
        %v1889 = vpop.permute.xlu0 %1888
        %1890 = vrot.lane.b32.xlu0 %v1887, 92
        %v1891 = vpop.permute.xlu0 %1890
        %vm1892 = vcmask 752640
        %v1893 = vsel %vm1892, %v1889, %v1891
        %v1895 = vsel %vm501, %v1871, 0
        %v1898 = vsel %vm501, %v1872, 0
        %v1901 = vsel %vm501, %v1873, 0
        %v1904 = vsel %vm501, %v1874, 0
        %v1907 = vsel %vm501, %v1875, 0
        %v1910 = vsel %vm501, %v1876, 0
        %v1913 = vsel %vm501, %v1877, 0
        %v1916 = vsel %vm501, %v1878, 0
        %v1919 = vsel %vm526, %v1893, 0
        %v1922 = vsel %vm526, %v1891, 0
        %1924 = vmatprep.subr.bf16.mxu0 %v1922
        %1925 = vmatpush1.bf16.msra.mxu0 %v1919
        %1926 = vmatprep.subr.bf16.mxu0 0
        %1927 = vmatpush1.bf16.msra.mxu0 0
        %1928 = vmatprep.subr.bf16.mxu0 0
        %1929 = vmatpush1.bf16.msra.mxu0 0
        %1930 = vmatprep.subr.bf16.mxu0 0
        %1931 = vmatpush1.bf16.msra.mxu0 0
        %1932 = vmatprep.subr.bf16.mxu0 0
        %1933 = vmatpush1.bf16.msra.mxu0 0
        %1934 = vmatprep.subr.bf16.mxu0 0
        %1935 = vmatpush1.bf16.msra.mxu0 0
        %1936 = vmatprep.subr.bf16.mxu0 0
        %1937 = vmatpush1.bf16.msra.mxu0 0
        %1938 = vmatprep.subr.bf16.mxu0 0
        %1939 = vmatpush1.bf16.msra.mxu0 0
        %1940 = vmatprep.subr.bf16.mxu0 0
        %1941 = vmatpush1.bf16.msra.mxu0 0
        %1942 = vmatprep.subr.bf16.mxu0 0
        %1943 = vmatpush1.bf16.msra.mxu0 0
        %1944 = vmatprep.subr.bf16.mxu0 0
        %1945 = vmatpush1.bf16.msra.mxu0 0
        %1946 = vmatprep.subr.bf16.mxu0 0
        %1947 = vmatpush1.bf16.msra.mxu0 0
        %1948 = vmatprep.subr.bf16.mxu0 0
        %1949 = vmatpush1.bf16.msra.mxu0 0
        %1950 = vmatprep.subr.bf16.mxu0 0
        %1951 = vmatpush1.bf16.msra.mxu0 0
        %1952 = vmatprep.subr.bf16.mxu0 0
        %1953 = vmatpush1.bf16.msra.mxu0 0
        %1954 = vmatprep.subr.bf16.mxu0 0
        %1955 = vmatpush1.bf16.msra.mxu0 0
        %1956 = vmatprep.mubr.bf16.mxu0 0
        %1957 = vmatmul.mubr.bf16.gmra.mrb[0].mxu0 %v1895
        %v1958 = vpop.f32.mrb[0].mxu0
        %v1959 = vadd.f32 0.0, %v1958
        %v1960 = vpop.f32.mrb[0].mxu0
        %v1961 = vadd.f32 0.0, %v1960
        %v1962 = vpop.f32.mrb[0].mxu0
        %v1963 = vadd.f32 0.0, %v1962
        %v1964 = vpop.f32.mrb[0].mxu0
        %v1965 = vadd.f32 0.0, %v1964
        %1966 = vmatprep.mubr.bf16.mxu0 0
        %1967 = vmatmul.mubr.bf16.gmra.mrb[0].mxu0 %v1898
        %v1968 = vpop.f32.mrb[0].mxu0
        %v1969 = vadd.f32 0.0, %v1968
        %v1970 = vpop.f32.mrb[0].mxu0
        %v1971 = vadd.f32 0.0, %v1970
        %v1972 = vpop.f32.mrb[0].mxu0
        %v1973 = vadd.f32 0.0, %v1972
        %v1974 = vpop.f32.mrb[0].mxu0
        %v1975 = vadd.f32 0.0, %v1974
        %1976 = vmatprep.mubr.bf16.mxu0 0
        %1977 = vmatmul.mubr.bf16.gmra.mrb[0].mxu0 %v1901
        %v1978 = vpop.f32.mrb[0].mxu0
        %v1979 = vadd.f32 0.0, %v1978
        %v1980 = vpop.f32.mrb[0].mxu0
        %v1981 = vadd.f32 0.0, %v1980
        %v1982 = vpop.f32.mrb[0].mxu0
        %v1983 = vadd.f32 0.0, %v1982
        %v1984 = vpop.f32.mrb[0].mxu0
        %v1985 = vadd.f32 0.0, %v1984
        %1986 = vmatprep.mubr.bf16.mxu0 0
        %1987 = vmatmul.mubr.bf16.gmra.mrb[0].mxu0 %v1904
        %v1988 = vpop.f32.mrb[0].mxu0
        %v1989 = vadd.f32 0.0, %v1988
        %v1990 = vpop.f32.mrb[0].mxu0
        %v1991 = vadd.f32 0.0, %v1990
        %v1992 = vpop.f32.mrb[0].mxu0
        %v1993 = vadd.f32 0.0, %v1992
        %v1994 = vpop.f32.mrb[0].mxu0
        %v1995 = vadd.f32 0.0, %v1994
        %1996 = vmatprep.mubr.bf16.mxu0 0
        %1997 = vmatmul.mubr.bf16.gmra.mrb[0].mxu0 %v1907
        %v1998 = vpop.f32.mrb[0].mxu0
        %v1999 = vadd.f32 0.0, %v1998
        %v2000 = vpop.f32.mrb[0].mxu0
        %v2001 = vadd.f32 0.0, %v2000
        %v2002 = vpop.f32.mrb[0].mxu0
        %v2003 = vadd.f32 0.0, %v2002
        %v2004 = vpop.f32.mrb[0].mxu0
        %v2005 = vadd.f32 0.0, %v2004
        %2006 = vmatprep.mubr.bf16.mxu0 0
        %2007 = vmatmul.mubr.bf16.gmra.mrb[0].mxu0 %v1910
        %v2008 = vpop.f32.mrb[0].mxu0
        %v2009 = vadd.f32 0.0, %v2008
        %v2010 = vpop.f32.mrb[0].mxu0
        %v2011 = vadd.f32 0.0, %v2010
        %v2012 = vpop.f32.mrb[0].mxu0
        %v2013 = vadd.f32 0.0, %v2012
        %v2014 = vpop.f32.mrb[0].mxu0
        %v2015 = vadd.f32 0.0, %v2014
        %2016 = vmatprep.mubr.bf16.mxu0 0
        %2017 = vmatmul.mubr.bf16.gmra.mrb[0].mxu0 %v1913
        %v2018 = vpop.f32.mrb[0].mxu0
        %v2019 = vadd.f32 0.0, %v2018
        %v2020 = vpop.f32.mrb[0].mxu0
        %v2021 = vadd.f32 0.0, %v2020
        %v2022 = vpop.f32.mrb[0].mxu0
        %v2023 = vadd.f32 0.0, %v2022
        %v2024 = vpop.f32.mrb[0].mxu0
        %v2025 = vadd.f32 0.0, %v2024
        %2026 = vmatprep.mubr.bf16.mxu0 0
        %2027 = vmatmul.mubr.bf16.gmra.mrb[0].mxu0 %v1916
        %v2028 = vpop.f32.mrb[0].mxu0
        %v2029 = vadd.f32 0.0, %v2028
        %v2030 = vpop.f32.mrb[0].mxu0
        %v2031 = vadd.f32 0.0, %v2030
        %v2032 = vpop.f32.mrb[0].mxu0
        %v2033 = vadd.f32 0.0, %v2032
        %v2034 = vpop.f32.mrb[0].mxu0
        %v2035 = vadd.f32 0.0, %v2034
        %2036 = vdwg.mxu0
        %v2037 = vadd.f32 %v1789, %v1959
        %v2038 = vadd.f32 %v1790, %v1961
        %v2039 = vadd.f32 %v1791, %v1963
        %v2040 = vadd.f32 %v1792, %v1965
        %v2041 = vadd.f32 %v1793, %v1969
        %v2042 = vadd.f32 %v1794, %v1971
        %v2043 = vadd.f32 %v1795, %v1973
        %v2044 = vadd.f32 %v1796, %v1975
        %v2045 = vadd.f32 %v1797, %v1979
        %v2046 = vadd.f32 %v1798, %v1981
        %v2047 = vadd.f32 %v1799, %v1983
        %v2048 = vadd.f32 %v1800, %v1985
        %v2049 = vadd.f32 %v1801, %v1989
        %v2050 = vadd.f32 %v1802, %v1991
        %v2051 = vadd.f32 %v1803, %v1993
        %v2052 = vadd.f32 %v1804, %v1995
        %v2053 = vadd.f32 %v1805, %v1999
        %v2054 = vadd.f32 %v1806, %v2001
        %v2055 = vadd.f32 %v1807, %v2003
        %v2056 = vadd.f32 %v1808, %v2005
        %v2057 = vadd.f32 %v1809, %v2009
        %v2058 = vadd.f32 %v1810, %v2011
        %v2059 = vadd.f32 %v1811, %v2013
        %v2060 = vadd.f32 %v1812, %v2015
        %v2061 = vadd.f32 %v1813, %v2019
        %v2062 = vadd.f32 %v1814, %v2021
        %v2063 = vadd.f32 %v1815, %v2023
        %v2064 = vadd.f32 %v1816, %v2025
        %v2065 = vadd.f32 %v1817, %v2029
        %v2066 = vadd.f32 %v1818, %v2031
        %v2067 = vadd.f32 %v1819, %v2033
        %v2068 = vadd.f32 %v1820, %v2035
        %v2069 = vld [vmem:[%s379] sm:$0xf]
        %s2070 = scalar_lea.vmem %s2, 448
        %v2071 = vld [vmem:[%s2070] sm:$0xf]
        %v2072 = vld [vmem:[%s2070 + $0x4] sm:$0xf]
        %v2073 = vld [vmem:[%s2070 + $0x8] sm:$0xf]
        %v2074 = vld [vmem:[%s2070 + $0xc] sm:$0xf]
        %v2075 = vld [vmem:[%s2070 + $0x10] sm:$0xf]
        %v2076 = vld [vmem:[%s2070 + $0x14] sm:$0xf]
        %v2077 = vld [vmem:[%s2070 + $0x18] sm:$0xf]
        %v2078 = vld [vmem:[%s2070 + $0x1c] sm:$0xf]
        %v2079 = vld [vmem:[%s2070 + $0x20] sm:$0xf]
        %v2080 = vld [vmem:[%s2070 + $0x24] sm:$0xf]
        %v2081 = vld [vmem:[%s2070 + $0x28] sm:$0xf]
        %v2082 = vld [vmem:[%s2070 + $0x2c] sm:$0xf]
        %v2083 = vld [vmem:[%s2070 + $0x30] sm:$0xf]
        %v2084 = vld [vmem:[%s2070 + $0x34] sm:$0xf]
        %v2085 = vld [vmem:[%s2070 + $0x38] sm:$0xf]
        %v2086 = vld [vmem:[%s2070 + $0x3c] sm:$0xf]
        %v2103 = vunpack.c.l.b16 %v2071
        %v2104 = vunpack.c.l.b16 %v2072
        %v2105 = vunpack.c.l.b16 %v2073
        %v2106 = vunpack.c.l.b16 %v2074
        %v2107 = vunpack.c.l.b16 %v2075
        %v2108 = vunpack.c.l.b16 %v2076
        %v2109 = vunpack.c.l.b16 %v2077
        %v2110 = vunpack.c.l.b16 %v2078
        %v2111 = vunpack.c.l.b16 %v2079
        %v2112 = vunpack.c.l.b16 %v2080
        %v2113 = vunpack.c.l.b16 %v2081
        %v2114 = vunpack.c.l.b16 %v2082
        %v2115 = vunpack.c.l.b16 %v2083
        %v2116 = vunpack.c.l.b16 %v2084
        %v2117 = vunpack.c.l.b16 %v2085
        %v2118 = vunpack.c.l.b16 %v2086
        %v2119 = vpack.c.b16 %v2104, %v2103
        %v2120 = vpack.c.b16 %v2106, %v2105
        %v2121 = vpack.c.b16 %v2108, %v2107
        %v2122 = vpack.c.b16 %v2110, %v2109
        %v2123 = vpack.c.b16 %v2112, %v2111
        %v2124 = vpack.c.b16 %v2114, %v2113
        %v2125 = vpack.c.b16 %v2116, %v2115
        %v2126 = vpack.c.b16 %v2118, %v2117
        %v2129 = vunpack.c.l.s4 1983009808
        %v2130 = vunpack.c.0.s8 %v2129
        %v2131 = vlaneseq
        %v2132 = vshrl.u32 %v2131, 7
        %v2133 = vsub.s32 %v2130, %v2132
        %v2134 = vrot.slane %v2069, %v2133
        %v2135 = vcombine.high %v2134, %v2134
        %2136 = vrot.lane.b32.xlu0 %v2134, 91
        %v2137 = vpop.permute.xlu0 %2136
        %2138 = vrot.lane.b32.xlu0 %v2135, 91
        %v2139 = vpop.permute.xlu0 %2138
        %vm2140 = vcmask 744448
        %v2141 = vsel %vm2140, %v2137, %v2139
        %v2143 = vsel %vm501, %v2119, 0
        %v2146 = vsel %vm501, %v2120, 0
        %v2149 = vsel %vm501, %v2121, 0
        %v2152 = vsel %vm501, %v2122, 0
        %v2155 = vsel %vm501, %v2123, 0
        %v2158 = vsel %vm501, %v2124, 0
        %v2161 = vsel %vm501, %v2125, 0
        %v2164 = vsel %vm501, %v2126, 0
        %v2167 = vsel %vm526, %v2141, 0
        %v2170 = vsel %vm526, %v2139, 0
        %2172 = vmatprep.subr.bf16.mxu0 %v2170
        %2173 = vmatpush1.bf16.msra.mxu0 %v2167
        %2174 = vmatprep.subr.bf16.mxu0 0
        %2175 = vmatpush1.bf16.msra.mxu0 0
        %2176 = vmatprep.subr.bf16.mxu0 0
        %2177 = vmatpush1.bf16.msra.mxu0 0
        %2178 = vmatprep.subr.bf16.mxu0 0
        %2179 = vmatpush1.bf16.msra.mxu0 0
        %2180 = vmatprep.subr.bf16.mxu0 0
        %2181 = vmatpush1.bf16.msra.mxu0 0
        %2182 = vmatprep.subr.bf16.mxu0 0
        %2183 = vmatpush1.bf16.msra.mxu0 0
        %2184 = vmatprep.subr.bf16.mxu0 0
        %2185 = vmatpush1.bf16.msra.mxu0 0
        %2186 = vmatprep.subr.bf16.mxu0 0
        %2187 = vmatpush1.bf16.msra.mxu0 0
        %2188 = vmatprep.subr.bf16.mxu0 0
        %2189 = vmatpush1.bf16.msra.mxu0 0
        %2190 = vmatprep.subr.bf16.mxu0 0
        %2191 = vmatpush1.bf16.msra.mxu0 0
        %2192 = vmatprep.subr.bf16.mxu0 0
        %2193 = vmatpush1.bf16.msra.mxu0 0
        %2194 = vmatprep.subr.bf16.mxu0 0
        %2195 = vmatpush1.bf16.msra.mxu0 0
        %2196 = vmatprep.subr.bf16.mxu0 0
        %2197 = vmatpush1.bf16.msra.mxu0 0
        %2198 = vmatprep.subr.bf16.mxu0 0
        %2199 = vmatpush1.bf16.msra.mxu0 0
        %2200 = vmatprep.subr.bf16.mxu0 0
        %2201 = vmatpush1.bf16.msra.mxu0 0
        %2202 = vmatprep.subr.bf16.mxu0 0
        %2203 = vmatpush1.bf16.msra.mxu0 0
        %2204 = vmatprep.mubr.bf16.mxu0 0
        %2205 = vmatmul.mubr.bf16.gmra.mrb[0].mxu0 %v2143
        %v2206 = vpop.f32.mrb[0].mxu0
        %v2207 = vadd.f32 0.0, %v2206
        %v2208 = vpop.f32.mrb[0].mxu0
        %v2209 = vadd.f32 0.0, %v2208
        %v2210 = vpop.f32.mrb[0].mxu0
        %v2211 = vadd.f32 0.0, %v2210
        %v2212 = vpop.f32.mrb[0].mxu0
        %v2213 = vadd.f32 0.0, %v2212
        %2214 = vmatprep.mubr.bf16.mxu0 0
        %2215 = vmatmul.mubr.bf16.gmra.mrb[0].mxu0 %v2146
        %v2216 = vpop.f32.mrb[0].mxu0
        %v2217 = vadd.f32 0.0, %v2216
        %v2218 = vpop.f32.mrb[0].mxu0
        %v2219 = vadd.f32 0.0, %v2218
        %v2220 = vpop.f32.mrb[0].mxu0
        %v2221 = vadd.f32 0.0, %v2220
        %v2222 = vpop.f32.mrb[0].mxu0
        %v2223 = vadd.f32 0.0, %v2222
        %2224 = vmatprep.mubr.bf16.mxu0 0
        %2225 = vmatmul.mubr.bf16.gmra.mrb[0].mxu0 %v2149
        %v2226 = vpop.f32.mrb[0].mxu0
        %v2227 = vadd.f32 0.0, %v2226
        %v2228 = vpop.f32.mrb[0].mxu0
        %v2229 = vadd.f32 0.0, %v2228
        %v2230 = vpop.f32.mrb[0].mxu0
        %v2231 = vadd.f32 0.0, %v2230
        %v2232 = vpop.f32.mrb[0].mxu0
        %v2233 = vadd.f32 0.0, %v2232
        %2234 = vmatprep.mubr.bf16.mxu0 0
        %2235 = vmatmul.mubr.bf16.gmra.mrb[0].mxu0 %v2152
        %v2236 = vpop.f32.mrb[0].mxu0
        %v2237 = vadd.f32 0.0, %v2236
        %v2238 = vpop.f32.mrb[0].mxu0
        %v2239 = vadd.f32 0.0, %v2238
        %v2240 = vpop.f32.mrb[0].mxu0
        %v2241 = vadd.f32 0.0, %v2240
        %v2242 = vpop.f32.mrb[0].mxu0
        %v2243 = vadd.f32 0.0, %v2242
        %2244 = vmatprep.mubr.bf16.mxu0 0
        %2245 = vmatmul.mubr.bf16.gmra.mrb[0].mxu0 %v2155
        %v2246 = vpop.f32.mrb[0].mxu0
        %v2247 = vadd.f32 0.0, %v2246
        %v2248 = vpop.f32.mrb[0].mxu0
        %v2249 = vadd.f32 0.0, %v2248
        %v2250 = vpop.f32.mrb[0].mxu0
        %v2251 = vadd.f32 0.0, %v2250
        %v2252 = vpop.f32.mrb[0].mxu0
        %v2253 = vadd.f32 0.0, %v2252
        %2254 = vmatprep.mubr.bf16.mxu0 0
        %2255 = vmatmul.mubr.bf16.gmra.mrb[0].mxu0 %v2158
        %v2256 = vpop.f32.mrb[0].mxu0
        %v2257 = vadd.f32 0.0, %v2256
        %v2258 = vpop.f32.mrb[0].mxu0
        %v2259 = vadd.f32 0.0, %v2258
        %v2260 = vpop.f32.mrb[0].mxu0
        %v2261 = vadd.f32 0.0, %v2260
        %v2262 = vpop.f32.mrb[0].mxu0
        %v2263 = vadd.f32 0.0, %v2262
        %2264 = vmatprep.mubr.bf16.mxu0 0
        %2265 = vmatmul.mubr.bf16.gmra.mrb[0].mxu0 %v2161
        %v2266 = vpop.f32.mrb[0].mxu0
        %v2267 = vadd.f32 0.0, %v2266
        %v2268 = vpop.f32.mrb[0].mxu0
        %v2269 = vadd.f32 0.0, %v2268
        %v2270 = vpop.f32.mrb[0].mxu0
        %v2271 = vadd.f32 0.0, %v2270
        %v2272 = vpop.f32.mrb[0].mxu0
        %v2273 = vadd.f32 0.0, %v2272
        %2274 = vmatprep.mubr.bf16.mxu0 0
        %2275 = vmatmul.mubr.bf16.gmra.mrb[0].mxu0 %v2164
        %v2276 = vpop.f32.mrb[0].mxu0
        %v2277 = vadd.f32 0.0, %v2276
        %v2278 = vpop.f32.mrb[0].mxu0
        %v2279 = vadd.f32 0.0, %v2278
        %v2280 = vpop.f32.mrb[0].mxu0
        %v2281 = vadd.f32 0.0, %v2280
        %v2282 = vpop.f32.mrb[0].mxu0
        %v2283 = vadd.f32 0.0, %v2282
        %2284 = vdwg.mxu0
        %v2285 = vadd.f32 %v2037, %v2207
        %v2286 = vadd.f32 %v2038, %v2209
        %v2287 = vadd.f32 %v2039, %v2211
        %v2288 = vadd.f32 %v2040, %v2213
        %v2289 = vadd.f32 %v2041, %v2217
        %v2290 = vadd.f32 %v2042, %v2219
        %v2291 = vadd.f32 %v2043, %v2221
        %v2292 = vadd.f32 %v2044, %v2223
        %v2293 = vadd.f32 %v2045, %v2227
        %v2294 = vadd.f32 %v2046, %v2229
        %v2295 = vadd.f32 %v2047, %v2231
        %v2296 = vadd.f32 %v2048, %v2233
        %v2297 = vadd.f32 %v2049, %v2237
        %v2298 = vadd.f32 %v2050, %v2239
        %v2299 = vadd.f32 %v2051, %v2241
        %v2300 = vadd.f32 %v2052, %v2243
        %v2301 = vadd.f32 %v2053, %v2247
        %v2302 = vadd.f32 %v2054, %v2249
        %v2303 = vadd.f32 %v2055, %v2251
        %v2304 = vadd.f32 %v2056, %v2253
        %v2305 = vadd.f32 %v2057, %v2257
        %v2306 = vadd.f32 %v2058, %v2259
        %v2307 = vadd.f32 %v2059, %v2261
        %v2308 = vadd.f32 %v2060, %v2263
        %v2309 = vadd.f32 %v2061, %v2267
        %v2310 = vadd.f32 %v2062, %v2269
        %v2311 = vadd.f32 %v2063, %v2271
        %v2312 = vadd.f32 %v2064, %v2273
        %v2313 = vadd.f32 %v2065, %v2277
        %v2314 = vadd.f32 %v2066, %v2279
        %v2315 = vadd.f32 %v2067, %v2281
        %v2316 = vadd.f32 %v2068, %v2283
        %v2317 = vld [vmem:[%s379] sm:$0xf]
        %s2318 = scalar_lea.vmem %s2, 512
        %v2319 = vld [vmem:[%s2318] sm:$0xf]
        %v2320 = vld [vmem:[%s2318 + $0x4] sm:$0xf]
        %v2321 = vld [vmem:[%s2318 + $0x8] sm:$0xf]
        %v2322 = vld [vmem:[%s2318 + $0xc] sm:$0xf]
        %v2323 = vld [vmem:[%s2318 + $0x10] sm:$0xf]
        %v2324 = vld [vmem:[%s2318 + $0x14] sm:$0xf]
        %v2325 = vld [vmem:[%s2318 + $0x18] sm:$0xf]
        %v2326 = vld [vmem:[%s2318 + $0x1c] sm:$0xf]
        %v2327 = vld [vmem:[%s2318 + $0x20] sm:$0xf]
        %v2328 = vld [vmem:[%s2318 + $0x24] sm:$0xf]
        %v2329 = vld [vmem:[%s2318 + $0x28] sm:$0xf]
        %v2330 = vld [vmem:[%s2318 + $0x2c] sm:$0xf]
        %v2331 = vld [vmem:[%s2318 + $0x30] sm:$0xf]
        %v2332 = vld [vmem:[%s2318 + $0x34] sm:$0xf]
        %v2333 = vld [vmem:[%s2318 + $0x38] sm:$0xf]
        %v2334 = vld [vmem:[%s2318 + $0x3c] sm:$0xf]
        %v2351 = vunpack.c.l.b16 %v2319
        %v2352 = vunpack.c.l.b16 %v2320
        %v2353 = vunpack.c.l.b16 %v2321
        %v2354 = vunpack.c.l.b16 %v2322
        %v2355 = vunpack.c.l.b16 %v2323
        %v2356 = vunpack.c.l.b16 %v2324
        %v2357 = vunpack.c.l.b16 %v2325
        %v2358 = vunpack.c.l.b16 %v2326
        %v2359 = vunpack.c.l.b16 %v2327
        %v2360 = vunpack.c.l.b16 %v2328
        %v2361 = vunpack.c.l.b16 %v2329
        %v2362 = vunpack.c.l.b16 %v2330
        %v2363 = vunpack.c.l.b16 %v2331
        %v2364 = vunpack.c.l.b16 %v2332
        %v2365 = vunpack.c.l.b16 %v2333
        %v2366 = vunpack.c.l.b16 %v2334
        %v2367 = vpack.c.b16 %v2352, %v2351
        %v2368 = vpack.c.b16 %v2354, %v2353
        %v2369 = vpack.c.b16 %v2356, %v2355
        %v2370 = vpack.c.b16 %v2358, %v2357
        %v2371 = vpack.c.b16 %v2360, %v2359
        %v2372 = vpack.c.b16 %v2362, %v2361
        %v2373 = vpack.c.b16 %v2364, %v2363
        %v2374 = vpack.c.b16 %v2366, %v2365
        %v2377 = vunpack.c.l.s4 1983009808
        %v2378 = vunpack.c.0.s8 %v2377
        %v2379 = vlaneseq
        %v2380 = vshrl.u32 %v2379, 7
        %v2381 = vsub.s32 %v2378, %v2380
        %v2382 = vrot.slane %v2317, %v2381
        %v2383 = vcombine.high %v2382, %v2382
        %2384 = vrot.lane.b32.xlu0 %v2382, 90
        %v2385 = vpop.permute.xlu0 %2384
        %2386 = vrot.lane.b32.xlu0 %v2383, 90
        %v2387 = vpop.permute.xlu0 %2386
        %vm2388 = vcmask 736256
        %v2389 = vsel %vm2388, %v2385, %v2387
        %v2391 = vsel %vm501, %v2367, 0
        %v2394 = vsel %vm501, %v2368, 0
        %v2397 = vsel %vm501, %v2369, 0
        %v2400 = vsel %vm501, %v2370, 0
        %v2403 = vsel %vm501, %v2371, 0
        %v2406 = vsel %vm501, %v2372, 0
        %v2409 = vsel %vm501, %v2373, 0
        %v2412 = vsel %vm501, %v2374, 0
        %v2415 = vsel %vm526, %v2389, 0
        %v2418 = vsel %vm526, %v2387, 0
        %2420 = vmatprep.subr.bf16.mxu0 %v2418
        %2421 = vmatpush1.bf16.msra.mxu0 %v2415
        %2422 = vmatprep.subr.bf16.mxu0 0
        %2423 = vmatpush1.bf16.msra.mxu0 0
        %2424 = vmatprep.subr.bf16.mxu0 0
        %2425 = vmatpush1.bf16.msra.mxu0 0
        %2426 = vmatprep.subr.bf16.mxu0 0
        %2427 = vmatpush1.bf16.msra.mxu0 0
        %2428 = vmatprep.subr.bf16.mxu0 0
        %2429 = vmatpush1.bf16.msra.mxu0 0
        %2430 = vmatprep.subr.bf16.mxu0 0
        %2431 = vmatpush1.bf16.msra.mxu0 0
        %2432 = vmatprep.subr.bf16.mxu0 0
        %2433 = vmatpush1.bf16.msra.mxu0 0
        %2434 = vmatprep.subr.bf16.mxu0 0
        %2435 = vmatpush1.bf16.msra.mxu0 0
        %2436 = vmatprep.subr.bf16.mxu0 0
        %2437 = vmatpush1.bf16.msra.mxu0 0
        %2438 = vmatprep.subr.bf16.mxu0 0
        %2439 = vmatpush1.bf16.msra.mxu0 0
        %2440 = vmatprep.subr.bf16.mxu0 0
        %2441 = vmatpush1.bf16.msra.mxu0 0
        %2442 = vmatprep.subr.bf16.mxu0 0
        %2443 = vmatpush1.bf16.msra.mxu0 0
        %2444 = vmatprep.subr.bf16.mxu0 0
        %2445 = vmatpush1.bf16.msra.mxu0 0
        %2446 = vmatprep.subr.bf16.mxu0 0
        %2447 = vmatpush1.bf16.msra.mxu0 0
        %2448 = vmatprep.subr.bf16.mxu0 0
        %2449 = vmatpush1.bf16.msra.mxu0 0
        %2450 = vmatprep.subr.bf16.mxu0 0
        %2451 = vmatpush1.bf16.msra.mxu0 0
        %2452 = vmatprep.mubr.bf16.mxu0 0
        %2453 = vmatmul.mubr.bf16.gmra.mrb[0].mxu0 %v2391
        %v2454 = vpop.f32.mrb[0].mxu0
        %v2455 = vadd.f32 0.0, %v2454
        %v2456 = vpop.f32.mrb[0].mxu0
        %v2457 = vadd.f32 0.0, %v2456
        %v2458 = vpop.f32.mrb[0].mxu0
        %v2459 = vadd.f32 0.0, %v2458
        %v2460 = vpop.f32.mrb[0].mxu0
        %v2461 = vadd.f32 0.0, %v2460
        %2462 = vmatprep.mubr.bf16.mxu0 0
        %2463 = vmatmul.mubr.bf16.gmra.mrb[0].mxu0 %v2394
        %v2464 = vpop.f32.mrb[0].mxu0
        %v2465 = vadd.f32 0.0, %v2464
        %v2466 = vpop.f32.mrb[0].mxu0
        %v2467 = vadd.f32 0.0, %v2466
        %v2468 = vpop.f32.mrb[0].mxu0
        %v2469 = vadd.f32 0.0, %v2468
        %v2470 = vpop.f32.mrb[0].mxu0
        %v2471 = vadd.f32 0.0, %v2470
        %2472 = vmatprep.mubr.bf16.mxu0 0
        %2473 = vmatmul.mubr.bf16.gmra.mrb[0].mxu0 %v2397
        %v2474 = vpop.f32.mrb[0].mxu0
        %v2475 = vadd.f32 0.0, %v2474
        %v2476 = vpop.f32.mrb[0].mxu0
        %v2477 = vadd.f32 0.0, %v2476
        %v2478 = vpop.f32.mrb[0].mxu0
        %v2479 = vadd.f32 0.0, %v2478
        %v2480 = vpop.f32.mrb[0].mxu0
        %v2481 = vadd.f32 0.0, %v2480
        %2482 = vmatprep.mubr.bf16.mxu0 0
        %2483 = vmatmul.mubr.bf16.gmra.mrb[0].mxu0 %v2400
        %v2484 = vpop.f32.mrb[0].mxu0
        %v2485 = vadd.f32 0.0, %v2484
        %v2486 = vpop.f32.mrb[0].mxu0
        %v2487 = vadd.f32 0.0, %v2486
        %v2488 = vpop.f32.mrb[0].mxu0
        %v2489 = vadd.f32 0.0, %v2488
        %v2490 = vpop.f32.mrb[0].mxu0
        %v2491 = vadd.f32 0.0, %v2490
        %2492 = vmatprep.mubr.bf16.mxu0 0
        %2493 = vmatmul.mubr.bf16.gmra.mrb[0].mxu0 %v2403
        %v2494 = vpop.f32.mrb[0].mxu0
        %v2495 = vadd.f32 0.0, %v2494
        %v2496 = vpop.f32.mrb[0].mxu0
        %v2497 = vadd.f32 0.0, %v2496
        %v2498 = vpop.f32.mrb[0].mxu0
        %v2499 = vadd.f32 0.0, %v2498
        %v2500 = vpop.f32.mrb[0].mxu0
        %v2501 = vadd.f32 0.0, %v2500
        %2502 = vmatprep.mubr.bf16.mxu0 0
        %2503 = vmatmul.mubr.bf16.gmra.mrb[0].mxu0 %v2406
        %v2504 = vpop.f32.mrb[0].mxu0
        %v2505 = vadd.f32 0.0, %v2504
        %v2506 = vpop.f32.mrb[0].mxu0
        %v2507 = vadd.f32 0.0, %v2506
        %v2508 = vpop.f32.mrb[0].mxu0
        %v2509 = vadd.f32 0.0, %v2508
        %v2510 = vpop.f32.mrb[0].mxu0
        %v2511 = vadd.f32 0.0, %v2510
        %2512 = vmatprep.mubr.bf16.mxu0 0
        %2513 = vmatmul.mubr.bf16.gmra.mrb[0].mxu0 %v2409
        %v2514 = vpop.f32.mrb[0].mxu0
        %v2515 = vadd.f32 0.0, %v2514
        %v2516 = vpop.f32.mrb[0].mxu0
        %v2517 = vadd.f32 0.0, %v2516
        %v2518 = vpop.f32.mrb[0].mxu0
        %v2519 = vadd.f32 0.0, %v2518
        %v2520 = vpop.f32.mrb[0].mxu0
        %v2521 = vadd.f32 0.0, %v2520
        %2522 = vmatprep.mubr.bf16.mxu0 0
        %2523 = vmatmul.mubr.bf16.gmra.mrb[0].mxu0 %v2412
        %v2524 = vpop.f32.mrb[0].mxu0
        %v2525 = vadd.f32 0.0, %v2524
        %v2526 = vpop.f32.mrb[0].mxu0
        %v2527 = vadd.f32 0.0, %v2526
        %v2528 = vpop.f32.mrb[0].mxu0
        %v2529 = vadd.f32 0.0, %v2528
        %v2530 = vpop.f32.mrb[0].mxu0
        %v2531 = vadd.f32 0.0, %v2530
        %2532 = vdwg.mxu0
        %v2533 = vadd.f32 %v2285, %v2455
        %v2534 = vadd.f32 %v2286, %v2457
        %v2535 = vadd.f32 %v2287, %v2459
        %v2536 = vadd.f32 %v2288, %v2461
        %v2537 = vadd.f32 %v2289, %v2465
        %v2538 = vadd.f32 %v2290, %v2467
        %v2539 = vadd.f32 %v2291, %v2469
        %v2540 = vadd.f32 %v2292, %v2471
        %v2541 = vadd.f32 %v2293, %v2475
        %v2542 = vadd.f32 %v2294, %v2477
        %v2543 = vadd.f32 %v2295, %v2479
        %v2544 = vadd.f32 %v2296, %v2481
        %v2545 = vadd.f32 %v2297, %v2485
        %v2546 = vadd.f32 %v2298, %v2487
        %v2547 = vadd.f32 %v2299, %v2489
        %v2548 = vadd.f32 %v2300, %v2491
        %v2549 = vadd.f32 %v2301, %v2495
        %v2550 = vadd.f32 %v2302, %v2497
        %v2551 = vadd.f32 %v2303, %v2499
        %v2552 = vadd.f32 %v2304, %v2501
        %v2553 = vadd.f32 %v2305, %v2505
        %v2554 = vadd.f32 %v2306, %v2507
        %v2555 = vadd.f32 %v2307, %v2509
        %v2556 = vadd.f32 %v2308, %v2511
        %v2557 = vadd.f32 %v2309, %v2515
        %v2558 = vadd.f32 %v2310, %v2517
        %v2559 = vadd.f32 %v2311, %v2519
        %v2560 = vadd.f32 %v2312, %v2521
        %v2561 = vadd.f32 %v2313, %v2525
        %v2562 = vadd.f32 %v2314, %v2527
        %v2563 = vadd.f32 %v2315, %v2529
        %v2564 = vadd.f32 %v2316, %v2531
        %v2565 = vld [vmem:[%s3] sm:$0xff]
        %v2566 = vld [vmem:[%s3 + $0x8] sm:$0xff]
        %v2567 = vld [vmem:[%s3 + $0x10] sm:$0xff]
        %v2568 = vld [vmem:[%s3 + $0x18] sm:$0xff]
        %v2569 = vld [vmem:[%s3 + $0x20] sm:$0xff]
        %v2570 = vld [vmem:[%s3 + $0x28] sm:$0xff]
        %v2571 = vld [vmem:[%s3 + $0x30] sm:$0xff]
        %v2572 = vld [vmem:[%s3 + $0x38] sm:$0xff]
        %v2573 = vld [vmem:[%s3 + $0x40] sm:$0xff]
        %v2574 = vld [vmem:[%s3 + $0x48] sm:$0xff]
        %v2575 = vld [vmem:[%s3 + $0x50] sm:$0xff]
        %v2576 = vld [vmem:[%s3 + $0x58] sm:$0xff]
        %v2577 = vld [vmem:[%s3 + $0x60] sm:$0xff]
        %v2578 = vld [vmem:[%s3 + $0x68] sm:$0xff]
        %v2579 = vld [vmem:[%s3 + $0x70] sm:$0xff]
        %v2580 = vld [vmem:[%s3 + $0x78] sm:$0xff]
        %2582 = vset.pattern.permute.xlu0 0
        %2583 = vperm.xlu0 %2582, %v2565
        %v2584 = vpop.permute.xlu0 %2583
        %2587 = vset.pattern.permute.xlu0 0
        %2588 = vperm.xlu0 %2587, %v2566
        %v2589 = vpop.permute.xlu0 %2588
        %2592 = vset.pattern.permute.xlu0 0
        %2593 = vperm.xlu0 %2592, %v2567
        %v2594 = vpop.permute.xlu0 %2593
        %2597 = vset.pattern.permute.xlu0 0
        %2598 = vperm.xlu0 %2597, %v2568
        %v2599 = vpop.permute.xlu0 %2598
        %2602 = vset.pattern.permute.xlu0 0
        %2603 = vperm.xlu0 %2602, %v2569
        %v2604 = vpop.permute.xlu0 %2603
        %2607 = vset.pattern.permute.xlu0 0
        %2608 = vperm.xlu0 %2607, %v2570
        %v2609 = vpop.permute.xlu0 %2608
        %2612 = vset.pattern.permute.xlu0 0
        %2613 = vperm.xlu0 %2612, %v2571
        %v2614 = vpop.permute.xlu0 %2613
        %2617 = vset.pattern.permute.xlu0 0
        %2618 = vperm.xlu0 %2617, %v2572
        %v2619 = vpop.permute.xlu0 %2618
        %2622 = vset.pattern.permute.xlu0 0
        %2623 = vperm.xlu0 %2622, %v2573
        %v2624 = vpop.permute.xlu0 %2623
        %2627 = vset.pattern.permute.xlu0 0
        %2628 = vperm.xlu0 %2627, %v2574
        %v2629 = vpop.permute.xlu0 %2628
        %2632 = vset.pattern.permute.xlu0 0
        %2633 = vperm.xlu0 %2632, %v2575
        %v2634 = vpop.permute.xlu0 %2633
        %2637 = vset.pattern.permute.xlu0 0
        %2638 = vperm.xlu0 %2637, %v2576
        %v2639 = vpop.permute.xlu0 %2638
        %2642 = vset.pattern.permute.xlu0 0
        %2643 = vperm.xlu0 %2642, %v2577
        %v2644 = vpop.permute.xlu0 %2643
        %2647 = vset.pattern.permute.xlu0 0
        %2648 = vperm.xlu0 %2647, %v2578
        %v2649 = vpop.permute.xlu0 %2648
        %2652 = vset.pattern.permute.xlu0 0
        %2653 = vperm.xlu0 %2652, %v2579
        %v2654 = vpop.permute.xlu0 %2653
        %2657 = vset.pattern.permute.xlu0 0
        %2658 = vperm.xlu0 %2657, %v2580
        %v2659 = vpop.permute.xlu0 %2658
        %v2661 = vadd.f32 %v2533, %v2584
        %v2662 = vadd.f32 %v2534, %v2584
        %v2663 = vadd.f32 %v2535, %v2589
        %v2664 = vadd.f32 %v2536, %v2589
        %v2665 = vadd.f32 %v2537, %v2594
        %v2666 = vadd.f32 %v2538, %v2594
        %v2667 = vadd.f32 %v2539, %v2599
        %v2668 = vadd.f32 %v2540, %v2599
        %v2669 = vadd.f32 %v2541, %v2604
        %v2670 = vadd.f32 %v2542, %v2604
        %v2671 = vadd.f32 %v2543, %v2609
        %v2672 = vadd.f32 %v2544, %v2609
        %v2673 = vadd.f32 %v2545, %v2614
        %v2674 = vadd.f32 %v2546, %v2614
        %v2675 = vadd.f32 %v2547, %v2619
        %v2676 = vadd.f32 %v2548, %v2619
        %v2677 = vadd.f32 %v2549, %v2624
        %v2678 = vadd.f32 %v2550, %v2624
        %v2679 = vadd.f32 %v2551, %v2629
        %v2680 = vadd.f32 %v2552, %v2629
        %v2681 = vadd.f32 %v2553, %v2634
        %v2682 = vadd.f32 %v2554, %v2634
        %v2683 = vadd.f32 %v2555, %v2639
        %v2684 = vadd.f32 %v2556, %v2639
        %v2685 = vadd.f32 %v2557, %v2644
        %v2686 = vadd.f32 %v2558, %v2644
        %v2687 = vadd.f32 %v2559, %v2649
        %v2688 = vadd.f32 %v2560, %v2649
        %v2689 = vadd.f32 %v2561, %v2654
        %v2690 = vadd.f32 %v2562, %v2654
        %v2691 = vadd.f32 %v2563, %v2659
        %v2692 = vadd.f32 %v2564, %v2659
        %v2693 = vmax.f32 %v2661, 0.0
        %v2694 = vmax.f32 %v2662, 0.0
        %v2695 = vmax.f32 %v2663, 0.0
        %v2696 = vmax.f32 %v2664, 0.0
        %v2697 = vmax.f32 %v2665, 0.0
        %v2698 = vmax.f32 %v2666, 0.0
        %v2699 = vmax.f32 %v2667, 0.0
        %v2700 = vmax.f32 %v2668, 0.0
        %v2701 = vmax.f32 %v2669, 0.0
        %v2702 = vmax.f32 %v2670, 0.0
        %v2703 = vmax.f32 %v2671, 0.0
        %v2704 = vmax.f32 %v2672, 0.0
        %v2705 = vmax.f32 %v2673, 0.0
        %v2706 = vmax.f32 %v2674, 0.0
        %v2707 = vmax.f32 %v2675, 0.0
        %v2708 = vmax.f32 %v2676, 0.0
        %v2709 = vmax.f32 %v2677, 0.0
        %v2710 = vmax.f32 %v2678, 0.0
        %v2711 = vmax.f32 %v2679, 0.0
        %v2712 = vmax.f32 %v2680, 0.0
        %v2713 = vmax.f32 %v2681, 0.0
        %v2714 = vmax.f32 %v2682, 0.0
        %v2715 = vmax.f32 %v2683, 0.0
        %v2716 = vmax.f32 %v2684, 0.0
        %v2717 = vmax.f32 %v2685, 0.0
        %v2718 = vmax.f32 %v2686, 0.0
        %v2719 = vmax.f32 %v2687, 0.0
        %v2720 = vmax.f32 %v2688, 0.0
        %v2721 = vmax.f32 %v2689, 0.0
        %v2722 = vmax.f32 %v2690, 0.0
        %v2723 = vmax.f32 %v2691, 0.0
        %v2724 = vmax.f32 %v2692, 0.0
        %v2725 = vld [vmem:[#allocation2] sm:$0xff]
        %v2726 = vld [vmem:[#allocation2 + $0x8] sm:$0xff]
        %v2727 = vld [vmem:[#allocation2 + $0x10] sm:$0xff]
        %v2728 = vld [vmem:[#allocation2 + $0x18] sm:$0xff]
        %v2729 = vld [vmem:[#allocation2 + $0x20] sm:$0xff]
        %v2730 = vld [vmem:[#allocation2 + $0x28] sm:$0xff]
        %v2731 = vld [vmem:[#allocation2 + $0x30] sm:$0xff]
        %v2732 = vld [vmem:[#allocation2 + $0x38] sm:$0xff]
        %v2733 = vld [vmem:[#allocation2 + $0x40] sm:$0xff]
        %v2734 = vld [vmem:[#allocation2 + $0x48] sm:$0xff]
        %v2735 = vld [vmem:[#allocation2 + $0x50] sm:$0xff]
        %v2736 = vld [vmem:[#allocation2 + $0x58] sm:$0xff]
        %v2737 = vld [vmem:[#allocation2 + $0x60] sm:$0xff]
        %v2738 = vld [vmem:[#allocation2 + $0x68] sm:$0xff]
        %v2739 = vld [vmem:[#allocation2 + $0x70] sm:$0xff]
        %v2740 = vld [vmem:[#allocation2 + $0x78] sm:$0xff]
        %v2741 = vld [vmem:[%s1] sm:$0x3]
        %v2743 = vlaneseq
        %v2744 = vshrl.u32 %v2743, 7
        %v2745 = vsub.s32 0, %v2744
        %v2746 = vrot.slane %v2741, %v2745
        %v2747 = vlaneseq
        %v2748 = vshrl.u32 %v2747, 7
        %v2749 = vsub.s32 1, %v2748
        %v2750 = vrot.slane %v2741, %v2749
        %v2753 = vmul.f32 %v2693, %v2746
        %v2754 = vmul.f32 %v2694, %v2750
        %v2755 = vmul.f32 %v2695, %v2746
        %v2756 = vmul.f32 %v2696, %v2750
        %v2757 = vmul.f32 %v2697, %v2746
        %v2758 = vmul.f32 %v2698, %v2750
        %v2759 = vmul.f32 %v2699, %v2746
        %v2760 = vmul.f32 %v2700, %v2750
        %v2761 = vmul.f32 %v2701, %v2746
        %v2762 = vmul.f32 %v2702, %v2750
        %v2763 = vmul.f32 %v2703, %v2746
        %v2764 = vmul.f32 %v2704, %v2750
        %v2765 = vmul.f32 %v2705, %v2746
        %v2766 = vmul.f32 %v2706, %v2750
        %v2767 = vmul.f32 %v2707, %v2746
        %v2768 = vmul.f32 %v2708, %v2750
        %v2769 = vmul.f32 %v2709, %v2746
        %v2770 = vmul.f32 %v2710, %v2750
        %v2771 = vmul.f32 %v2711, %v2746
        %v2772 = vmul.f32 %v2712, %v2750
        %v2773 = vmul.f32 %v2713, %v2746
        %v2774 = vmul.f32 %v2714, %v2750
        %v2775 = vmul.f32 %v2715, %v2746
        %v2776 = vmul.f32 %v2716, %v2750
        %v2777 = vmul.f32 %v2717, %v2746
        %v2778 = vmul.f32 %v2718, %v2750
        %v2779 = vmul.f32 %v2719, %v2746
        %v2780 = vmul.f32 %v2720, %v2750
        %v2781 = vmul.f32 %v2721, %v2746
        %v2782 = vmul.f32 %v2722, %v2750
        %v2783 = vmul.f32 %v2723, %v2746
        %v2784 = vmul.f32 %v2724, %v2750
        %vm2785 = vcmask 130048
        %v2786 = vsel %vm2785, %v2754, 0.0
        %v2787 = vadd.f32 %v2753, %v2786
        %2788 = vadd.xlane.f32.xlu0 %v2787
        %v2789 = vpop.xlane.xlu0 %2788
        %v2790 = vsel %vm2785, %v2756, 0.0
        %v2791 = vadd.f32 %v2755, %v2790
        %2792 = vadd.xlane.f32.xlu0 %v2791
        %v2793 = vpop.xlane.xlu0 %2792
        %v2794 = vsel %vm2785, %v2758, 0.0
        %v2795 = vadd.f32 %v2757, %v2794
        %2796 = vadd.xlane.f32.xlu0 %v2795
        %v2797 = vpop.xlane.xlu0 %2796
        %v2798 = vsel %vm2785, %v2760, 0.0
        %v2799 = vadd.f32 %v2759, %v2798
        %2800 = vadd.xlane.f32.xlu0 %v2799
        %v2801 = vpop.xlane.xlu0 %2800
        %v2802 = vsel %vm2785, %v2762, 0.0
        %v2803 = vadd.f32 %v2761, %v2802
        %2804 = vadd.xlane.f32.xlu0 %v2803
        %v2805 = vpop.xlane.xlu0 %2804
        %v2806 = vsel %vm2785, %v2764, 0.0
        %v2807 = vadd.f32 %v2763, %v2806
        %2808 = vadd.xlane.f32.xlu0 %v2807
        %v2809 = vpop.xlane.xlu0 %2808
        %v2810 = vsel %vm2785, %v2766, 0.0
        %v2811 = vadd.f32 %v2765, %v2810
        %2812 = vadd.xlane.f32.xlu0 %v2811
        %v2813 = vpop.xlane.xlu0 %2812
        %v2814 = vsel %vm2785, %v2768, 0.0
        %v2815 = vadd.f32 %v2767, %v2814
        %2816 = vadd.xlane.f32.xlu0 %v2815
        %v2817 = vpop.xlane.xlu0 %2816
        %v2818 = vsel %vm2785, %v2770, 0.0
        %v2819 = vadd.f32 %v2769, %v2818
        %2820 = vadd.xlane.f32.xlu0 %v2819
        %v2821 = vpop.xlane.xlu0 %2820
        %v2822 = vsel %vm2785, %v2772, 0.0
        %v2823 = vadd.f32 %v2771, %v2822
        %2824 = vadd.xlane.f32.xlu0 %v2823
        %v2825 = vpop.xlane.xlu0 %2824
        %v2826 = vsel %vm2785, %v2774, 0.0
        %v2827 = vadd.f32 %v2773, %v2826
        %2828 = vadd.xlane.f32.xlu0 %v2827
        %v2829 = vpop.xlane.xlu0 %2828
        %v2830 = vsel %vm2785, %v2776, 0.0
        %v2831 = vadd.f32 %v2775, %v2830
        %2832 = vadd.xlane.f32.xlu0 %v2831
        %v2833 = vpop.xlane.xlu0 %2832
        %v2834 = vsel %vm2785, %v2778, 0.0
        %v2835 = vadd.f32 %v2777, %v2834
        %2836 = vadd.xlane.f32.xlu0 %v2835
        %v2837 = vpop.xlane.xlu0 %2836
        %v2838 = vsel %vm2785, %v2780, 0.0
        %v2839 = vadd.f32 %v2779, %v2838
        %2840 = vadd.xlane.f32.xlu0 %v2839
        %v2841 = vpop.xlane.xlu0 %2840
        %v2842 = vsel %vm2785, %v2782, 0.0
        %v2843 = vadd.f32 %v2781, %v2842
        %2844 = vadd.xlane.f32.xlu0 %v2843
        %v2845 = vpop.xlane.xlu0 %2844
        %v2846 = vsel %vm2785, %v2784, 0.0
        %v2847 = vadd.f32 %v2783, %v2846
        %2848 = vadd.xlane.f32.xlu0 %v2847
        %v2849 = vpop.xlane.xlu0 %2848
        %v2850 = vadd.f32 %v2725, %v2789
        %v2851 = vadd.f32 %v2726, %v2793
        %v2852 = vadd.f32 %v2727, %v2797
        %v2853 = vadd.f32 %v2728, %v2801
        %v2854 = vadd.f32 %v2729, %v2805
        %v2855 = vadd.f32 %v2730, %v2809
        %v2856 = vadd.f32 %v2731, %v2813
        %v2857 = vadd.f32 %v2732, %v2817
        %v2858 = vadd.f32 %v2733, %v2821
        %v2859 = vadd.f32 %v2734, %v2825
        %v2860 = vadd.f32 %v2735, %v2829
        %v2861 = vadd.f32 %v2736, %v2833
        %v2862 = vadd.f32 %v2737, %v2837
        %v2863 = vadd.f32 %v2738, %v2841
        %v2864 = vadd.f32 %v2739, %v2845
        %v2865 = vadd.f32 %v2740, %v2849
        %vm2866 = vcmask 7168
        %2867 = vst.msk [vmem:[#allocation2] sm:$0xff] %vm2866, %v2850
        %2868 = vst.msk [vmem:[#allocation2 + $0x8] sm:$0xff] %vm2866, %v2851
        %2869 = vst.msk [vmem:[#allocation2 + $0x10] sm:$0xff] %vm2866, %v2852
        %2870 = vst.msk [vmem:[#allocation2 + $0x18] sm:$0xff] %vm2866, %v2853
        %2871 = vst.msk [vmem:[#allocation2 + $0x20] sm:$0xff] %vm2866, %v2854
        %2872 = vst.msk [vmem:[#allocation2 + $0x28] sm:$0xff] %vm2866, %v2855
        %2873 = vst.msk [vmem:[#allocation2 + $0x30] sm:$0xff] %vm2866, %v2856
        %2874 = vst.msk [vmem:[#allocation2 + $0x38] sm:$0xff] %vm2866, %v2857
        %2875 = vst.msk [vmem:[#allocation2 + $0x40] sm:$0xff] %vm2866, %v2858
        %2876 = vst.msk [vmem:[#allocation2 + $0x48] sm:$0xff] %vm2866, %v2859
        %2877 = vst.msk [vmem:[#allocation2 + $0x50] sm:$0xff] %vm2866, %v2860
        %2878 = vst.msk [vmem:[#allocation2 + $0x58] sm:$0xff] %vm2866, %v2861
        %2879 = vst.msk [vmem:[#allocation2 + $0x60] sm:$0xff] %vm2866, %v2862
        %2880 = vst.msk [vmem:[#allocation2 + $0x68] sm:$0xff] %vm2866, %v2863
        %2881 = vst.msk [vmem:[#allocation2 + $0x70] sm:$0xff] %vm2866, %v2864
        %2882 = vst.msk [vmem:[#allocation2 + $0x78] sm:$0xff] %vm2866, %v2865
        %p2883 = scmp.eq.s32.totalorder %s29, 1
        // Predicated region
        $region57: #{clsnet_forward.1} parent=51 // pred_check
          %p2884 = pneg %p2883
        $region58: #{clsnet_forward.1} parent=51 // pred_check_branch
          %2886 = sbr.rel (%p2884) target = $region60
        $region59: #{clsnet_forward.1} parent=51 // pred_region
          %v2887 = vld [vmem:[#allocation2] sm:$0xff]
          %v2888 = vld [vmem:[#allocation2 + $0x8] sm:$0xff]
          %v2889 = vld [vmem:[#allocation2 + $0x10] sm:$0xff]
          %v2890 = vld [vmem:[#allocation2 + $0x18] sm:$0xff]
          %v2891 = vld [vmem:[#allocation2 + $0x20] sm:$0xff]
          %v2892 = vld [vmem:[#allocation2 + $0x28] sm:$0xff]
          %v2893 = vld [vmem:[#allocation2 + $0x30] sm:$0xff]
          %v2894 = vld [vmem:[#allocation2 + $0x38] sm:$0xff]
          %v2895 = vld [vmem:[#allocation2 + $0x40] sm:$0xff]
          %v2896 = vld [vmem:[#allocation2 + $0x48] sm:$0xff]
          %v2897 = vld [vmem:[#allocation2 + $0x50] sm:$0xff]
          %v2898 = vld [vmem:[#allocation2 + $0x58] sm:$0xff]
          %v2899 = vld [vmem:[#allocation2 + $0x60] sm:$0xff]
          %v2900 = vld [vmem:[#allocation2 + $0x68] sm:$0xff]
          %v2901 = vld [vmem:[#allocation2 + $0x70] sm:$0xff]
          %v2902 = vld [vmem:[#allocation2 + $0x78] sm:$0xff]
          %v2903 = vmul.f32 %v2887, 0.00390625
          %v2904 = vmul.f32 %v2888, 0.00390625
          %v2905 = vmul.f32 %v2889, 0.00390625
          %v2906 = vmul.f32 %v2890, 0.00390625
          %v2907 = vmul.f32 %v2891, 0.00390625
          %v2908 = vmul.f32 %v2892, 0.00390625
          %v2909 = vmul.f32 %v2893, 0.00390625
          %v2910 = vmul.f32 %v2894, 0.00390625
          %v2911 = vmul.f32 %v2895, 0.00390625
          %v2912 = vmul.f32 %v2896, 0.00390625
          %v2913 = vmul.f32 %v2897, 0.00390625
          %v2914 = vmul.f32 %v2898, 0.00390625
          %v2915 = vmul.f32 %v2899, 0.00390625
          %v2916 = vmul.f32 %v2900, 0.00390625
          %v2917 = vmul.f32 %v2901, 0.00390625
          %v2918 = vmul.f32 %v2902, 0.00390625
          %v2919 = vpack.c.bf16 %v2904, %v2903
          %v2920 = vpack.c.bf16 %v2906, %v2905
          %v2921 = vpack.c.bf16 %v2908, %v2907
          %v2922 = vpack.c.bf16 %v2910, %v2909
          %v2923 = vpack.c.bf16 %v2912, %v2911
          %v2924 = vpack.c.bf16 %v2914, %v2913
          %v2925 = vpack.c.bf16 %v2916, %v2915
          %v2926 = vpack.c.bf16 %v2918, %v2917
          %v2927 = vld [vmem:[%s4] sm:$0xf]
          %v2928 = vld [vmem:[%s4 + $0x4] sm:$0xf]
          %v2929 = vld [vmem:[%s4 + $0x8] sm:$0xf]
          %v2930 = vld [vmem:[%s4 + $0xc] sm:$0xf]
          %v2931 = vld [vmem:[%s4 + $0x10] sm:$0xf]
          %v2932 = vld [vmem:[%s4 + $0x14] sm:$0xf]
          %v2933 = vld [vmem:[%s4 + $0x18] sm:$0xf]
          %v2934 = vld [vmem:[%s4 + $0x1c] sm:$0xf]
          %v2935 = vld [vmem:[%s4 + $0x20] sm:$0xf]
          %v2936 = vld [vmem:[%s4 + $0x24] sm:$0xf]
          %v2937 = vld [vmem:[%s4 + $0x28] sm:$0xf]
          %v2938 = vld [vmem:[%s4 + $0x2c] sm:$0xf]
          %v2939 = vld [vmem:[%s4 + $0x30] sm:$0xf]
          %v2940 = vld [vmem:[%s4 + $0x34] sm:$0xf]
          %v2941 = vld [vmem:[%s4 + $0x38] sm:$0xf]
          %v2942 = vld [vmem:[%s4 + $0x3c] sm:$0xf]
          %v2943 = vld [vmem:[%s5] sm:$0xff]
          %v2944 = vld [vmem:[%s5 + $0x8] sm:$0xff]
          %v2945 = vld [vmem:[%s5 + $0x10] sm:$0xff]
          %v2946 = vld [vmem:[%s5 + $0x18] sm:$0xff]
          %v2947 = vld [vmem:[%s5 + $0x20] sm:$0xff]
          %v2948 = vld [vmem:[%s5 + $0x28] sm:$0xff]
          %v2949 = vld [vmem:[%s5 + $0x30] sm:$0xff]
          %v2950 = vld [vmem:[%s5 + $0x38] sm:$0xff]
          %v2951 = vld [vmem:[%s5 + $0x40] sm:$0xff]
          %v2952 = vld [vmem:[%s5 + $0x48] sm:$0xff]
          %v2953 = vld [vmem:[%s5 + $0x50] sm:$0xff]
          %v2954 = vld [vmem:[%s5 + $0x58] sm:$0xff]
          %v2955 = vld [vmem:[%s5 + $0x60] sm:$0xff]
          %v2956 = vld [vmem:[%s5 + $0x68] sm:$0xff]
          %v2957 = vld [vmem:[%s5 + $0x70] sm:$0xff]
          %v2958 = vld [vmem:[%s5 + $0x78] sm:$0xff]
          %v2975 = vunpack.c.l.b16 %v2927
          %v2976 = vunpack.c.l.b16 %v2928
          %v2977 = vunpack.c.l.b16 %v2929
          %v2978 = vunpack.c.l.b16 %v2930
          %v2979 = vunpack.c.l.b16 %v2931
          %v2980 = vunpack.c.l.b16 %v2932
          %v2981 = vunpack.c.l.b16 %v2933
          %v2982 = vunpack.c.l.b16 %v2934
          %v2983 = vunpack.c.l.b16 %v2935
          %v2984 = vunpack.c.l.b16 %v2936
          %v2985 = vunpack.c.l.b16 %v2937
          %v2986 = vunpack.c.l.b16 %v2938
          %v2987 = vunpack.c.l.b16 %v2939
          %v2988 = vunpack.c.l.b16 %v2940
          %v2989 = vunpack.c.l.b16 %v2941
          %v2990 = vunpack.c.l.b16 %v2942
          %v2991 = vpack.c.b16 %v2976, %v2975
          %v2992 = vpack.c.b16 %v2978, %v2977
          %v2993 = vpack.c.b16 %v2980, %v2979
          %v2994 = vpack.c.b16 %v2982, %v2981
          %v2995 = vpack.c.b16 %v2984, %v2983
          %v2996 = vpack.c.b16 %v2986, %v2985
          %v2997 = vpack.c.b16 %v2988, %v2987
          %v2998 = vpack.c.b16 %v2990, %v2989
          %3007 = vmatprep.subr.bf16.mxu0 0
          %3008 = vmatpush1.bf16.msra.mxu0 %v2919
          %3009 = vmatprep.subr.bf16.mxu0 0
          %3010 = vmatpush1.bf16.msra.mxu0 %v2920
          %3011 = vmatprep.subr.bf16.mxu0 0
          %3012 = vmatpush1.bf16.msra.mxu0 %v2921
          %3013 = vmatprep.subr.bf16.mxu0 0
          %3014 = vmatpush1.bf16.msra.mxu0 %v2922
          %3015 = vmatprep.subr.bf16.mxu0 0
          %3016 = vmatpush1.bf16.msra.mxu0 %v2923
          %3017 = vmatprep.subr.bf16.mxu0 0
          %3018 = vmatpush1.bf16.msra.mxu0 %v2924
          %3019 = vmatprep.subr.bf16.mxu0 0
          %3020 = vmatpush1.bf16.msra.mxu0 %v2925
          %3021 = vmatprep.subr.bf16.mxu0 0
          %3022 = vmatpush1.bf16.msra.mxu0 %v2926
          %3023 = vmatprep.subr.bf16.mxu0 0
          %3024 = vmatpush1.bf16.msra.mxu0 0
          %3025 = vmatprep.subr.bf16.mxu0 0
          %3026 = vmatpush1.bf16.msra.mxu0 0
          %3027 = vmatprep.subr.bf16.mxu0 0
          %3028 = vmatpush1.bf16.msra.mxu0 0
          %3029 = vmatprep.subr.bf16.mxu0 0
          %3030 = vmatpush1.bf16.msra.mxu0 0
          %3031 = vmatprep.subr.bf16.mxu0 0
          %3032 = vmatpush1.bf16.msra.mxu0 0
          %3033 = vmatprep.subr.bf16.mxu0 0
          %3034 = vmatpush1.bf16.msra.mxu0 0
          %3035 = vmatprep.subr.bf16.mxu0 0
          %3036 = vmatpush1.bf16.msra.mxu0 0
          %3037 = vmatprep.subr.bf16.mxu0 0
          %3038 = vmatpush1.bf16.msra.mxu0 0
          %3039 = vmatprep.mubr.bf16.mxu0 0
          %3040 = vmatmul.mubr.bf16.gmra.mrb[0].mxu0 %v2991
          %v3041 = vpop.f32.mrb[0].mxu0
          %v3042 = vadd.f32 %v2943, %v3041
          %v3043 = vpop.f32.mrb[0].mxu0
          %v3044 = vpop.f32.mrb[0].mxu0
          %v3045 = vadd.f32 %v2944, %v3044
          %v3046 = vpop.f32.mrb[0].mxu0
          %3047 = vmatprep.mubr.bf16.mxu0 0
          %3048 = vmatmul.mubr.bf16.gmra.mrb[0].mxu0 %v2992
          %v3049 = vpop.f32.mrb[0].mxu0
          %v3050 = vadd.f32 %v2945, %v3049
          %v3051 = vpop.f32.mrb[0].mxu0
          %v3052 = vpop.f32.mrb[0].mxu0
          %v3053 = vadd.f32 %v2946, %v3052
          %v3054 = vpop.f32.mrb[0].mxu0
          %3055 = vmatprep.mubr.bf16.mxu0 0
          %3056 = vmatmul.mubr.bf16.gmra.mrb[0].mxu0 %v2993
          %v3057 = vpop.f32.mrb[0].mxu0
          %v3058 = vadd.f32 %v2947, %v3057
          %v3059 = vpop.f32.mrb[0].mxu0
          %v3060 = vpop.f32.mrb[0].mxu0
          %v3061 = vadd.f32 %v2948, %v3060
          %v3062 = vpop.f32.mrb[0].mxu0
          %3063 = vmatprep.mubr.bf16.mxu0 0
          %3064 = vmatmul.mubr.bf16.gmra.mrb[0].mxu0 %v2994
          %v3065 = vpop.f32.mrb[0].mxu0
          %v3066 = vadd.f32 %v2949, %v3065
          %v3067 = vpop.f32.mrb[0].mxu0
          %v3068 = vpop.f32.mrb[0].mxu0
          %v3069 = vadd.f32 %v2950, %v3068
          %v3070 = vpop.f32.mrb[0].mxu0
          %3071 = vmatprep.mubr.bf16.mxu0 0
          %3072 = vmatmul.mubr.bf16.gmra.mrb[0].mxu0 %v2995
          %v3073 = vpop.f32.mrb[0].mxu0
          %v3074 = vadd.f32 %v2951, %v3073
          %v3075 = vpop.f32.mrb[0].mxu0
          %v3076 = vpop.f32.mrb[0].mxu0
          %v3077 = vadd.f32 %v2952, %v3076
          %v3078 = vpop.f32.mrb[0].mxu0
          %3079 = vmatprep.mubr.bf16.mxu0 0
          %3080 = vmatmul.mubr.bf16.gmra.mrb[0].mxu0 %v2996
          %v3081 = vpop.f32.mrb[0].mxu0
          %v3082 = vadd.f32 %v2953, %v3081
          %v3083 = vpop.f32.mrb[0].mxu0
          %v3084 = vpop.f32.mrb[0].mxu0
          %v3085 = vadd.f32 %v2954, %v3084
          %v3086 = vpop.f32.mrb[0].mxu0
          %3087 = vmatprep.mubr.bf16.mxu0 0
          %3088 = vmatmul.mubr.bf16.gmra.mrb[0].mxu0 %v2997
          %v3089 = vpop.f32.mrb[0].mxu0
          %v3090 = vadd.f32 %v2955, %v3089
          %v3091 = vpop.f32.mrb[0].mxu0
          %v3092 = vpop.f32.mrb[0].mxu0
          %v3093 = vadd.f32 %v2956, %v3092
          %v3094 = vpop.f32.mrb[0].mxu0
          %3095 = vmatprep.mubr.bf16.mxu0 0
          %3096 = vmatmul.mubr.bf16.gmra.mrb[0].mxu0 %v2998
          %v3097 = vpop.f32.mrb[0].mxu0
          %v3098 = vadd.f32 %v2957, %v3097
          %v3099 = vpop.f32.mrb[0].mxu0
          %v3100 = vpop.f32.mrb[0].mxu0
          %v3101 = vadd.f32 %v2958, %v3100
          %v3102 = vpop.f32.mrb[0].mxu0
          %3103 = vdwg.mxu0
          %v3104 = vxor.u32 %v3042, 2147483648
          %v3105 = vxor.u32 %v3045, 2147483648
          %v3106 = vxor.u32 %v3050, 2147483648
          %v3107 = vxor.u32 %v3053, 2147483648
          %v3108 = vxor.u32 %v3058, 2147483648
          %v3109 = vxor.u32 %v3061, 2147483648
          %v3110 = vxor.u32 %v3066, 2147483648
          %v3111 = vxor.u32 %v3069, 2147483648
          %v3112 = vxor.u32 %v3074, 2147483648
          %v3113 = vxor.u32 %v3077, 2147483648
          %v3114 = vxor.u32 %v3082, 2147483648
          %v3115 = vxor.u32 %v3085, 2147483648
          %v3116 = vxor.u32 %v3090, 2147483648
          %v3117 = vxor.u32 %v3093, 2147483648
          %v3118 = vxor.u32 %v3098, 2147483648
          %v3119 = vxor.u32 %v3101, 2147483648
          %v3120 = vmul.f32 %v3104, 1.442695
          %v3121 = vpow.pop %v3120
          %v3122 = vmul.f32 %v3105, 1.442695
          %v3123 = vpow.pop %v3122
          %v3124 = vmul.f32 %v3106, 1.442695
          %v3125 = vpow.pop %v3124
          %v3126 = vmul.f32 %v3107, 1.442695
          %v3127 = vpow.pop %v3126
          %v3128 = vmul.f32 %v3108, 1.442695
          %v3129 = vpow.pop %v3128
          %v3130 = vmul.f32 %v3109, 1.442695
          %v3131 = vpow.pop %v3130
          %v3132 = vmul.f32 %v3110, 1.442695
          %v3133 = vpow.pop %v3132
          %v3134 = vmul.f32 %v3111, 1.442695
          %v3135 = vpow.pop %v3134
          %v3136 = vmul.f32 %v3112, 1.442695
          %v3137 = vpow.pop %v3136
          %v3138 = vmul.f32 %v3113, 1.442695
          %v3139 = vpow.pop %v3138
          %v3140 = vmul.f32 %v3114, 1.442695
          %v3141 = vpow.pop %v3140
          %v3142 = vmul.f32 %v3115, 1.442695
          %v3143 = vpow.pop %v3142
          %v3144 = vmul.f32 %v3116, 1.442695
          %v3145 = vpow.pop %v3144
          %v3146 = vmul.f32 %v3117, 1.442695
          %v3147 = vpow.pop %v3146
          %v3148 = vmul.f32 %v3118, 1.442695
          %v3149 = vpow.pop %v3148
          %v3150 = vmul.f32 %v3119, 1.442695
          %v3151 = vpow.pop %v3150
          %v3152 = vadd.f32 %v3121, 1.0
          %v3153 = vadd.f32 %v3123, 1.0
          %v3154 = vadd.f32 %v3125, 1.0
          %v3155 = vadd.f32 %v3127, 1.0
          %v3156 = vadd.f32 %v3129, 1.0
          %v3157 = vadd.f32 %v3131, 1.0
          %v3158 = vadd.f32 %v3133, 1.0
          %v3159 = vadd.f32 %v3135, 1.0
          %v3160 = vadd.f32 %v3137, 1.0
          %v3161 = vadd.f32 %v3139, 1.0
          %v3162 = vadd.f32 %v3141, 1.0
          %v3163 = vadd.f32 %v3143, 1.0
          %v3164 = vadd.f32 %v3145, 1.0
          %v3165 = vadd.f32 %v3147, 1.0
          %v3166 = vadd.f32 %v3149, 1.0
          %v3167 = vadd.f32 %v3151, 1.0
          %v3168 = vrcp.pop %v3152
          %v3169 = vmul.f32 1.0, %v3168
          %v3170 = vrcp.pop %v3153
          %v3171 = vmul.f32 1.0, %v3170
          %v3172 = vrcp.pop %v3154
          %v3173 = vmul.f32 1.0, %v3172
          %v3174 = vrcp.pop %v3155
          %v3175 = vmul.f32 1.0, %v3174
          %v3176 = vrcp.pop %v3156
          %v3177 = vmul.f32 1.0, %v3176
          %v3178 = vrcp.pop %v3157
          %v3179 = vmul.f32 1.0, %v3178
          %v3180 = vrcp.pop %v3158
          %v3181 = vmul.f32 1.0, %v3180
          %v3182 = vrcp.pop %v3159
          %v3183 = vmul.f32 1.0, %v3182
          %v3184 = vrcp.pop %v3160
          %v3185 = vmul.f32 1.0, %v3184
          %v3186 = vrcp.pop %v3161
          %v3187 = vmul.f32 1.0, %v3186
          %v3188 = vrcp.pop %v3162
          %v3189 = vmul.f32 1.0, %v3188
          %v3190 = vrcp.pop %v3163
          %v3191 = vmul.f32 1.0, %v3190
          %v3192 = vrcp.pop %v3164
          %v3193 = vmul.f32 1.0, %v3192
          %v3194 = vrcp.pop %v3165
          %v3195 = vmul.f32 1.0, %v3194
          %v3196 = vrcp.pop %v3166
          %v3197 = vmul.f32 1.0, %v3196
          %v3198 = vrcp.pop %v3167
          %v3199 = vmul.f32 1.0, %v3198
          %3200 = vst.msk [vmem:[%s389] sm:$0xff] %vm2866, %v3169
          %3201 = vst.msk [vmem:[%s389 + $0x8] sm:$0xff] %vm2866, %v3171
          %3202 = vst.msk [vmem:[%s389 + $0x10] sm:$0xff] %vm2866, %v3173
          %3203 = vst.msk [vmem:[%s389 + $0x18] sm:$0xff] %vm2866, %v3175
          %3204 = vst.msk [vmem:[%s389 + $0x20] sm:$0xff] %vm2866, %v3177
          %3205 = vst.msk [vmem:[%s389 + $0x28] sm:$0xff] %vm2866, %v3179
          %3206 = vst.msk [vmem:[%s389 + $0x30] sm:$0xff] %vm2866, %v3181
          %3207 = vst.msk [vmem:[%s389 + $0x38] sm:$0xff] %vm2866, %v3183
          %3208 = vst.msk [vmem:[%s389 + $0x40] sm:$0xff] %vm2866, %v3185
          %3209 = vst.msk [vmem:[%s389 + $0x48] sm:$0xff] %vm2866, %v3187
          %3210 = vst.msk [vmem:[%s389 + $0x50] sm:$0xff] %vm2866, %v3189
          %3211 = vst.msk [vmem:[%s389 + $0x58] sm:$0xff] %vm2866, %v3191
          %3212 = vst.msk [vmem:[%s389 + $0x60] sm:$0xff] %vm2866, %v3193
          %3213 = vst.msk [vmem:[%s389 + $0x68] sm:$0xff] %vm2866, %v3195
          %3214 = vst.msk [vmem:[%s389 + $0x70] sm:$0xff] %vm2866, %v3197
          %3215 = vst.msk [vmem:[%s389 + $0x78] sm:$0xff] %vm2866, %v3199
          %v3216 = vld [vmem:[%s384] sm:$0xff]
          %v3217 = vld [vmem:[%s384 + $0x8] sm:$0xff]
          %v3218 = vld [vmem:[%s384 + $0x10] sm:$0xff]
          %v3219 = vld [vmem:[%s384 + $0x18] sm:$0xff]
          %v3220 = vld [vmem:[%s384 + $0x20] sm:$0xff]
          %v3221 = vld [vmem:[%s384 + $0x28] sm:$0xff]
          %v3222 = vld [vmem:[%s384 + $0x30] sm:$0xff]
          %v3223 = vld [vmem:[%s384 + $0x38] sm:$0xff]
          %v3224 = vld [vmem:[%s384 + $0x40] sm:$0xff]
          %v3225 = vld [vmem:[%s384 + $0x48] sm:$0xff]
          %v3226 = vld [vmem:[%s384 + $0x50] sm:$0xff]
          %v3227 = vld [vmem:[%s384 + $0x58] sm:$0xff]
          %v3228 = vld [vmem:[%s384 + $0x60] sm:$0xff]
          %v3229 = vld [vmem:[%s384 + $0x68] sm:$0xff]
          %v3230 = vld [vmem:[%s384 + $0x70] sm:$0xff]
          %v3231 = vld [vmem:[%s384 + $0x78] sm:$0xff]
          %v3232 = vld [vmem:[%s7] sm:$0xff]
          %v3233 = vld [vmem:[%s7 + $0x8] sm:$0xff]
          %v3234 = vld [vmem:[%s7 + $0x10] sm:$0xff]
          %v3235 = vld [vmem:[%s7 + $0x18] sm:$0xff]
          %v3236 = vld [vmem:[%s7 + $0x20] sm:$0xff]
          %v3237 = vld [vmem:[%s7 + $0x28] sm:$0xff]
          %v3238 = vld [vmem:[%s7 + $0x30] sm:$0xff]
          %v3239 = vld [vmem:[%s7 + $0x38] sm:$0xff]
          %v3240 = vld [vmem:[%s7 + $0x40] sm:$0xff]
          %v3241 = vld [vmem:[%s7 + $0x48] sm:$0xff]
          %v3242 = vld [vmem:[%s7 + $0x50] sm:$0xff]
          %v3243 = vld [vmem:[%s7 + $0x58] sm:$0xff]
          %v3244 = vld [vmem:[%s7 + $0x60] sm:$0xff]
          %v3245 = vld [vmem:[%s7 + $0x68] sm:$0xff]
          %v3246 = vld [vmem:[%s7 + $0x70] sm:$0xff]
          %v3247 = vld [vmem:[%s7 + $0x78] sm:$0xff]
          %v3248 = vmul.f32 %v3232, %v3216
          %v3249 = vmul.f32 %v3233, %v3217
          %v3250 = vmul.f32 %v3234, %v3218
          %v3251 = vmul.f32 %v3235, %v3219
          %v3252 = vmul.f32 %v3236, %v3220
          %v3253 = vmul.f32 %v3237, %v3221
          %v3254 = vmul.f32 %v3238, %v3222
          %v3255 = vmul.f32 %v3239, %v3223
          %v3256 = vmul.f32 %v3240, %v3224
          %v3257 = vmul.f32 %v3241, %v3225
          %v3258 = vmul.f32 %v3242, %v3226
          %v3259 = vmul.f32 %v3243, %v3227
          %v3260 = vmul.f32 %v3244, %v3228
          %v3261 = vmul.f32 %v3245, %v3229
          %v3262 = vmul.f32 %v3246, %v3230
          %v3263 = vmul.f32 %v3247, %v3231
          %v3264 = vsub.f32 0.0, %v3042
          %v3265 = vsub.f32 0.0, %v3045
          %v3266 = vsub.f32 0.0, %v3050
          %v3267 = vsub.f32 0.0, %v3053
          %v3268 = vsub.f32 0.0, %v3058
          %v3269 = vsub.f32 0.0, %v3061
          %v3270 = vsub.f32 0.0, %v3066
          %v3271 = vsub.f32 0.0, %v3069
          %v3272 = vsub.f32 0.0, %v3074
          %v3273 = vsub.f32 0.0, %v3077
          %v3274 = vsub.f32 0.0, %v3082
          %v3275 = vsub.f32 0.0, %v3085
          %v3276 = vsub.f32 0.0, %v3090
          %v3277 = vsub.f32 0.0, %v3093
          %v3278 = vsub.f32 0.0, %v3098
          %v3279 = vsub.f32 0.0, %v3101
          %v3280 = vmax.f32 %v3264, 0.0
          %v3281 = vmax.f32 %v3265, 0.0
          %v3282 = vmax.f32 %v3266, 0.0
          %v3283 = vmax.f32 %v3267, 0.0
          %v3284 = vmax.f32 %v3268, 0.0
          %v3285 = vmax.f32 %v3269, 0.0
          %v3286 = vmax.f32 %v3270, 0.0
          %v3287 = vmax.f32 %v3271, 0.0
          %v3288 = vmax.f32 %v3272, 0.0
          %v3289 = vmax.f32 %v3273, 0.0
          %v3290 = vmax.f32 %v3274, 0.0
          %v3291 = vmax.f32 %v3275, 0.0
          %v3292 = vmax.f32 %v3276, 0.0
          %v3293 = vmax.f32 %v3277, 0.0
          %v3294 = vmax.f32 %v3278, 0.0
          %v3295 = vmax.f32 %v3279, 0.0
          %v3296 = vsub.f32 0.0, %v3264
          %v3297 = vsub.f32 0.0, %v3265
          %v3298 = vsub.f32 0.0, %v3266
          %v3299 = vsub.f32 0.0, %v3267
          %v3300 = vsub.f32 0.0, %v3268
          %v3301 = vsub.f32 0.0, %v3269
          %v3302 = vsub.f32 0.0, %v3270
          %v3303 = vsub.f32 0.0, %v3271
          %v3304 = vsub.f32 0.0, %v3272
          %v3305 = vsub.f32 0.0, %v3273
          %v3306 = vsub.f32 0.0, %v3274
          %v3307 = vsub.f32 0.0, %v3275
          %v3308 = vsub.f32 0.0, %v3276
          %v3309 = vsub.f32 0.0, %v3277
          %v3310 = vsub.f32 0.0, %v3278
          %v3311 = vsub.f32 0.0, %v3279
          %vm3312 = vcmp.ne.f32.partialorder %v3296, %v3296
          %vm3313 = vcmp.ne.f32.partialorder %v3297, %v3297
          %vm3314 = vcmp.ne.f32.partialorder %v3298, %v3298
          %vm3315 = vcmp.ne.f32.partialorder %v3299, %v3299
          %vm3316 = vcmp.ne.f32.partialorder %v3300, %v3300
          %vm3317 = vcmp.ne.f32.partialorder %v3301, %v3301
          %vm3318 = vcmp.ne.f32.partialorder %v3302, %v3302
          %vm3319 = vcmp.ne.f32.partialorder %v3303, %v3303
          %vm3320 = vcmp.ne.f32.partialorder %v3304, %v3304
          %vm3321 = vcmp.ne.f32.partialorder %v3305, %v3305
          %vm3322 = vcmp.ne.f32.partialorder %v3306, %v3306
          %vm3323 = vcmp.ne.f32.partialorder %v3307, %v3307
          %vm3324 = vcmp.ne.f32.partialorder %v3308, %v3308
          %vm3325 = vcmp.ne.f32.partialorder %v3309, %v3309
          %vm3326 = vcmp.ne.f32.partialorder %v3310, %v3310
          %vm3327 = vcmp.ne.f32.partialorder %v3311, %v3311
          %v3328 = vadd.f32 %v3264, 0.0
          %v3329 = vadd.f32 %v3265, 0.0
          %v3330 = vadd.f32 %v3266, 0.0
          %v3331 = vadd.f32 %v3267, 0.0
          %v3332 = vadd.f32 %v3268, 0.0
          %v3333 = vadd.f32 %v3269, 0.0
          %v3334 = vadd.f32 %v3270, 0.0
          %v3335 = vadd.f32 %v3271, 0.0
          %v3336 = vadd.f32 %v3272, 0.0
          %v3337 = vadd.f32 %v3273, 0.0
          %v3338 = vadd.f32 %v3274, 0.0
          %v3339 = vadd.f32 %v3275, 0.0
          %v3340 = vadd.f32 %v3276, 0.0
          %v3341 = vadd.f32 %v3277, 0.0
          %v3342 = vadd.f32 %v3278, 0.0
          %v3343 = vadd.f32 %v3279, 0.0
          %v3344 = vand.u32 2147483647, %v3296
          %v3345 = vand.u32 2147483647, %v3297
          %v3346 = vand.u32 2147483647, %v3298
          %v3347 = vand.u32 2147483647, %v3299
          %v3348 = vand.u32 2147483647, %v3300
          %v3349 = vand.u32 2147483647, %v3301
          %v3350 = vand.u32 2147483647, %v3302
          %v3351 = vand.u32 2147483647, %v3303
          %v3352 = vand.u32 2147483647, %v3304
          %v3353 = vand.u32 2147483647, %v3305
          %v3354 = vand.u32 2147483647, %v3306
          %v3355 = vand.u32 2147483647, %v3307
          %v3356 = vand.u32 2147483647, %v3308
          %v3357 = vand.u32 2147483647, %v3309
          %v3358 = vand.u32 2147483647, %v3310
          %v3359 = vand.u32 2147483647, %v3311
          %v3360 = vsub.f32 0.0, %v3344
          %v3361 = vsub.f32 0.0, %v3345
          %v3362 = vsub.f32 0.0, %v3346
          %v3363 = vsub.f32 0.0, %v3347
          %v3364 = vsub.f32 0.0, %v3348
          %v3365 = vsub.f32 0.0, %v3349
          %v3366 = vsub.f32 0.0, %v3350
          %v3367 = vsub.f32 0.0, %v3351
          %v3368 = vsub.f32 0.0, %v3352
          %v3369 = vsub.f32 0.0, %v3353
          %v3370 = vsub.f32 0.0, %v3354
          %v3371 = vsub.f32 0.0, %v3355
          %v3372 = vsub.f32 0.0, %v3356
          %v3373 = vsub.f32 0.0, %v3357
          %v3374 = vsub.f32 0.0, %v3358
          %v3375 = vsub.f32 0.0, %v3359
          %v3376 = vmul.f32 %v3360, 1.442695
          %v3377 = vpow.pop %v3376
          %v3378 = vmul.f32 %v3361, 1.442695
          %v3379 = vpow.pop %v3378
          %v3380 = vmul.f32 %v3362, 1.442695
          %v3381 = vpow.pop %v3380
          %v3382 = vmul.f32 %v3363, 1.442695
          %v3383 = vpow.pop %v3382
          %v3384 = vmul.f32 %v3364, 1.442695
          %v3385 = vpow.pop %v3384
          %v3386 = vmul.f32 %v3365, 1.442695
          %v3387 = vpow.pop %v3386
          %v3388 = vmul.f32 %v3366, 1.442695
          %v3389 = vpow.pop %v3388
          %v3390 = vmul.f32 %v3367, 1.442695
          %v3391 = vpow.pop %v3390
          %v3392 = vmul.f32 %v3368, 1.442695
          %v3393 = vpow.pop %v3392
          %v3394 = vmul.f32 %v3369, 1.442695
          %v3395 = vpow.pop %v3394
          %v3396 = vmul.f32 %v3370, 1.442695
          %v3397 = vpow.pop %v3396
          %v3398 = vmul.f32 %v3371, 1.442695
          %v3399 = vpow.pop %v3398
          %v3400 = vmul.f32 %v3372, 1.442695
          %v3401 = vpow.pop %v3400
          %v3402 = vmul.f32 %v3373, 1.442695
          %v3403 = vpow.pop %v3402
          %v3404 = vmul.f32 %v3374, 1.442695
          %v3405 = vpow.pop %v3404
          %v3406 = vmul.f32 %v3375, 1.442695
          %v3407 = vpow.pop %v3406
          %v3408 = vadd.f32 %v3377, 1.0
          %v3409 = vlog2.pop %v3408
          %v3410 = vmul.f32 %v3409, 0.6931472
          %v3411 = vmul.f32 -0.5, %v3377
          %v3412 = vadd.f32 %v3411, 1.0
          %v3413 = vmul.f32 %v3412, %v3377
          %v3414 = vand.u32 2147483647, %v3377
          %vm3415 = vcmp.lt.f32.partialorder %v3414, 0.0004427343
          %v3416 = vsel %vm3415, %v3413, %v3410
          %v3417 = vadd.f32 %v3379, 1.0
          %v3418 = vlog2.pop %v3417
          %v3419 = vmul.f32 %v3418, 0.6931472
          %v3420 = vmul.f32 -0.5, %v3379
          %v3421 = vadd.f32 %v3420, 1.0
          %v3422 = vmul.f32 %v3421, %v3379
          %v3423 = vand.u32 2147483647, %v3379
          %vm3424 = vcmp.lt.f32.partialorder %v3423, 0.0004427343
          %v3425 = vsel %vm3424, %v3422, %v3419
          %v3426 = vadd.f32 %v3381, 1.0
          %v3427 = vlog2.pop %v3426
          %v3428 = vmul.f32 %v3427, 0.6931472
          %v3429 = vmul.f32 -0.5, %v3381
          %v3430 = vadd.f32 %v3429, 1.0
          %v3431 = vmul.f32 %v3430, %v3381
          %v3432 = vand.u32 2147483647, %v3381
          %vm3433 = vcmp.lt.f32.partialorder %v3432, 0.0004427343
          %v3434 = vsel %vm3433, %v3431, %v3428
          %v3435 = vadd.f32 %v3383, 1.0
          %v3436 = vlog2.pop %v3435
          %v3437 = vmul.f32 %v3436, 0.6931472
          %v3438 = vmul.f32 -0.5, %v3383
          %v3439 = vadd.f32 %v3438, 1.0
          %v3440 = vmul.f32 %v3439, %v3383
          %v3441 = vand.u32 2147483647, %v3383
          %vm3442 = vcmp.lt.f32.partialorder %v3441, 0.0004427343
          %v3443 = vsel %vm3442, %v3440, %v3437
          %v3444 = vadd.f32 %v3385, 1.0
          %v3445 = vlog2.pop %v3444
          %v3446 = vmul.f32 %v3445, 0.6931472
          %v3447 = vmul.f32 -0.5, %v3385
          %v3448 = vadd.f32 %v3447, 1.0
          %v3449 = vmul.f32 %v3448, %v3385
          %v3450 = vand.u32 2147483647, %v3385
          %vm3451 = vcmp.lt.f32.partialorder %v3450, 0.0004427343
          %v3452 = vsel %vm3451, %v3449, %v3446
          %v3453 = vadd.f32 %v3387, 1.0
          %v3454 = vlog2.pop %v3453
          %v3455 = vmul.f32 %v3454, 0.6931472
          %v3456 = vmul.f32 -0.5, %v3387
          %v3457 = vadd.f32 %v3456, 1.0
          %v3458 = vmul.f32 %v3457, %v3387
          %v3459 = vand.u32 2147483647, %v3387
          %vm3460 = vcmp.lt.f32.partialorder %v3459, 0.0004427343
          %v3461 = vsel %vm3460, %v3458, %v3455
          %v3462 = vadd.f32 %v3389, 1.0
          %v3463 = vlog2.pop %v3462
          %v3464 = vmul.f32 %v3463, 0.6931472
          %v3465 = vmul.f32 -0.5, %v3389
          %v3466 = vadd.f32 %v3465, 1.0
          %v3467 = vmul.f32 %v3466, %v3389
          %v3468 = vand.u32 2147483647, %v3389
          %vm3469 = vcmp.lt.f32.partialorder %v3468, 0.0004427343
          %v3470 = vsel %vm3469, %v3467, %v3464
          %v3471 = vadd.f32 %v3391, 1.0
          %v3472 = vlog2.pop %v3471
          %v3473 = vmul.f32 %v3472, 0.6931472
          %v3474 = vmul.f32 -0.5, %v3391
          %v3475 = vadd.f32 %v3474, 1.0
          %v3476 = vmul.f32 %v3475, %v3391
          %v3477 = vand.u32 2147483647, %v3391
          %vm3478 = vcmp.lt.f32.partialorder %v3477, 0.0004427343
          %v3479 = vsel %vm3478, %v3476, %v3473
          %v3480 = vadd.f32 %v3393, 1.0
          %v3481 = vlog2.pop %v3480
          %v3482 = vmul.f32 %v3481, 0.6931472
          %v3483 = vmul.f32 -0.5, %v3393
          %v3484 = vadd.f32 %v3483, 1.0
          %v3485 = vmul.f32 %v3484, %v3393
          %v3486 = vand.u32 2147483647, %v3393
          %vm3487 = vcmp.lt.f32.partialorder %v3486, 0.0004427343
          %v3488 = vsel %vm3487, %v3485, %v3482
          %v3489 = vadd.f32 %v3395, 1.0
          %v3490 = vlog2.pop %v3489
          %v3491 = vmul.f32 %v3490, 0.6931472
          %v3492 = vmul.f32 -0.5, %v3395
          %v3493 = vadd.f32 %v3492, 1.0
          %v3494 = vmul.f32 %v3493, %v3395
          %v3495 = vand.u32 2147483647, %v3395
          %vm3496 = vcmp.lt.f32.partialorder %v3495, 0.0004427343
          %v3497 = vsel %vm3496, %v3494, %v3491
          %v3498 = vadd.f32 %v3397, 1.0
          %v3499 = vlog2.pop %v3498
          %v3500 = vmul.f32 %v3499, 0.6931472
          %v3501 = vmul.f32 -0.5, %v3397
          %v3502 = vadd.f32 %v3501, 1.0
          %v3503 = vmul.f32 %v3502, %v3397
          %v3504 = vand.u32 2147483647, %v3397
          %vm3505 = vcmp.lt.f32.partialorder %v3504, 0.0004427343
          %v3506 = vsel %vm3505, %v3503, %v3500
          %v3507 = vadd.f32 %v3399, 1.0
          %v3508 = vlog2.pop %v3507
          %v3509 = vmul.f32 %v3508, 0.6931472
          %v3510 = vmul.f32 -0.5, %v3399
          %v3511 = vadd.f32 %v3510, 1.0
          %v3512 = vmul.f32 %v3511, %v3399
          %v3513 = vand.u32 2147483647, %v3399
          %vm3514 = vcmp.lt.f32.partialorder %v3513, 0.0004427343
          %v3515 = vsel %vm3514, %v3512, %v3509
          %v3516 = vadd.f32 %v3401, 1.0
          %v3517 = vlog2.pop %v3516
          %v3518 = vmul.f32 %v3517, 0.6931472
          %v3519 = vmul.f32 -0.5, %v3401
          %v3520 = vadd.f32 %v3519, 1.0
          %v3521 = vmul.f32 %v3520, %v3401
          %v3522 = vand.u32 2147483647, %v3401
          %vm3523 = vcmp.lt.f32.partialorder %v3522, 0.0004427343
          %v3524 = vsel %vm3523, %v3521, %v3518
          %v3525 = vadd.f32 %v3403, 1.0
          %v3526 = vlog2.pop %v3525
          %v3527 = vmul.f32 %v3526, 0.6931472
          %v3528 = vmul.f32 -0.5, %v3403
          %v3529 = vadd.f32 %v3528, 1.0
          %v3530 = vmul.f32 %v3529, %v3403
          %v3531 = vand.u32 2147483647, %v3403
          %vm3532 = vcmp.lt.f32.partialorder %v3531, 0.0004427343
          %v3533 = vsel %vm3532, %v3530, %v3527
          %v3534 = vadd.f32 %v3405, 1.0
          %v3535 = vlog2.pop %v3534
          %v3536 = vmul.f32 %v3535, 0.6931472
          %v3537 = vmul.f32 -0.5, %v3405
          %v3538 = vadd.f32 %v3537, 1.0
          %v3539 = vmul.f32 %v3538, %v3405
          %v3540 = vand.u32 2147483647, %v3405
          %vm3541 = vcmp.lt.f32.partialorder %v3540, 0.0004427343
          %v3542 = vsel %vm3541, %v3539, %v3536
          %v3543 = vadd.f32 %v3407, 1.0
          %v3544 = vlog2.pop %v3543
          %v3545 = vmul.f32 %v3544, 0.6931472
          %v3546 = vmul.f32 -0.5, %v3407
          %v3547 = vadd.f32 %v3546, 1.0
          %v3548 = vmul.f32 %v3547, %v3407
          %v3549 = vand.u32 2147483647, %v3407
          %vm3550 = vcmp.lt.f32.partialorder %v3549, 0.0004427343
          %v3551 = vsel %vm3550, %v3548, %v3545
          %v3552 = vadd.f32 %v3280, %v3416
          %v3553 = vadd.f32 %v3281, %v3425
          %v3554 = vadd.f32 %v3282, %v3434
          %v3555 = vadd.f32 %v3283, %v3443
          %v3556 = vadd.f32 %v3284, %v3452
          %v3557 = vadd.f32 %v3285, %v3461
          %v3558 = vadd.f32 %v3286, %v3470
          %v3559 = vadd.f32 %v3287, %v3479
          %v3560 = vadd.f32 %v3288, %v3488
          %v3561 = vadd.f32 %v3289, %v3497
          %v3562 = vadd.f32 %v3290, %v3506
          %v3563 = vadd.f32 %v3291, %v3515
          %v3564 = vadd.f32 %v3292, %v3524
          %v3565 = vadd.f32 %v3293, %v3533
          %v3566 = vadd.f32 %v3294, %v3542
          %v3567 = vadd.f32 %v3295, %v3551
          %v3568 = vsel %vm3312, %v3328, %v3552
          %v3569 = vsel %vm3313, %v3329, %v3553
          %v3570 = vsel %vm3314, %v3330, %v3554
          %v3571 = vsel %vm3315, %v3331, %v3555
          %v3572 = vsel %vm3316, %v3332, %v3556
          %v3573 = vsel %vm3317, %v3333, %v3557
          %v3574 = vsel %vm3318, %v3334, %v3558
          %v3575 = vsel %vm3319, %v3335, %v3559
          %v3576 = vsel %vm3320, %v3336, %v3560
          %v3577 = vsel %vm3321, %v3337, %v3561
          %v3578 = vsel %vm3322, %v3338, %v3562
          %v3579 = vsel %vm3323, %v3339, %v3563
          %v3580 = vsel %vm3324, %v3340, %v3564
          %v3581 = vsel %vm3325, %v3341, %v3565
          %v3582 = vsel %vm3326, %v3342, %v3566
          %v3583 = vsel %vm3327, %v3343, %v3567
          %v3584 = vmul.f32 %v3248, %v3568
          %v3585 = vmul.f32 %v3249, %v3569
          %v3586 = vmul.f32 %v3250, %v3570
          %v3587 = vmul.f32 %v3251, %v3571
          %v3588 = vmul.f32 %v3252, %v3572
          %v3589 = vmul.f32 %v3253, %v3573
          %v3590 = vmul.f32 %v3254, %v3574
          %v3591 = vmul.f32 %v3255, %v3575
          %v3592 = vmul.f32 %v3256, %v3576
          %v3593 = vmul.f32 %v3257, %v3577
          %v3594 = vmul.f32 %v3258, %v3578
          %v3595 = vmul.f32 %v3259, %v3579
          %v3596 = vmul.f32 %v3260, %v3580
          %v3597 = vmul.f32 %v3261, %v3581
          %v3598 = vmul.f32 %v3262, %v3582
          %v3599 = vmul.f32 %v3263, %v3583
          %v3600 = vsub.f32 1.0, %v3216
          %v3601 = vsub.f32 1.0, %v3217
          %v3602 = vsub.f32 1.0, %v3218
          %v3603 = vsub.f32 1.0, %v3219
          %v3604 = vsub.f32 1.0, %v3220
          %v3605 = vsub.f32 1.0, %v3221
          %v3606 = vsub.f32 1.0, %v3222
          %v3607 = vsub.f32 1.0, %v3223
          %v3608 = vsub.f32 1.0, %v3224
          %v3609 = vsub.f32 1.0, %v3225
          %v3610 = vsub.f32 1.0, %v3226
          %v3611 = vsub.f32 1.0, %v3227
          %v3612 = vsub.f32 1.0, %v3228
          %v3613 = vsub.f32 1.0, %v3229
          %v3614 = vsub.f32 1.0, %v3230
          %v3615 = vsub.f32 1.0, %v3231
          %v3616 = vmax.f32 %v3042, 0.0
          %v3617 = vmax.f32 %v3045, 0.0
          %v3618 = vmax.f32 %v3050, 0.0
          %v3619 = vmax.f32 %v3053, 0.0
          %v3620 = vmax.f32 %v3058, 0.0
          %v3621 = vmax.f32 %v3061, 0.0
          %v3622 = vmax.f32 %v3066, 0.0
          %v3623 = vmax.f32 %v3069, 0.0
          %v3624 = vmax.f32 %v3074, 0.0
          %v3625 = vmax.f32 %v3077, 0.0
          %v3626 = vmax.f32 %v3082, 0.0
          %v3627 = vmax.f32 %v3085, 0.0
          %v3628 = vmax.f32 %v3090, 0.0
          %v3629 = vmax.f32 %v3093, 0.0
          %v3630 = vmax.f32 %v3098, 0.0
          %v3631 = vmax.f32 %v3101, 0.0
          %vm3632 = vcmp.ne.f32.partialorder %v3264, %v3264
          %vm3633 = vcmp.ne.f32.partialorder %v3265, %v3265
          %vm3634 = vcmp.ne.f32.partialorder %v3266, %v3266
          %vm3635 = vcmp.ne.f32.partialorder %v3267, %v3267
          %vm3636 = vcmp.ne.f32.partialorder %v3268, %v3268
          %vm3637 = vcmp.ne.f32.partialorder %v3269, %v3269
          %vm3638 = vcmp.ne.f32.partialorder %v3270, %v3270
          %vm3639 = vcmp.ne.f32.partialorder %v3271, %v3271
          %vm3640 = vcmp.ne.f32.partialorder %v3272, %v3272
          %vm3641 = vcmp.ne.f32.partialorder %v3273, %v3273
          %vm3642 = vcmp.ne.f32.partialorder %v3274, %v3274
          %vm3643 = vcmp.ne.f32.partialorder %v3275, %v3275
          %vm3644 = vcmp.ne.f32.partialorder %v3276, %v3276
          %vm3645 = vcmp.ne.f32.partialorder %v3277, %v3277
          %vm3646 = vcmp.ne.f32.partialorder %v3278, %v3278
          %vm3647 = vcmp.ne.f32.partialorder %v3279, %v3279
          %v3648 = vadd.f32 %v3042, 0.0
          %v3649 = vadd.f32 %v3045, 0.0
          %v3650 = vadd.f32 %v3050, 0.0
          %v3651 = vadd.f32 %v3053, 0.0
          %v3652 = vadd.f32 %v3058, 0.0
          %v3653 = vadd.f32 %v3061, 0.0
          %v3654 = vadd.f32 %v3066, 0.0
          %v3655 = vadd.f32 %v3069, 0.0
          %v3656 = vadd.f32 %v3074, 0.0
          %v3657 = vadd.f32 %v3077, 0.0
          %v3658 = vadd.f32 %v3082, 0.0
          %v3659 = vadd.f32 %v3085, 0.0
          %v3660 = vadd.f32 %v3090, 0.0
          %v3661 = vadd.f32 %v3093, 0.0
          %v3662 = vadd.f32 %v3098, 0.0
          %v3663 = vadd.f32 %v3101, 0.0
          %v3664 = vand.u32 2147483647, %v3264
          %v3665 = vand.u32 2147483647, %v3265
          %v3666 = vand.u32 2147483647, %v3266
          %v3667 = vand.u32 2147483647, %v3267
          %v3668 = vand.u32 2147483647, %v3268
          %v3669 = vand.u32 2147483647, %v3269
          %v3670 = vand.u32 2147483647, %v3270
          %v3671 = vand.u32 2147483647, %v3271
          %v3672 = vand.u32 2147483647, %v3272
          %v3673 = vand.u32 2147483647, %v3273
          %v3674 = vand.u32 2147483647, %v3274
          %v3675 = vand.u32 2147483647, %v3275
          %v3676 = vand.u32 2147483647, %v3276
          %v3677 = vand.u32 2147483647, %v3277
          %v3678 = vand.u32 2147483647, %v3278
          %v3679 = vand.u32 2147483647, %v3279
          %v3680 = vsub.f32 0.0, %v3664
          %v3681 = vsub.f32 0.0, %v3665
          %v3682 = vsub.f32 0.0, %v3666
          %v3683 = vsub.f32 0.0, %v3667
          %v3684 = vsub.f32 0.0, %v3668
          %v3685 = vsub.f32 0.0, %v3669
          %v3686 = vsub.f32 0.0, %v3670
          %v3687 = vsub.f32 0.0, %v3671
          %v3688 = vsub.f32 0.0, %v3672
          %v3689 = vsub.f32 0.0, %v3673
          %v3690 = vsub.f32 0.0, %v3674
          %v3691 = vsub.f32 0.0, %v3675
          %v3692 = vsub.f32 0.0, %v3676
          %v3693 = vsub.f32 0.0, %v3677
          %v3694 = vsub.f32 0.0, %v3678
          %v3695 = vsub.f32 0.0, %v3679
          %v3696 = vmul.f32 %v3680, 1.442695
          %v3697 = vpow.pop %v3696
          %v3698 = vmul.f32 %v3681, 1.442695
          %v3699 = vpow.pop %v3698
          %v3700 = vmul.f32 %v3682, 1.442695
          %v3701 = vpow.pop %v3700
          %v3702 = vmul.f32 %v3683, 1.442695
          %v3703 = vpow.pop %v3702
          %v3704 = vmul.f32 %v3684, 1.442695
          %v3705 = vpow.pop %v3704
          %v3706 = vmul.f32 %v3685, 1.442695
          %v3707 = vpow.pop %v3706
          %v3708 = vmul.f32 %v3686, 1.442695
          %v3709 = vpow.pop %v3708
          %v3710 = vmul.f32 %v3687, 1.442695
          %v3711 = vpow.pop %v3710
          %v3712 = vmul.f32 %v3688, 1.442695
          %v3713 = vpow.pop %v3712
          %v3714 = vmul.f32 %v3689, 1.442695
          %v3715 = vpow.pop %v3714
          %v3716 = vmul.f32 %v3690, 1.442695
          %v3717 = vpow.pop %v3716
          %v3718 = vmul.f32 %v3691, 1.442695
          %v3719 = vpow.pop %v3718
          %v3720 = vmul.f32 %v3692, 1.442695
          %v3721 = vpow.pop %v3720
          %v3722 = vmul.f32 %v3693, 1.442695
          %v3723 = vpow.pop %v3722
          %v3724 = vmul.f32 %v3694, 1.442695
          %v3725 = vpow.pop %v3724
          %v3726 = vmul.f32 %v3695, 1.442695
          %v3727 = vpow.pop %v3726
          %v3728 = vadd.f32 %v3697, 1.0
          %v3729 = vlog2.pop %v3728
          %v3730 = vmul.f32 %v3729, 0.6931472
          %v3731 = vmul.f32 -0.5, %v3697
          %v3732 = vadd.f32 %v3731, 1.0
          %v3733 = vmul.f32 %v3732, %v3697
          %v3734 = vand.u32 2147483647, %v3697
          %vm3735 = vcmp.lt.f32.partialorder %v3734, 0.0004427343
          %v3736 = vsel %vm3735, %v3733, %v3730
          %v3737 = vadd.f32 %v3699, 1.0
          %v3738 = vlog2.pop %v3737
          %v3739 = vmul.f32 %v3738, 0.6931472
          %v3740 = vmul.f32 -0.5, %v3699
          %v3741 = vadd.f32 %v3740, 1.0
          %v3742 = vmul.f32 %v3741, %v3699
          %v3743 = vand.u32 2147483647, %v3699
          %vm3744 = vcmp.lt.f32.partialorder %v3743, 0.0004427343
          %v3745 = vsel %vm3744, %v3742, %v3739
          %v3746 = vadd.f32 %v3701, 1.0
          %v3747 = vlog2.pop %v3746
          %v3748 = vmul.f32 %v3747, 0.6931472
          %v3749 = vmul.f32 -0.5, %v3701
          %v3750 = vadd.f32 %v3749, 1.0
          %v3751 = vmul.f32 %v3750, %v3701
          %v3752 = vand.u32 2147483647, %v3701
          %vm3753 = vcmp.lt.f32.partialorder %v3752, 0.0004427343
          %v3754 = vsel %vm3753, %v3751, %v3748
          %v3755 = vadd.f32 %v3703, 1.0
          %v3756 = vlog2.pop %v3755
          %v3757 = vmul.f32 %v3756, 0.6931472
          %v3758 = vmul.f32 -0.5, %v3703
          %v3759 = vadd.f32 %v3758, 1.0
          %v3760 = vmul.f32 %v3759, %v3703
          %v3761 = vand.u32 2147483647, %v3703
          %vm3762 = vcmp.lt.f32.partialorder %v3761, 0.0004427343
          %v3763 = vsel %vm3762, %v3760, %v3757
          %v3764 = vadd.f32 %v3705, 1.0
          %v3765 = vlog2.pop %v3764
          %v3766 = vmul.f32 %v3765, 0.6931472
          %v3767 = vmul.f32 -0.5, %v3705
          %v3768 = vadd.f32 %v3767, 1.0
          %v3769 = vmul.f32 %v3768, %v3705
          %v3770 = vand.u32 2147483647, %v3705
          %vm3771 = vcmp.lt.f32.partialorder %v3770, 0.0004427343
          %v3772 = vsel %vm3771, %v3769, %v3766
          %v3773 = vadd.f32 %v3707, 1.0
          %v3774 = vlog2.pop %v3773
          %v3775 = vmul.f32 %v3774, 0.6931472
          %v3776 = vmul.f32 -0.5, %v3707
          %v3777 = vadd.f32 %v3776, 1.0
          %v3778 = vmul.f32 %v3777, %v3707
          %v3779 = vand.u32 2147483647, %v3707
          %vm3780 = vcmp.lt.f32.partialorder %v3779, 0.0004427343
          %v3781 = vsel %vm3780, %v3778, %v3775
          %v3782 = vadd.f32 %v3709, 1.0
          %v3783 = vlog2.pop %v3782
          %v3784 = vmul.f32 %v3783, 0.6931472
          %v3785 = vmul.f32 -0.5, %v3709
          %v3786 = vadd.f32 %v3785, 1.0
          %v3787 = vmul.f32 %v3786, %v3709
          %v3788 = vand.u32 2147483647, %v3709
          %vm3789 = vcmp.lt.f32.partialorder %v3788, 0.0004427343
          %v3790 = vsel %vm3789, %v3787, %v3784
          %v3791 = vadd.f32 %v3711, 1.0
          %v3792 = vlog2.pop %v3791
          %v3793 = vmul.f32 %v3792, 0.6931472
          %v3794 = vmul.f32 -0.5, %v3711
          %v3795 = vadd.f32 %v3794, 1.0
          %v3796 = vmul.f32 %v3795, %v3711
          %v3797 = vand.u32 2147483647, %v3711
          %vm3798 = vcmp.lt.f32.partialorder %v3797, 0.0004427343
          %v3799 = vsel %vm3798, %v3796, %v3793
          %v3800 = vadd.f32 %v3713, 1.0
          %v3801 = vlog2.pop %v3800
          %v3802 = vmul.f32 %v3801, 0.6931472
          %v3803 = vmul.f32 -0.5, %v3713
          %v3804 = vadd.f32 %v3803, 1.0
          %v3805 = vmul.f32 %v3804, %v3713
          %v3806 = vand.u32 2147483647, %v3713
          %vm3807 = vcmp.lt.f32.partialorder %v3806, 0.0004427343
          %v3808 = vsel %vm3807, %v3805, %v3802
          %v3809 = vadd.f32 %v3715, 1.0
          %v3810 = vlog2.pop %v3809
          %v3811 = vmul.f32 %v3810, 0.6931472
          %v3812 = vmul.f32 -0.5, %v3715
          %v3813 = vadd.f32 %v3812, 1.0
          %v3814 = vmul.f32 %v3813, %v3715
          %v3815 = vand.u32 2147483647, %v3715
          %vm3816 = vcmp.lt.f32.partialorder %v3815, 0.0004427343
          %v3817 = vsel %vm3816, %v3814, %v3811
          %v3818 = vadd.f32 %v3717, 1.0
          %v3819 = vlog2.pop %v3818
          %v3820 = vmul.f32 %v3819, 0.6931472
          %v3821 = vmul.f32 -0.5, %v3717
          %v3822 = vadd.f32 %v3821, 1.0
          %v3823 = vmul.f32 %v3822, %v3717
          %v3824 = vand.u32 2147483647, %v3717
          %vm3825 = vcmp.lt.f32.partialorder %v3824, 0.0004427343
          %v3826 = vsel %vm3825, %v3823, %v3820
          %v3827 = vadd.f32 %v3719, 1.0
          %v3828 = vlog2.pop %v3827
          %v3829 = vmul.f32 %v3828, 0.6931472
          %v3830 = vmul.f32 -0.5, %v3719
          %v3831 = vadd.f32 %v3830, 1.0
          %v3832 = vmul.f32 %v3831, %v3719
          %v3833 = vand.u32 2147483647, %v3719
          %vm3834 = vcmp.lt.f32.partialorder %v3833, 0.0004427343
          %v3835 = vsel %vm3834, %v3832, %v3829
          %v3836 = vadd.f32 %v3721, 1.0
          %v3837 = vlog2.pop %v3836
          %v3838 = vmul.f32 %v3837, 0.6931472
          %v3839 = vmul.f32 -0.5, %v3721
          %v3840 = vadd.f32 %v3839, 1.0
          %v3841 = vmul.f32 %v3840, %v3721
          %v3842 = vand.u32 2147483647, %v3721
          %vm3843 = vcmp.lt.f32.partialorder %v3842, 0.0004427343
          %v3844 = vsel %vm3843, %v3841, %v3838
          %v3845 = vadd.f32 %v3723, 1.0
          %v3846 = vlog2.pop %v3845
          %v3847 = vmul.f32 %v3846, 0.6931472
          %v3848 = vmul.f32 -0.5, %v3723
          %v3849 = vadd.f32 %v3848, 1.0
          %v3850 = vmul.f32 %v3849, %v3723
          %v3851 = vand.u32 2147483647, %v3723
          %vm3852 = vcmp.lt.f32.partialorder %v3851, 0.0004427343
          %v3853 = vsel %vm3852, %v3850, %v3847
          %v3854 = vadd.f32 %v3725, 1.0
          %v3855 = vlog2.pop %v3854
          %v3856 = vmul.f32 %v3855, 0.6931472
          %v3857 = vmul.f32 -0.5, %v3725
          %v3858 = vadd.f32 %v3857, 1.0
          %v3859 = vmul.f32 %v3858, %v3725
          %v3860 = vand.u32 2147483647, %v3725
          %vm3861 = vcmp.lt.f32.partialorder %v3860, 0.0004427343
          %v3862 = vsel %vm3861, %v3859, %v3856
          %v3863 = vadd.f32 %v3727, 1.0
          %v3864 = vlog2.pop %v3863
          %v3865 = vmul.f32 %v3864, 0.6931472
          %v3866 = vmul.f32 -0.5, %v3727
          %v3867 = vadd.f32 %v3866, 1.0
          %v3868 = vmul.f32 %v3867, %v3727
          %v3869 = vand.u32 2147483647, %v3727
          %vm3870 = vcmp.lt.f32.partialorder %v3869, 0.0004427343
          %v3871 = vsel %vm3870, %v3868, %v3865
          %v3872 = vadd.f32 %v3616, %v3736
          %v3873 = vadd.f32 %v3617, %v3745
          %v3874 = vadd.f32 %v3618, %v3754
          %v3875 = vadd.f32 %v3619, %v3763
          %v3876 = vadd.f32 %v3620, %v3772
          %v3877 = vadd.f32 %v3621, %v3781
          %v3878 = vadd.f32 %v3622, %v3790
          %v3879 = vadd.f32 %v3623, %v3799
          %v3880 = vadd.f32 %v3624, %v3808
          %v3881 = vadd.f32 %v3625, %v3817
          %v3882 = vadd.f32 %v3626, %v3826
          %v3883 = vadd.f32 %v3627, %v3835
          %v3884 = vadd.f32 %v3628, %v3844
          %v3885 = vadd.f32 %v3629, %v3853
          %v3886 = vadd.f32 %v3630, %v3862
          %v3887 = vadd.f32 %v3631, %v3871
          %v3888 = vsel %vm3632, %v3648, %v3872
          %v3889 = vsel %vm3633, %v3649, %v3873
          %v3890 = vsel %vm3634, %v3650, %v3874
          %v3891 = vsel %vm3635, %v3651, %v3875
          %v3892 = vsel %vm3636, %v3652, %v3876
          %v3893 = vsel %vm3637, %v3653, %v3877
          %v3894 = vsel %vm3638, %v3654, %v3878
          %v3895 = vsel %vm3639, %v3655, %v3879
          %v3896 = vsel %vm3640, %v3656, %v3880
          %v3897 = vsel %vm3641, %v3657, %v3881
          %v3898 = vsel %vm3642, %v3658, %v3882
          %v3899 = vsel %vm3643, %v3659, %v3883
          %v3900 = vsel %vm3644, %v3660, %v3884
          %v3901 = vsel %vm3645, %v3661, %v3885
          %v3902 = vsel %vm3646, %v3662, %v3886
          %v3903 = vsel %vm3647, %v3663, %v3887
          %v3904 = vmul.f32 %v3600, %v3888
          %v3905 = vmul.f32 %v3601, %v3889
          %v3906 = vmul.f32 %v3602, %v3890
          %v3907 = vmul.f32 %v3603, %v3891
          %v3908 = vmul.f32 %v3604, %v3892
          %v3909 = vmul.f32 %v3605, %v3893
          %v3910 = vmul.f32 %v3606, %v3894
          %v3911 = vmul.f32 %v3607, %v3895
          %v3912 = vmul.f32 %v3608, %v3896
          %v3913 = vmul.f32 %v3609, %v3897
          %v3914 = vmul.f32 %v3610, %v3898
          %v3915 = vmul.f32 %v3611, %v3899
          %v3916 = vmul.f32 %v3612, %v3900
          %v3917 = vmul.f32 %v3613, %v3901
          %v3918 = vmul.f32 %v3614, %v3902
          %v3919 = vmul.f32 %v3615, %v3903
          %v3920 = vadd.f32 %v3584, %v3904
          %v3921 = vadd.f32 %v3585, %v3905
          %v3922 = vadd.f32 %v3586, %v3906
          %v3923 = vadd.f32 %v3587, %v3907
          %v3924 = vadd.f32 %v3588, %v3908
          %v3925 = vadd.f32 %v3589, %v3909
          %v3926 = vadd.f32 %v3590, %v3910
          %v3927 = vadd.f32 %v3591, %v3911
          %v3928 = vadd.f32 %v3592, %v3912
          %v3929 = vadd.f32 %v3593, %v3913
          %v3930 = vadd.f32 %v3594, %v3914
          %v3931 = vadd.f32 %v3595, %v3915
          %v3932 = vadd.f32 %v3596, %v3916
          %v3933 = vadd.f32 %v3597, %v3917
          %v3934 = vadd.f32 %v3598, %v3918
          %v3935 = vadd.f32 %v3599, %v3919
          %v3936 = vlaneseq
          %v3937 = vshrl.u32 %v3936, 7
          %v3938 = vadd.s32 %v3937, 8
          %v3939 = vadd.s32 %v3937, 16
          %v3940 = vadd.s32 %v3937, 24
          %v3941 = vadd.s32 %v3937, 32
          %v3942 = vadd.s32 %v3937, 40
          %v3943 = vadd.s32 %v3937, 48
          %v3944 = vadd.s32 %v3937, 56
          %v3945 = vadd.s32 %v3937, 64
          %v3946 = vadd.s32 %v3937, 72
          %v3947 = vadd.s32 %v3937, 80
          %v3948 = vadd.s32 %v3937, 88
          %v3949 = vadd.s32 %v3937, 96
          %v3950 = vadd.s32 %v3937, 104
          %v3951 = vadd.s32 %v3937, 112
          %v3952 = vadd.s32 %v3937, 120
          %vm3953 = vcmp.lt.s32.totalorder %v3937, 8
          %vm3954 = vcmp.lt.s32.totalorder %v3938, 8
          %vm3955 = vcmp.lt.s32.totalorder %v3939, 8
          %vm3956 = vcmp.lt.s32.totalorder %v3940, 8
          %vm3957 = vcmp.lt.s32.totalorder %v3941, 8
          %vm3958 = vcmp.lt.s32.totalorder %v3942, 8
          %vm3959 = vcmp.lt.s32.totalorder %v3943, 8
          %vm3960 = vcmp.lt.s32.totalorder %v3944, 8
          %vm3961 = vcmp.lt.s32.totalorder %v3945, 8
          %vm3962 = vcmp.lt.s32.totalorder %v3946, 8
          %vm3963 = vcmp.lt.s32.totalorder %v3947, 8
          %vm3964 = vcmp.lt.s32.totalorder %v3948, 8
          %vm3965 = vcmp.lt.s32.totalorder %v3949, 8
          %vm3966 = vcmp.lt.s32.totalorder %v3950, 8
          %vm3967 = vcmp.lt.s32.totalorder %v3951, 8
          %vm3968 = vcmp.lt.s32.totalorder %v3952, 8
          %v3969 = vsel %vm3953, %v3920, 0.0
          %v3970 = vsel %vm3954, %v3921, 0.0
          %v3971 = vsel %vm3955, %v3922, 0.0
          %v3972 = vsel %vm3956, %v3923, 0.0
          %v3973 = vsel %vm3957, %v3924, 0.0
          %v3974 = vsel %vm3958, %v3925, 0.0
          %v3975 = vsel %vm3959, %v3926, 0.0
          %v3976 = vsel %vm3960, %v3927, 0.0
          %v3977 = vsel %vm3961, %v3928, 0.0
          %v3978 = vsel %vm3962, %v3929, 0.0
          %v3979 = vsel %vm3963, %v3930, 0.0
          %v3980 = vsel %vm3964, %v3931, 0.0
          %v3981 = vsel %vm3965, %v3932, 0.0
          %v3982 = vsel %vm3966, %v3933, 0.0
          %v3983 = vsel %vm3967, %v3934, 0.0
          %v3984 = vsel %vm3968, %v3935, 0.0
          %3985 = vst.msk [vmem:[%s370] sm:$0xff] %vm2866, %v3969
          %3986 = vst.msk [vmem:[%s370 + $0x8] sm:$0xff] %vm2866, %v3970
          %3987 = vst.msk [vmem:[%s370 + $0x10] sm:$0xff] %vm2866, %v3971
          %3988 = vst.msk [vmem:[%s370 + $0x18] sm:$0xff] %vm2866, %v3972
          %3989 = vst.msk [vmem:[%s370 + $0x20] sm:$0xff] %vm2866, %v3973
          %3990 = vst.msk [vmem:[%s370 + $0x28] sm:$0xff] %vm2866, %v3974
          %3991 = vst.msk [vmem:[%s370 + $0x30] sm:$0xff] %vm2866, %v3975
          %3992 = vst.msk [vmem:[%s370 + $0x38] sm:$0xff] %vm2866, %v3976
          %3993 = vst.msk [vmem:[%s370 + $0x40] sm:$0xff] %vm2866, %v3977
          %3994 = vst.msk [vmem:[%s370 + $0x48] sm:$0xff] %vm2866, %v3978
          %3995 = vst.msk [vmem:[%s370 + $0x50] sm:$0xff] %vm2866, %v3979
          %3996 = vst.msk [vmem:[%s370 + $0x58] sm:$0xff] %vm2866, %v3980
          %3997 = vst.msk [vmem:[%s370 + $0x60] sm:$0xff] %vm2866, %v3981
          %3998 = vst.msk [vmem:[%s370 + $0x68] sm:$0xff] %vm2866, %v3982
          %3999 = vst.msk [vmem:[%s370 + $0x70] sm:$0xff] %vm2866, %v3983
          %4000 = vst.msk [vmem:[%s370 + $0x78] sm:$0xff] %vm2866, %v3984
        $region60: #{clsnet_forward.1} parent=51 // pred_fallthru
          _
        %p4001 = scmp.lt.s32.totalorder %s28, 1
        %s4002 = scalar_select %p4001, %s28, 1
        %s4003 = smul.addr %s4002, 16
        %s4004 = smul.addr %s4003, 8
        %s4005 = scalar_lea.vmem %s8, %s4004
        %s4006 = sand.u32 %s250, 1
        %s4007 = scalar_lea.sflag [#allocation4], %s4006
        %s4008 = sand.u32 %s250, 1
        %s4009 = smul.addr %s4008, 128
        %s4010 = scalar_lea.vmem [#allocation3], %s4009
        // Predicated region
        $region61: #{clsnet_forward.1} parent=51 // pred_check
          %p4011 = pneg %p234
        $region62: #{clsnet_forward.1} parent=51 // pred_check_branch
          %4013 = sbr.rel (%p4011) target = $region64
        $region63: #{clsnet_forward.1} parent=51 // pred_region
          _
        $region64: #{clsnet_forward.1} parent=51 // pred_fallthru
          _
        // Predicated region
        $region65: #{clsnet_forward.1} parent=51 // pred_check
          %p4014 = pneg %p260
        $region66: #{clsnet_forward.1} parent=51 // pred_check_branch
          %4016 = sbr.rel (%p4014) target = $region68
        $region67: #{clsnet_forward.1} parent=51 // pred_region
          %s4018 = ssub.s32 2048, 2048
          %4019 = vsyncadd %s4007, %s4018
          %s4020 = smul.addr %s28, 16
          %s4021 = smul.addr %s4020, 128
          %s4022 = scalar_lea.hbm %s9, %s4021
          %s4023 = sshll.u32 %s4010, 4
          %s4024 = int_to_ptr.vmem [resolvable:$true] %s4023
          %4029 = dma.vmem_to_hbm [thread:$0]  %s4024, 2048, %s4022, %s4007, 128, 128, 8
        $region68: #{clsnet_forward.1} parent=51 // pred_fallthru
          _
      $region52: #{clsnet_forward.1} parent=5 // pred_fallthru
        _
      %p4030 = scmp.le.s32.totalorder 2, %s19
      // Predicated region
      $region69: #{clsnet_forward.1} parent=5 // pred_check
        %p4031 = pneg %p4030
      $region70: #{clsnet_forward.1} parent=5 // pred_check_branch
        %4033 = sbr.rel (%p4031) target = $region72
      $region71: #{clsnet_forward.1} parent=5 // pred_region
        %s4034 = ssub.s32 %s19, 2
        // Predicated region
        $region73: #{clsnet_forward.1} parent=71 // pred_check
          %p4035 = pneg %p240
        $region74: #{clsnet_forward.1} parent=71 // pred_check_branch
          %4037 = sbr.rel (%p4035) target = $region76
        $region75: #{clsnet_forward.1} parent=71 // pred_region
          %p4038 = scmp.lt.s32.totalorder %s30, 1
          %s4039 = scalar_select %p4038, %s30, 1
          %s4040 = smul.addr %s4039, 16
          %s4041 = smul.addr %s4040, 8
          %s4042 = scalar_lea.vmem %s8, %s4041
        $region76: #{clsnet_forward.1} parent=71 // pred_fallthru
          _
        // Predicated region
        $region77: #{clsnet_forward.1} parent=71 // pred_check
          %p4043 = pneg %p266
        $region78: #{clsnet_forward.1} parent=71 // pred_check_branch
          %4045 = sbr.rel (%p4043) target = $region80
        $region79: #{clsnet_forward.1} parent=71 // pred_region
          %s4046 = sand.u32 %s251, 1
          %s4047 = scalar_lea.sflag [#allocation4], %s4046
          %s4048 = sand.u32 %s251, 1
          %s4049 = smul.addr %s4048, 128
          %s4050 = scalar_lea.vmem [#allocation3], %s4049
          %4051 = dma.done %s4047, 2048
        $region80: #{clsnet_forward.1} parent=71 // pred_fallthru
          _
      $region72: #{clsnet_forward.1} parent=5 // pred_fallthru
        _
    $region6: #{clsnet_forward.1} parent=1 // loop_footer
      %s23 = sadd.s32 1, %s19
    $region7: #{clsnet_forward.1} parent=1 // loop_footer_branch
      %18 = sbr.rel target = $region3
    $region8: #{clsnet_forward.1} parent=1 // loop_exit
      _
    %4052 = vsyncpa [#allocation4], 1
    %s4053 = scalar_lea.sflag [#allocation4], 1
    %4054 = vsyncpa %s4053, 1

</llo_original>
